<compile_context>
chip_gen: v6e
topology: v6e:2x2x1
jax: 0.10.0
libtpu: 0.0.40
codegen_flags: <defaults>
</compile_context>

<pallas_src>
import functools

import jax
import jax.numpy as jnp
from jax.experimental import pallas as pl
from jax.experimental.pallas import tpu as pltpu

LANE = 128


def _round_up(n, m):
    return ((n + m - 1) // m) * m


def _pack_gate_matrix(w, hp):
    """PyTorch (4H, in_dim) -> transposed, gate-block-padded (in_dim, 4*hp)."""
    four_h, in_dim = w.shape
    h = four_h // 4
    wt = w.T.reshape(in_dim, 4, h)
    wt = jnp.pad(wt, ((0, 0), (0, 0), (0, hp - h)))
    return wt.reshape(in_dim, 4 * hp)


def _pack_gate_bias(b, hp):
    h = b.shape[0] // 4
    bb = jnp.pad(b.reshape(4, h), ((0, 0), (0, hp - h)))
    return bb.reshape(1, 4 * hp)


def _pad_rows(w, rows):
    return jnp.pad(w, ((0, rows - w.shape[0]), (0, 0)))


def _lstm_kernel(x_ref,     # (TC, BB, DP)   streamed input chunk (time-major), cdt
                 wih0_ref,  # (DP, 4*HP)     layer-0 input weights (resident), cdt
                 whh0_ref,  # (HP, 4*HP)     layer-0 recurrent weights (resident), cdt
                 w1_ref,    # (2*HP, 4*HP)   stacked [wih1; whh1] (resident), cdt
                 b0_ref,    # (1, 4*HP)      layer-0 combined bias, f32
                 b1_ref,    # (1, 4*HP)      layer-1 combined bias, f32
                 fcw_ref,   # (HP, 128)      fc weight (column 0 real), cdt
                 fcb_ref,   # (1, 128)       fc bias   (column 0 real), f32
                 out_ref,   # (BB, 128)      lane-dense output block, f32
                 h0_s, c0_s, h1_s, c1_s,     # (BB, HP) f32 persistent scratch
                 *, hp, tc, t_total, cdt):
    t_idx = pl.program_id(1)

    # Zero initial (h, c) at the start of every batch block's time sweep.
    @pl.when(t_idx == 0)
    def _init():
        h0_s[...] = jnp.zeros_like(h0_s)
        c0_s[...] = jnp.zeros_like(c0_s)
        h1_s[...] = jnp.zeros_like(h1_s)
        c1_s[...] = jnp.zeros_like(c1_s)

    # Hoisted loop invariants.
    wih0 = wih0_ref[...]
    whh0 = whh0_ref[...]
    w1 = w1_ref[...]
    b0 = b0_ref[...]          # (1, 4*HP) rows broadcast for free across sublanes
    b1 = b1_ref[...]

    def sigmoid(v):
        # 1 EUP op (tanh) + cheap VPU, instead of exp + reciprocal (2 EUP ops).
        return 0.5 * jnp.tanh(0.5 * v) + 0.5

    def gates(pre):  # pre: (BB, 4*HP) f32; slices are 128-lane aligned (HP % 128 == 0)
        i = sigmoid(pre[:, 0 * hp:1 * hp])
        f = sigmoid(pre[:, 1 * hp:2 * hp])
        g = jnp.tanh(pre[:, 2 * hp:3 * hp])
        o = sigmoid(pre[:, 3 * hp:4 * hp])
        return i, f, g, o

    # State in registers across the (fully unrolled) chunk; VMEM only at the ends.
    h0 = h0_s[...]
    c0 = c0_s[...]
    h1 = h1_s[...]
    c1 = c1_s[...]

    final_chunk = (t_total - 1) // tc
    final_step = (t_total - 1) % tc

    # Unrolled chunk: layer-1(t) and layer-0(t+1) are independent, letting the
    # scheduler wavefront-overlap adjacent steps' MXU / EUP / VPU work.
    for it in range(tc):
        # Layer 0: x@wih0 has no recurrent dependence (overlaps with prior step).
        x_t = x_ref[it]                                            # (BB, DP) cdt
        pre0 = (jnp.dot(x_t, wih0, preferred_element_type=jnp.float32)
                + jnp.dot(h0.astype(cdt), whh0,
                          preferred_element_type=jnp.float32)
                + b0)
        i0, f0, gg0, o0 = gates(pre0)
        c0 = f0 * c0 + i0 * gg0
        h0 = o0 * jnp.tanh(c0)

        # Layer 1: single fused matmul, K = 2*HP fills the 256-deep MXU.
        hcat = jnp.concatenate([h0, h1], axis=1).astype(cdt)       # (BB, 2*HP)
        pre1 = jnp.dot(hcat, w1, preferred_element_type=jnp.float32) + b1
        i1, f1, gg1, o1 = gates(pre1)
        c1 = f1 * c1 + i1 * gg1
        h1 = o1 * jnp.tanh(c1)

        if it == final_step:
            # fc fused at the true last time step (any trailing time padding is
            # processed afterwards but never read). Lane-dense (BB, 128) store.
            @pl.when(t_idx == final_chunk)
            def _write_out(h_last=h1):
                out_ref[...] = (
                    jnp.dot(h_last.astype(cdt), fcw_ref[...],
                            preferred_element_type=jnp.float32)
                    + fcb_ref[...]).astype(out_ref.dtype)

    h0_s[...] = h0
    c0_s[...] = c0
    h1_s[...] = h1
    c1_s[...] = c1


def news_lstm_forward(x, params, hidden_size, *, compute_dtype=None,
                      time_chunk=8):
    """NewsLSTM forward. x: (B, T, D) or (B, D). Returns (out (B, 1), None)."""
    if x.ndim == 2:
        x = x[:, None, :]                       # mirrors x.unsqueeze(1)
    x = x.astype(jnp.float32)
    B, T, D = x.shape
    H = hidden_size
    HP = _round_up(H, LANE)                     # lane-aligned gate blocks
    DP = _round_up(D, 8)                        # sublane-aligned input width

    if compute_dtype is None:
        # bf16 MXU operands (f32 accumulation / f32 state) on TPU; f32 elsewhere
        # (non-TPU backends reject bf16 x bf16 -> f32 dots).
        compute_dtype = (jnp.bfloat16 if jax.default_backend() == "tpu"
                         else jnp.float32)
    cdt = compute_dtype

    # ---- pack / pad parameters (transposed, gate-block padded, MXU layout) ----
    wih0 = _pad_rows(_pack_gate_matrix(params["w_ih0"], HP), DP)       # (DP, 4HP)
    whh0 = _pad_rows(_pack_gate_matrix(params["w_hh0"], HP), HP)       # (HP, 4HP)
    wih1 = _pad_rows(_pack_gate_matrix(params["w_ih1"], HP), HP)       # (HP, 4HP)
    whh1 = _pad_rows(_pack_gate_matrix(params["w_hh1"], HP), HP)       # (HP, 4HP)
    w1 = jnp.concatenate([wih1, whh1], axis=0)                         # (2HP, 4HP)
    b0 = _pack_gate_bias(params["b_ih0"] + params["b_hh0"], HP)        # (1, 4HP)
    b1 = _pack_gate_bias(params["b_ih1"] + params["b_hh1"], HP)        # (1, 4HP)
    fcw = jnp.zeros((HP, LANE), jnp.float32).at[:H, 0].set(params["fc_w"][0])
    fcb = jnp.zeros((1, LANE), jnp.float32).at[0, 0].set(params["fc_b"][0])

    # ---- batch blocking (adaptive so v7x megacore gets >= 2 batch blocks) ----
    if B > 16:
        BB = min(_round_up(-(-B // 2), 16), 128)
    else:
        BB = _round_up(B, 16)                   # tiny batch: one block
    BP = _round_up(B, BB)
    n_b = BP // BB

    # ---- time chunk: prefer an exact divisor of T (no fully-padded steps) ----
    TC = min(T, time_chunk)
    for cand in range(TC, max(TC // 2, 1) - 1, -1):
        if T % cand == 0:
            TC = cand
            break
    n_t = pl.cdiv(T, TC)
    TP = n_t * TC                               # rare padded tail only if no divisor

    # ---- stream x directly (time-major); no hoisted G0 GEMM / HBM round trip ----
    xp = jnp.pad(x, ((0, BP - B), (0, TP - T), (0, DP - D)))
    xt = jnp.transpose(xp, (1, 0, 2)).astype(cdt)                      # (TP, BP, DP)

    # ---- VMEM budget derived from actual tile sizes (valid within v7x's 64 MiB) ----
    isz = jnp.dtype(cdt).itemsize
    g4 = 4 * HP
    needed = (2 * TC * BB * DP * isz                 # streamed x (double-buffered)
              + 2 * (DP + HP + 2 * HP) * g4 * isz    # resident gate weights
              + 2 * HP * LANE * isz                  # fc weight
              + 2 * (2 * g4 + LANE) * 4              # f32 biases
              + 2 * BB * LANE * 4                    # output block
              + 4 * BB * HP * 4)                     # persistent f32 state scratch
    vmem_limit = int(min(max(2 * needed + (4 << 20), 32 << 20), 64 << 20))

    kernel = functools.partial(_lstm_kernel, hp=HP, tc=TC, t_total=T, cdt=cdt)

    out_full = pl.pallas_call(
        kernel,
        out_shape=jax.ShapeDtypeStruct((BP, LANE), jnp.float32),
        grid_spec=pltpu.PrefetchScalarGridSpec(
            num_scalar_prefetch=0,
            grid=(n_b, n_t),
            in_specs=[
                pl.BlockSpec((TC, BB, DP), lambda b, t: (t, b, 0)),   # streamed x
                pl.BlockSpec((DP, 4 * HP), lambda b, t: (0, 0)),      # wih0 (resident)
                pl.BlockSpec((HP, 4 * HP), lambda b, t: (0, 0)),      # whh0 (resident)
                pl.BlockSpec((2 * HP, 4 * HP), lambda b, t: (0, 0)),  # [wih1; whh1]
                pl.BlockSpec((1, 4 * HP), lambda b, t: (0, 0)),       # b0
                pl.BlockSpec((1, 4 * HP), lambda b, t: (0, 0)),       # b1
                pl.BlockSpec((HP, LANE), lambda b, t: (0, 0)),        # fc weight
                pl.BlockSpec((1, LANE), lambda b, t: (0, 0)),         # fc bias
            ],
            out_specs=pl.BlockSpec((BB, LANE), lambda b, t: (b, 0)),
            scratch_shapes=[pltpu.VMEM((BB, HP), jnp.float32)] * 4,
        ),
        compiler_params=pltpu.CompilerParams(
            dimension_semantics=("parallel", "arbitrary"),  # batch across cores, time sequential
            vmem_limit_bytes=vmem_limit,
        ),
    )(xt, wih0.astype(cdt), whh0.astype(cdt), w1.astype(cdt), b0, b1,
      fcw.astype(cdt), fcb)

    return out_full[:B, :1], None


def init_params(key, input_size, hidden_size):
    """Deterministic init with PyTorch LSTM / Linear parameter shapes."""
    H = hidden_size
    k = 1.0 / jnp.sqrt(jnp.float32(H))
    keys = jax.random.split(key, 10)

    def u(kk, shape):
        return jax.random.uniform(kk, shape, jnp.float32, -k, k)

    return {
        "w_ih0": u(keys[0], (4 * H, input_size)),
        "w_hh0": u(keys[1], (4 * H, H)),
        "b_ih0": u(keys[2], (4 * H,)),
        "b_hh0": u(keys[3], (4 * H,)),
        "w_ih1": u(keys[4], (4 * H, H)),
        "w_hh1": u(keys[5], (4 * H, H)),
        "b_ih1": u(keys[6], (4 * H,)),
        "b_hh1": u(keys[7], (4 * H,)),
        "fc_w": u(keys[8], (1, H)),
        "fc_b": u(keys[9], (1,)),
    }


def _reference_forward(x, params, H):
    """Pure-JAX (f32) reference mirroring torch.nn.LSTM + Linear."""
    if x.ndim == 2:
        x = x[:, None, :]
    B, T, D = x.shape

    def cell(x_t, h, c, w_ih, w_hh, b_ih, b_hh):
        g = x_t @ w_ih.T + h @ w_hh.T + b_ih + b_hh
        i = jax.nn.sigmoid(g[:, :H])
        f = jax.nn.sigmoid(g[:, H:2 * H])
        gg = jnp.tanh(g[:, 2 * H:3 * H])
        o = jax.nn.sigmoid(g[:, 3 * H:])
        c = f * c + i * gg
        return o * jnp.tanh(c), c

    h0 = c0 = h1 = c1 = jnp.zeros((B, H), jnp.float32)
    for t in range(T):
        h0, c0 = cell(x[:, t, :], h0, c0, params["w_ih0"], params["w_hh0"],
                      params["b_ih0"], params["b_hh0"])
        h1, c1 = cell(h0, h1, c1, params["w_ih1"], params["w_hh1"],
                      params["b_ih1"], params["b_hh1"])
    return h1 @ params["fc_w"].T + params["fc_b"]


if __name__ == "__main__":
    B, T, D, H = 2, 8, 16, 32

    key = jax.random.PRNGKey(0)
    kx, kp = jax.random.split(key)
    x = jax.random.normal(kx, (B, T, D), jnp.float32)
    params = init_params(kp, input_size=D, hidden_size=H)

    ref = _reference_forward(x, params, H)

    # Explicit f32 matmul path (validation path; MXU f32 is multi-pass, so the
    # tolerance is modest rather than exact).
    out_f32, aux = news_lstm_forward(x, params, hidden_size=H,
                                     compute_dtype=jnp.float32)
    out_f32 = jax.block_until_ready(out_f32)
    assert out_f32.shape == (B, 1) and aux is None
    assert jnp.allclose(out_f32, ref, atol=1e-2, rtol=1e-2), (out_f32, ref)

    # Default path: bf16 MXU operands on TPU (f32 accumulation / f32 state),
    # automatic f32 fallback on non-TPU backends.
    out_def, _ = news_lstm_forward(x, params, hidden_size=H)
    out_def = jax.block_until_ready(out_def)
    assert out_def.shape == (B, 1)
    assert jnp.allclose(out_def, ref, atol=7e-2, rtol=7e-2), (out_def, ref)

    print("KERNEL_OK")
</pallas_src>

<mosaic_0001>
module attributes {stable_mosaic.version = 11 : i64} {
  func.func @_lstm_kernel(%arg0: i32, %arg1: i32, %arg2: memref<8x16x16xf32, #tpu.memory_space<vmem>>, %arg3: memref<16x512xf32, #tpu.memory_space<vmem>>, %arg4: memref<128x512xf32, #tpu.memory_space<vmem>>, %arg5: memref<256x512xf32, #tpu.memory_space<vmem>>, %arg6: memref<1x512xf32, #tpu.memory_space<vmem>>, %arg7: memref<1x512xf32, #tpu.memory_space<vmem>>, %arg8: memref<128x128xf32, #tpu.memory_space<vmem>>, %arg9: memref<1x128xf32, #tpu.memory_space<vmem>>, %arg10: memref<16x128xf32, #tpu.memory_space<vmem>>, %arg11: memref<16x128xf32, #tpu.memory_space<vmem>>, %arg12: memref<16x128xf32, #tpu.memory_space<vmem>>, %arg13: memref<16x128xf32, #tpu.memory_space<vmem>>, %arg14: memref<16x128xf32, #tpu.memory_space<vmem>>) attributes {dimension_semantics = [#tpu.dimension_semantics<parallel>, #tpu.dimension_semantics<arbitrary>], iteration_bounds = array<i64: 1, 1>, scalar_prefetch = 0 : i64, scratch_operands = 4 : i64, tpu.core_type = #tpu.core_type<tc>, window_params = [{transform_indices = @transform_0, window_bounds = array<i64: 8, 16, 16>}, {pipeline_mode = #tpu.pipeline_mode<synchronous>, transform_indices = @transform_1, window_bounds = array<i64: 16, 512>}, {pipeline_mode = #tpu.pipeline_mode<synchronous>, transform_indices = @transform_2, window_bounds = array<i64: 128, 512>}, {pipeline_mode = #tpu.pipeline_mode<synchronous>, transform_indices = @transform_3, window_bounds = array<i64: 256, 512>}, {pipeline_mode = #tpu.pipeline_mode<synchronous>, transform_indices = @transform_4, window_bounds = array<i64: 1, 512>}, {pipeline_mode = #tpu.pipeline_mode<synchronous>, transform_indices = @transform_5, window_bounds = array<i64: 1, 512>}, {pipeline_mode = #tpu.pipeline_mode<synchronous>, transform_indices = @transform_6, window_bounds = array<i64: 128, 128>}, {pipeline_mode = #tpu.pipeline_mode<synchronous>, transform_indices = @transform_7, window_bounds = array<i64: 1, 128>}, {transform_indices = @transform_8, window_bounds = array<i64: 16, 128>}]} {
    %c0_i32 = arith.constant 0 : i32
    %0 = arith.cmpi eq, %arg1, %c0_i32 : i32
    %1 = arith.extui %0 : i1 to i32
    %c0_i32_0 = arith.constant 0 : i32
    %2 = arith.cmpi ne, %1, %c0_i32_0 : i32
    scf.if %2 {
      %cst_212 = arith.constant 0.000000e+00 : f32
      %603 = vector.broadcast %cst_212 : f32 to vector<16x128xf32>
      %c0_213 = arith.constant 0 : index
      %c0_214 = arith.constant 0 : index
      %604 = vector.load %arg11[%c0_213, %c0_214] : memref<16x128xf32, #tpu.memory_space<vmem>>, vector<16x128xf32>
      tpu.vector_store %arg11[%c0_213, %c0_214], %603 {strides = array<i32>} : memref<16x128xf32, #tpu.memory_space<vmem>>, vector<16x128xf32>,
      %cst_215 = arith.constant 0.000000e+00 : f32
      %605 = vector.broadcast %cst_215 : f32 to vector<16x128xf32>
      %c0_216 = arith.constant 0 : index
      %c0_217 = arith.constant 0 : index
      %606 = vector.load %arg12[%c0_216, %c0_217] : memref<16x128xf32, #tpu.memory_space<vmem>>, vector<16x128xf32>
      tpu.vector_store %arg12[%c0_216, %c0_217], %605 {strides = array<i32>} : memref<16x128xf32, #tpu.memory_space<vmem>>, vector<16x128xf32>,
      %cst_218 = arith.constant 0.000000e+00 : f32
      %607 = vector.broadcast %cst_218 : f32 to vector<16x128xf32>
      %c0_219 = arith.constant 0 : index
      %c0_220 = arith.constant 0 : index
      %608 = vector.load %arg13[%c0_219, %c0_220] : memref<16x128xf32, #tpu.memory_space<vmem>>, vector<16x128xf32>
      tpu.vector_store %arg13[%c0_219, %c0_220], %607 {strides = array<i32>} : memref<16x128xf32, #tpu.memory_space<vmem>>, vector<16x128xf32>,
      %cst_221 = arith.constant 0.000000e+00 : f32
      %609 = vector.broadcast %cst_221 : f32 to vector<16x128xf32>
      %c0_222 = arith.constant 0 : index
      %c0_223 = arith.constant 0 : index
      %610 = vector.load %arg14[%c0_222, %c0_223] : memref<16x128xf32, #tpu.memory_space<vmem>>, vector<16x128xf32>
      tpu.vector_store %arg14[%c0_222, %c0_223], %609 {strides = array<i32>} : memref<16x128xf32, #tpu.memory_space<vmem>>, vector<16x128xf32>,
    } else {
    }
    %c0 = arith.constant 0 : index
    %c0_1 = arith.constant 0 : index
    %3 = vector.load %arg3[%c0, %c0_1] : memref<16x512xf32, #tpu.memory_space<vmem>>, vector<16x512xf32>
    %c0_2 = arith.constant 0 : index
    %c0_3 = arith.constant 0 : index
    %4 = vector.load %arg4[%c0_2, %c0_3] : memref<128x512xf32, #tpu.memory_space<vmem>>, vector<128x512xf32>
    %c0_4 = arith.constant 0 : index
    %c0_5 = arith.constant 0 : index
    %5 = vector.load %arg5[%c0_4, %c0_5] : memref<256x512xf32, #tpu.memory_space<vmem>>, vector<256x512xf32>
    %c0_6 = arith.constant 0 : index
    %c0_7 = arith.constant 0 : index
    %6 = vector.load %arg6[%c0_6, %c0_7] : memref<1x512xf32, #tpu.memory_space<vmem>>, vector<1x512xf32>
    %c0_8 = arith.constant 0 : index
    %c0_9 = arith.constant 0 : index
    %7 = vector.load %arg7[%c0_8, %c0_9] : memref<1x512xf32, #tpu.memory_space<vmem>>, vector<1x512xf32>
    %c0_10 = arith.constant 0 : index
    %c0_11 = arith.constant 0 : index
    %8 = vector.load %arg11[%c0_10, %c0_11] : memref<16x128xf32, #tpu.memory_space<vmem>>, vector<16x128xf32>
    %c0_12 = arith.constant 0 : index
    %c0_13 = arith.constant 0 : index
    %9 = vector.load %arg12[%c0_12, %c0_13] : memref<16x128xf32, #tpu.memory_space<vmem>>, vector<16x128xf32>
    %c0_14 = arith.constant 0 : index
    %c0_15 = arith.constant 0 : index
    %10 = vector.load %arg13[%c0_14, %c0_15] : memref<16x128xf32, #tpu.memory_space<vmem>>, vector<16x128xf32>
    %c0_16 = arith.constant 0 : index
    %c0_17 = arith.constant 0 : index
    %11 = vector.load %arg14[%c0_16, %c0_17] : memref<16x128xf32, #tpu.memory_space<vmem>>, vector<16x128xf32>
    %c0_18 = arith.constant 0 : index
    %c0_19 = arith.constant 0 : index
    %c0_20 = arith.constant 0 : index
    %12 = vector.load %arg2[%c0_18, %c0_19, %c0_20] : memref<8x16x16xf32, #tpu.memory_space<vmem>>, vector<1x16x16xf32>
    %13 = vector.shape_cast %12 : vector<1x16x16xf32> to vector<16x16xf32>
    %cst = arith.constant dense<0.000000e+00> : vector<16x512xf32>
    %14 = tpu.matmul %13, %3, %cst {dimension_numbers = #tpu.dot_dimension_numbers<[1], [0], [0], [1], [0, 0, 1, 1], [], []>} : vector<16x16xf32>, vector<16x512xf32>, vector<16x512xf32> -> vector<16x512xf32>
    %cst_21 = arith.constant dense<0.000000e+00> : vector<16x512xf32>
    %15 = tpu.matmul %8, %4, %cst_21 {dimension_numbers = #tpu.dot_dimension_numbers<[1], [0], [0], [1], [0, 0, 1, 1], [], []>} : vector<16x128xf32>, vector<128x512xf32>, vector<16x512xf32> -> vector<16x512xf32>
    %16 = arith.addf %14, %15 : vector<16x512xf32>
    %17 = vector.broadcast %6 : vector<1x512xf32> to vector<16x512xf32>
    %18 = arith.addf %16, %17 : vector<16x512xf32>
    %19 = vector.extract_strided_slice %18 {offsets = [0, 0], sizes = [16, 128], strides = [1, 1]} : vector<16x512xf32> to vector<16x128xf32>
    %cst_22 = arith.constant 5.000000e-01 : f32
    %20 = vector.broadcast %cst_22 : f32 to vector<16x128xf32>
    %21 = arith.mulf %20, %19 : vector<16x128xf32>
    %22 = math.tanh %21 : vector<16x128xf32>
    %cst_23 = arith.constant 5.000000e-01 : f32
    %23 = vector.broadcast %cst_23 : f32 to vector<16x128xf32>
    %24 = arith.mulf %23, %22 : vector<16x128xf32>
    %cst_24 = arith.constant 5.000000e-01 : f32
    %25 = vector.broadcast %cst_24 : f32 to vector<16x128xf32>
    %26 = arith.addf %24, %25 : vector<16x128xf32>
    %27 = vector.extract_strided_slice %18 {offsets = [0, 128], sizes = [16, 128], strides = [1, 1]} : vector<16x512xf32> to vector<16x128xf32>
    %cst_25 = arith.constant 5.000000e-01 : f32
    %28 = vector.broadcast %cst_25 : f32 to vector<16x128xf32>
    %29 = arith.mulf %28, %27 : vector<16x128xf32>
    %30 = math.tanh %29 : vector<16x128xf32>
    %cst_26 = arith.constant 5.000000e-01 : f32
    %31 = vector.broadcast %cst_26 : f32 to vector<16x128xf32>
    %32 = arith.mulf %31, %30 : vector<16x128xf32>
    %cst_27 = arith.constant 5.000000e-01 : f32
    %33 = vector.broadcast %cst_27 : f32 to vector<16x128xf32>
    %34 = arith.addf %32, %33 : vector<16x128xf32>
    %35 = vector.extract_strided_slice %18 {offsets = [0, 256], sizes = [16, 128], strides = [1, 1]} : vector<16x512xf32> to vector<16x128xf32>
    %36 = math.tanh %35 : vector<16x128xf32>
    %37 = vector.extract_strided_slice %18 {offsets = [0, 384], sizes = [16, 128], strides = [1, 1]} : vector<16x512xf32> to vector<16x128xf32>
    %cst_28 = arith.constant 5.000000e-01 : f32
    %38 = vector.broadcast %cst_28 : f32 to vector<16x128xf32>
    %39 = arith.mulf %38, %37 : vector<16x128xf32>
    %40 = math.tanh %39 : vector<16x128xf32>
    %cst_29 = arith.constant 5.000000e-01 : f32
    %41 = vector.broadcast %cst_29 : f32 to vector<16x128xf32>
    %42 = arith.mulf %41, %40 : vector<16x128xf32>
    %cst_30 = arith.constant 5.000000e-01 : f32
    %43 = vector.broadcast %cst_30 : f32 to vector<16x128xf32>
    %44 = arith.addf %42, %43 : vector<16x128xf32>
    %45 = arith.mulf %34, %9 : vector<16x128xf32>
    %46 = arith.mulf %26, %36 : vector<16x128xf32>
    %47 = arith.addf %45, %46 : vector<16x128xf32>
    %48 = math.tanh %47 : vector<16x128xf32>
    %49 = arith.mulf %44, %48 : vector<16x128xf32>
    %50 = tpu.concatenate %49, %10 in 1 : vector<16x128xf32>, vector<16x128xf32> -> vector<16x256xf32>
    %cst_31 = arith.constant dense<0.000000e+00> : vector<16x512xf32>
    %51 = tpu.matmul %50, %5, %cst_31 {dimension_numbers = #tpu.dot_dimension_numbers<[1], [0], [0], [1], [0, 0, 1, 1], [], []>} : vector<16x256xf32>, vector<256x512xf32>, vector<16x512xf32> -> vector<16x512xf32>
    %52 = vector.broadcast %7 : vector<1x512xf32> to vector<16x512xf32>
    %53 = arith.addf %51, %52 : vector<16x512xf32>
    %54 = vector.extract_strided_slice %53 {offsets = [0, 0], sizes = [16, 128], strides = [1, 1]} : vector<16x512xf32> to vector<16x128xf32>
    %cst_32 = arith.constant 5.000000e-01 : f32
    %55 = vector.broadcast %cst_32 : f32 to vector<16x128xf32>
    %56 = arith.mulf %55, %54 : vector<16x128xf32>
    %57 = math.tanh %56 : vector<16x128xf32>
    %cst_33 = arith.constant 5.000000e-01 : f32
    %58 = vector.broadcast %cst_33 : f32 to vector<16x128xf32>
    %59 = arith.mulf %58, %57 : vector<16x128xf32>
    %cst_34 = arith.constant 5.000000e-01 : f32
    %60 = vector.broadcast %cst_34 : f32 to vector<16x128xf32>
    %61 = arith.addf %59, %60 : vector<16x128xf32>
    %62 = vector.extract_strided_slice %53 {offsets = [0, 128], sizes = [16, 128], strides = [1, 1]} : vector<16x512xf32> to vector<16x128xf32>
    %cst_35 = arith.constant 5.000000e-01 : f32
    %63 = vector.broadcast %cst_35 : f32 to vector<16x128xf32>
    %64 = arith.mulf %63, %62 : vector<16x128xf32>
    %65 = math.tanh %64 : vector<16x128xf32>
    %cst_36 = arith.constant 5.000000e-01 : f32
    %66 = vector.broadcast %cst_36 : f32 to vector<16x128xf32>
    %67 = arith.mulf %66, %65 : vector<16x128xf32>
    %cst_37 = arith.constant 5.000000e-01 : f32
    %68 = vector.broadcast %cst_37 : f32 to vector<16x128xf32>
    %69 = arith.addf %67, %68 : vector<16x128xf32>
    %70 = vector.extract_strided_slice %53 {offsets = [0, 256], sizes = [16, 128], strides = [1, 1]} : vector<16x512xf32> to vector<16x128xf32>
    %71 = math.tanh %70 : vector<16x128xf32>
    %72 = vector.extract_strided_slice %53 {offsets = [0, 384], sizes = [16, 128], strides = [1, 1]} : vector<16x512xf32> to vector<16x128xf32>
    %cst_38 = arith.constant 5.000000e-01 : f32
    %73 = vector.broadcast %cst_38 : f32 to vector<16x128xf32>
    %74 = arith.mulf %73, %72 : vector<16x128xf32>
    %75 = math.tanh %74 : vector<16x128xf32>
    %cst_39 = arith.constant 5.000000e-01 : f32
    %76 = vector.broadcast %cst_39 : f32 to vector<16x128xf32>
    %77 = arith.mulf %76, %75 : vector<16x128xf32>
    %cst_40 = arith.constant 5.000000e-01 : f32
    %78 = vector.broadcast %cst_40 : f32 to vector<16x128xf32>
    %79 = arith.addf %77, %78 : vector<16x128xf32>
    %80 = arith.mulf %69, %11 : vector<16x128xf32>
    %81 = arith.mulf %61, %71 : vector<16x128xf32>
    %82 = arith.addf %80, %81 : vector<16x128xf32>
    %83 = math.tanh %82 : vector<16x128xf32>
    %84 = arith.mulf %79, %83 : vector<16x128xf32>
    %c1 = arith.constant 1 : index
    %c0_41 = arith.constant 0 : index
    %c0_42 = arith.constant 0 : index
    %85 = vector.load %arg2[%c1, %c0_41, %c0_42] : memref<8x16x16xf32, #tpu.memory_space<vmem>>, vector<1x16x16xf32>
    %86 = vector.shape_cast %85 : vector<1x16x16xf32> to vector<16x16xf32>
    %cst_43 = arith.constant dense<0.000000e+00> : vector<16x512xf32>
    %87 = tpu.matmul %86, %3, %cst_43 {dimension_numbers = #tpu.dot_dimension_numbers<[1], [0], [0], [1], [0, 0, 1, 1], [], []>} : vector<16x16xf32>, vector<16x512xf32>, vector<16x512xf32> -> vector<16x512xf32>
    %cst_44 = arith.constant dense<0.000000e+00> : vector<16x512xf32>
    %88 = tpu.matmul %49, %4, %cst_44 {dimension_numbers = #tpu.dot_dimension_numbers<[1], [0], [0], [1], [0, 0, 1, 1], [], []>} : vector<16x128xf32>, vector<128x512xf32>, vector<16x512xf32> -> vector<16x512xf32>
    %89 = arith.addf %87, %88 : vector<16x512xf32>
    %90 = vector.broadcast %6 : vector<1x512xf32> to vector<16x512xf32>
    %91 = arith.addf %89, %90 : vector<16x512xf32>
    %92 = vector.extract_strided_slice %91 {offsets = [0, 0], sizes = [16, 128], strides = [1, 1]} : vector<16x512xf32> to vector<16x128xf32>
    %cst_45 = arith.constant 5.000000e-01 : f32
    %93 = vector.broadcast %cst_45 : f32 to vector<16x128xf32>
    %94 = arith.mulf %93, %92 : vector<16x128xf32>
    %95 = math.tanh %94 : vector<16x128xf32>
    %cst_46 = arith.constant 5.000000e-01 : f32
    %96 = vector.broadcast %cst_46 : f32 to vector<16x128xf32>
    %97 = arith.mulf %96, %95 : vector<16x128xf32>
    %cst_47 = arith.constant 5.000000e-01 : f32
    %98 = vector.broadcast %cst_47 : f32 to vector<16x128xf32>
    %99 = arith.addf %97, %98 : vector<16x128xf32>
    %100 = vector.extract_strided_slice %91 {offsets = [0, 128], sizes = [16, 128], strides = [1, 1]} : vector<16x512xf32> to vector<16x128xf32>
    %cst_48 = arith.constant 5.000000e-01 : f32
    %101 = vector.broadcast %cst_48 : f32 to vector<16x128xf32>
    %102 = arith.mulf %101, %100 : vector<16x128xf32>
    %103 = math.tanh %102 : vector<16x128xf32>
    %cst_49 = arith.constant 5.000000e-01 : f32
    %104 = vector.broadcast %cst_49 : f32 to vector<16x128xf32>
    %105 = arith.mulf %104, %103 : vector<16x128xf32>
    %cst_50 = arith.constant 5.000000e-01 : f32
    %106 = vector.broadcast %cst_50 : f32 to vector<16x128xf32>
    %107 = arith.addf %105, %106 : vector<16x128xf32>
    %108 = vector.extract_strided_slice %91 {offsets = [0, 256], sizes = [16, 128], strides = [1, 1]} : vector<16x512xf32> to vector<16x128xf32>
    %109 = math.tanh %108 : vector<16x128xf32>
    %110 = vector.extract_strided_slice %91 {offsets = [0, 384], sizes = [16, 128], strides = [1, 1]} : vector<16x512xf32> to vector<16x128xf32>
    %cst_51 = arith.constant 5.000000e-01 : f32
    %111 = vector.broadcast %cst_51 : f32 to vector<16x128xf32>
    %112 = arith.mulf %111, %110 : vector<16x128xf32>
    %113 = math.tanh %112 : vector<16x128xf32>
    %cst_52 = arith.constant 5.000000e-01 : f32
    %114 = vector.broadcast %cst_52 : f32 to vector<16x128xf32>
    %115 = arith.mulf %114, %113 : vector<16x128xf32>
    %cst_53 = arith.constant 5.000000e-01 : f32
    %116 = vector.broadcast %cst_53 : f32 to vector<16x128xf32>
    %117 = arith.addf %115, %116 : vector<16x128xf32>
    %118 = arith.mulf %107, %47 : vector<16x128xf32>
    %119 = arith.mulf %99, %109 : vector<16x128xf32>
    %120 = arith.addf %118, %119 : vector<16x128xf32>
    %121 = math.tanh %120 : vector<16x128xf32>
    %122 = arith.mulf %117, %121 : vector<16x128xf32>
    %123 = tpu.concatenate %122, %84 in 1 : vector<16x128xf32>, vector<16x128xf32> -> vector<16x256xf32>
    %cst_54 = arith.constant dense<0.000000e+00> : vector<16x512xf32>
    %124 = tpu.matmul %123, %5, %cst_54 {dimension_numbers = #tpu.dot_dimension_numbers<[1], [0], [0], [1], [0, 0, 1, 1], [], []>} : vector<16x256xf32>, vector<256x512xf32>, vector<16x512xf32> -> vector<16x512xf32>
    %125 = vector.broadcast %7 : vector<1x512xf32> to vector<16x512xf32>
    %126 = arith.addf %124, %125 : vector<16x512xf32>
    %127 = vector.extract_strided_slice %126 {offsets = [0, 0], sizes = [16, 128], strides = [1, 1]} : vector<16x512xf32> to vector<16x128xf32>
    %cst_55 = arith.constant 5.000000e-01 : f32
    %128 = vector.broadcast %cst_55 : f32 to vector<16x128xf32>
    %129 = arith.mulf %128, %127 : vector<16x128xf32>
    %130 = math.tanh %129 : vector<16x128xf32>
    %cst_56 = arith.constant 5.000000e-01 : f32
    %131 = vector.broadcast %cst_56 : f32 to vector<16x128xf32>
    %132 = arith.mulf %131, %130 : vector<16x128xf32>
    %cst_57 = arith.constant 5.000000e-01 : f32
    %133 = vector.broadcast %cst_57 : f32 to vector<16x128xf32>
    %134 = arith.addf %132, %133 : vector<16x128xf32>
    %135 = vector.extract_strided_slice %126 {offsets = [0, 128], sizes = [16, 128], strides = [1, 1]} : vector<16x512xf32> to vector<16x128xf32>
    %cst_58 = arith.constant 5.000000e-01 : f32
    %136 = vector.broadcast %cst_58 : f32 to vector<16x128xf32>
    %137 = arith.mulf %136, %135 : vector<16x128xf32>
    %138 = math.tanh %137 : vector<16x128xf32>
    %cst_59 = arith.constant 5.000000e-01 : f32
    %139 = vector.broadcast %cst_59 : f32 to vector<16x128xf32>
    %140 = arith.mulf %139, %138 : vector<16x128xf32>
    %cst_60 = arith.constant 5.000000e-01 : f32
    %141 = vector.broadcast %cst_60 : f32 to vector<16x128xf32>
    %142 = arith.addf %140, %141 : vector<16x128xf32>
    %143 = vector.extract_strided_slice %126 {offsets = [0, 256], sizes = [16, 128], strides = [1, 1]} : vector<16x512xf32> to vector<16x128xf32>
    %144 = math.tanh %143 : vector<16x128xf32>
    %145 = vector.extract_strided_slice %126 {offsets = [0, 384], sizes = [16, 128], strides = [1, 1]} : vector<16x512xf32> to vector<16x128xf32>
    %cst_61 = arith.constant 5.000000e-01 : f32
    %146 = vector.broadcast %cst_61 : f32 to vector<16x128xf32>
    %147 = arith.mulf %146, %145 : vector<16x128xf32>
    %148 = math.tanh %147 : vector<16x128xf32>
    %cst_62 = arith.constant 5.000000e-01 : f32
    %149 = vector.broadcast %cst_62 : f32 to vector<16x128xf32>
    %150 = arith.mulf %149, %148 : vector<16x128xf32>
    %cst_63 = arith.constant 5.000000e-01 : f32
    %151 = vector.broadcast %cst_63 : f32 to vector<16x128xf32>
    %152 = arith.addf %150, %151 : vector<16x128xf32>
    %153 = arith.mulf %142, %82 : vector<16x128xf32>
    %154 = arith.mulf %134, %144 : vector<16x128xf32>
    %155 = arith.addf %153, %154 : vector<16x128xf32>
    %156 = math.tanh %155 : vector<16x128xf32>
    %157 = arith.mulf %152, %156 : vector<16x128xf32>
    %c2 = arith.constant 2 : index
    %c0_64 = arith.constant 0 : index
    %c0_65 = arith.constant 0 : index
    %158 = vector.load %arg2[%c2, %c0_64, %c0_65] : memref<8x16x16xf32, #tpu.memory_space<vmem>>, vector<1x16x16xf32>
    %159 = vector.shape_cast %158 : vector<1x16x16xf32> to vector<16x16xf32>
    %cst_66 = arith.constant dense<0.000000e+00> : vector<16x512xf32>
    %160 = tpu.matmul %159, %3, %cst_66 {dimension_numbers = #tpu.dot_dimension_numbers<[1], [0], [0], [1], [0, 0, 1, 1], [], []>} : vector<16x16xf32>, vector<16x512xf32>, vector<16x512xf32> -> vector<16x512xf32>
    %cst_67 = arith.constant dense<0.000000e+00> : vector<16x512xf32>
    %161 = tpu.matmul %122, %4, %cst_67 {dimension_numbers = #tpu.dot_dimension_numbers<[1], [0], [0], [1], [0, 0, 1, 1], [], []>} : vector<16x128xf32>, vector<128x512xf32>, vector<16x512xf32> -> vector<16x512xf32>
    %162 = arith.addf %160, %161 : vector<16x512xf32>
    %163 = vector.broadcast %6 : vector<1x512xf32> to vector<16x512xf32>
    %164 = arith.addf %162, %163 : vector<16x512xf32>
    %165 = vector.extract_strided_slice %164 {offsets = [0, 0], sizes = [16, 128], strides = [1, 1]} : vector<16x512xf32> to vector<16x128xf32>
    %cst_68 = arith.constant 5.000000e-01 : f32
    %166 = vector.broadcast %cst_68 : f32 to vector<16x128xf32>
    %167 = arith.mulf %166, %165 : vector<16x128xf32>
    %168 = math.tanh %167 : vector<16x128xf32>
    %cst_69 = arith.constant 5.000000e-01 : f32
    %169 = vector.broadcast %cst_69 : f32 to vector<16x128xf32>
    %170 = arith.mulf %169, %168 : vector<16x128xf32>
    %cst_70 = arith.constant 5.000000e-01 : f32
    %171 = vector.broadcast %cst_70 : f32 to vector<16x128xf32>
    %172 = arith.addf %170, %171 : vector<16x128xf32>
    %173 = vector.extract_strided_slice %164 {offsets = [0, 128], sizes = [16, 128], strides = [1, 1]} : vector<16x512xf32> to vector<16x128xf32>
    %cst_71 = arith.constant 5.000000e-01 : f32
    %174 = vector.broadcast %cst_71 : f32 to vector<16x128xf32>
    %175 = arith.mulf %174, %173 : vector<16x128xf32>
    %176 = math.tanh %175 : vector<16x128xf32>
    %cst_72 = arith.constant 5.000000e-01 : f32
    %177 = vector.broadcast %cst_72 : f32 to vector<16x128xf32>
    %178 = arith.mulf %177, %176 : vector<16x128xf32>
    %cst_73 = arith.constant 5.000000e-01 : f32
    %179 = vector.broadcast %cst_73 : f32 to vector<16x128xf32>
    %180 = arith.addf %178, %179 : vector<16x128xf32>
    %181 = vector.extract_strided_slice %164 {offsets = [0, 256], sizes = [16, 128], strides = [1, 1]} : vector<16x512xf32> to vector<16x128xf32>
    %182 = math.tanh %181 : vector<16x128xf32>
    %183 = vector.extract_strided_slice %164 {offsets = [0, 384], sizes = [16, 128], strides = [1, 1]} : vector<16x512xf32> to vector<16x128xf32>
    %cst_74 = arith.constant 5.000000e-01 : f32
    %184 = vector.broadcast %cst_74 : f32 to vector<16x128xf32>
    %185 = arith.mulf %184, %183 : vector<16x128xf32>
    %186 = math.tanh %185 : vector<16x128xf32>
    %cst_75 = arith.constant 5.000000e-01 : f32
    %187 = vector.broadcast %cst_75 : f32 to vector<16x128xf32>
    %188 = arith.mulf %187, %186 : vector<16x128xf32>
    %cst_76 = arith.constant 5.000000e-01 : f32
    %189 = vector.broadcast %cst_76 : f32 to vector<16x128xf32>
    %190 = arith.addf %188, %189 : vector<16x128xf32>
    %191 = arith.mulf %180, %120 : vector<16x128xf32>
    %192 = arith.mulf %172, %182 : vector<16x128xf32>
    %193 = arith.addf %191, %192 : vector<16x128xf32>
    %194 = math.tanh %193 : vector<16x128xf32>
    %195 = arith.mulf %190, %194 : vector<16x128xf32>
    %196 = tpu.concatenate %195, %157 in 1 : vector<16x128xf32>, vector<16x128xf32> -> vector<16x256xf32>
    %cst_77 = arith.constant dense<0.000000e+00> : vector<16x512xf32>
    %197 = tpu.matmul %196, %5, %cst_77 {dimension_numbers = #tpu.dot_dimension_numbers<[1], [0], [0], [1], [0, 0, 1, 1], [], []>} : vector<16x256xf32>, vector<256x512xf32>, vector<16x512xf32> -> vector<16x512xf32>
    %198 = vector.broadcast %7 : vector<1x512xf32> to vector<16x512xf32>
    %199 = arith.addf %197, %198 : vector<16x512xf32>
    %200 = vector.extract_strided_slice %199 {offsets = [0, 0], sizes = [16, 128], strides = [1, 1]} : vector<16x512xf32> to vector<16x128xf32>
    %cst_78 = arith.constant 5.000000e-01 : f32
    %201 = vector.broadcast %cst_78 : f32 to vector<16x128xf32>
    %202 = arith.mulf %201, %200 : vector<16x128xf32>
    %203 = math.tanh %202 : vector<16x128xf32>
    %cst_79 = arith.constant 5.000000e-01 : f32
    %204 = vector.broadcast %cst_79 : f32 to vector<16x128xf32>
    %205 = arith.mulf %204, %203 : vector<16x128xf32>
    %cst_80 = arith.constant 5.000000e-01 : f32
    %206 = vector.broadcast %cst_80 : f32 to vector<16x128xf32>
    %207 = arith.addf %205, %206 : vector<16x128xf32>
    %208 = vector.extract_strided_slice %199 {offsets = [0, 128], sizes = [16, 128], strides = [1, 1]} : vector<16x512xf32> to vector<16x128xf32>
    %cst_81 = arith.constant 5.000000e-01 : f32
    %209 = vector.broadcast %cst_81 : f32 to vector<16x128xf32>
    %210 = arith.mulf %209, %208 : vector<16x128xf32>
    %211 = math.tanh %210 : vector<16x128xf32>
    %cst_82 = arith.constant 5.000000e-01 : f32
    %212 = vector.broadcast %cst_82 : f32 to vector<16x128xf32>
    %213 = arith.mulf %212, %211 : vector<16x128xf32>
    %cst_83 = arith.constant 5.000000e-01 : f32
    %214 = vector.broadcast %cst_83 : f32 to vector<16x128xf32>
    %215 = arith.addf %213, %214 : vector<16x128xf32>
    %216 = vector.extract_strided_slice %199 {offsets = [0, 256], sizes = [16, 128], strides = [1, 1]} : vector<16x512xf32> to vector<16x128xf32>
    %217 = math.tanh %216 : vector<16x128xf32>
    %218 = vector.extract_strided_slice %199 {offsets = [0, 384], sizes = [16, 128], strides = [1, 1]} : vector<16x512xf32> to vector<16x128xf32>
    %cst_84 = arith.constant 5.000000e-01 : f32
    %219 = vector.broadcast %cst_84 : f32 to vector<16x128xf32>
    %220 = arith.mulf %219, %218 : vector<16x128xf32>
    %221 = math.tanh %220 : vector<16x128xf32>
    %cst_85 = arith.constant 5.000000e-01 : f32
    %222 = vector.broadcast %cst_85 : f32 to vector<16x128xf32>
    %223 = arith.mulf %222, %221 : vector<16x128xf32>
    %cst_86 = arith.constant 5.000000e-01 : f32
    %224 = vector.broadcast %cst_86 : f32 to vector<16x128xf32>
    %225 = arith.addf %223, %224 : vector<16x128xf32>
    %226 = arith.mulf %215, %155 : vector<16x128xf32>
    %227 = arith.mulf %207, %217 : vector<16x128xf32>
    %228 = arith.addf %226, %227 : vector<16x128xf32>
    %229 = math.tanh %228 : vector<16x128xf32>
    %230 = arith.mulf %225, %229 : vector<16x128xf32>
    %c3 = arith.constant 3 : index
    %c0_87 = arith.constant 0 : index
    %c0_88 = arith.constant 0 : index
    %231 = vector.load %arg2[%c3, %c0_87, %c0_88] : memref<8x16x16xf32, #tpu.memory_space<vmem>>, vector<1x16x16xf32>
    %232 = vector.shape_cast %231 : vector<1x16x16xf32> to vector<16x16xf32>
    %cst_89 = arith.constant dense<0.000000e+00> : vector<16x512xf32>
    %233 = tpu.matmul %232, %3, %cst_89 {dimension_numbers = #tpu.dot_dimension_numbers<[1], [0], [0], [1], [0, 0, 1, 1], [], []>} : vector<16x16xf32>, vector<16x512xf32>, vector<16x512xf32> -> vector<16x512xf32>
    %cst_90 = arith.constant dense<0.000000e+00> : vector<16x512xf32>
    %234 = tpu.matmul %195, %4, %cst_90 {dimension_numbers = #tpu.dot_dimension_numbers<[1], [0], [0], [1], [0, 0, 1, 1], [], []>} : vector<16x128xf32>, vector<128x512xf32>, vector<16x512xf32> -> vector<16x512xf32>
    %235 = arith.addf %233, %234 : vector<16x512xf32>
    %236 = vector.broadcast %6 : vector<1x512xf32> to vector<16x512xf32>
    %237 = arith.addf %235, %236 : vector<16x512xf32>
    %238 = vector.extract_strided_slice %237 {offsets = [0, 0], sizes = [16, 128], strides = [1, 1]} : vector<16x512xf32> to vector<16x128xf32>
    %cst_91 = arith.constant 5.000000e-01 : f32
    %239 = vector.broadcast %cst_91 : f32 to vector<16x128xf32>
    %240 = arith.mulf %239, %238 : vector<16x128xf32>
    %241 = math.tanh %240 : vector<16x128xf32>
    %cst_92 = arith.constant 5.000000e-01 : f32
    %242 = vector.broadcast %cst_92 : f32 to vector<16x128xf32>
    %243 = arith.mulf %242, %241 : vector<16x128xf32>
    %cst_93 = arith.constant 5.000000e-01 : f32
    %244 = vector.broadcast %cst_93 : f32 to vector<16x128xf32>
    %245 = arith.addf %243, %244 : vector<16x128xf32>
    %246 = vector.extract_strided_slice %237 {offsets = [0, 128], sizes = [16, 128], strides = [1, 1]} : vector<16x512xf32> to vector<16x128xf32>
    %cst_94 = arith.constant 5.000000e-01 : f32
    %247 = vector.broadcast %cst_94 : f32 to vector<16x128xf32>
    %248 = arith.mulf %247, %246 : vector<16x128xf32>
    %249 = math.tanh %248 : vector<16x128xf32>
    %cst_95 = arith.constant 5.000000e-01 : f32
    %250 = vector.broadcast %cst_95 : f32 to vector<16x128xf32>
    %251 = arith.mulf %250, %249 : vector<16x128xf32>
    %cst_96 = arith.constant 5.000000e-01 : f32
    %252 = vector.broadcast %cst_96 : f32 to vector<16x128xf32>
    %253 = arith.addf %251, %252 : vector<16x128xf32>
    %254 = vector.extract_strided_slice %237 {offsets = [0, 256], sizes = [16, 128], strides = [1, 1]} : vector<16x512xf32> to vector<16x128xf32>
    %255 = math.tanh %254 : vector<16x128xf32>
    %256 = vector.extract_strided_slice %237 {offsets = [0, 384], sizes = [16, 128], strides = [1, 1]} : vector<16x512xf32> to vector<16x128xf32>
    %cst_97 = arith.constant 5.000000e-01 : f32
    %257 = vector.broadcast %cst_97 : f32 to vector<16x128xf32>
    %258 = arith.mulf %257, %256 : vector<16x128xf32>
    %259 = math.tanh %258 : vector<16x128xf32>
    %cst_98 = arith.constant 5.000000e-01 : f32
    %260 = vector.broadcast %cst_98 : f32 to vector<16x128xf32>
    %261 = arith.mulf %260, %259 : vector<16x128xf32>
    %cst_99 = arith.constant 5.000000e-01 : f32
    %262 = vector.broadcast %cst_99 : f32 to vector<16x128xf32>
    %263 = arith.addf %261, %262 : vector<16x128xf32>
    %264 = arith.mulf %253, %193 : vector<16x128xf32>
    %265 = arith.mulf %245, %255 : vector<16x128xf32>
    %266 = arith.addf %264, %265 : vector<16x128xf32>
    %267 = math.tanh %266 : vector<16x128xf32>
    %268 = arith.mulf %263, %267 : vector<16x128xf32>
    %269 = tpu.concatenate %268, %230 in 1 : vector<16x128xf32>, vector<16x128xf32> -> vector<16x256xf32>
    %cst_100 = arith.constant dense<0.000000e+00> : vector<16x512xf32>
    %270 = tpu.matmul %269, %5, %cst_100 {dimension_numbers = #tpu.dot_dimension_numbers<[1], [0], [0], [1], [0, 0, 1, 1], [], []>} : vector<16x256xf32>, vector<256x512xf32>, vector<16x512xf32> -> vector<16x512xf32>
    %271 = vector.broadcast %7 : vector<1x512xf32> to vector<16x512xf32>
    %272 = arith.addf %270, %271 : vector<16x512xf32>
    %273 = vector.extract_strided_slice %272 {offsets = [0, 0], sizes = [16, 128], strides = [1, 1]} : vector<16x512xf32> to vector<16x128xf32>
    %cst_101 = arith.constant 5.000000e-01 : f32
    %274 = vector.broadcast %cst_101 : f32 to vector<16x128xf32>
    %275 = arith.mulf %274, %273 : vector<16x128xf32>
    %276 = math.tanh %275 : vector<16x128xf32>
    %cst_102 = arith.constant 5.000000e-01 : f32
    %277 = vector.broadcast %cst_102 : f32 to vector<16x128xf32>
    %278 = arith.mulf %277, %276 : vector<16x128xf32>
    %cst_103 = arith.constant 5.000000e-01 : f32
    %279 = vector.broadcast %cst_103 : f32 to vector<16x128xf32>
    %280 = arith.addf %278, %279 : vector<16x128xf32>
    %281 = vector.extract_strided_slice %272 {offsets = [0, 128], sizes = [16, 128], strides = [1, 1]} : vector<16x512xf32> to vector<16x128xf32>
    %cst_104 = arith.constant 5.000000e-01 : f32
    %282 = vector.broadcast %cst_104 : f32 to vector<16x128xf32>
    %283 = arith.mulf %282, %281 : vector<16x128xf32>
    %284 = math.tanh %283 : vector<16x128xf32>
    %cst_105 = arith.constant 5.000000e-01 : f32
    %285 = vector.broadcast %cst_105 : f32 to vector<16x128xf32>
    %286 = arith.mulf %285, %284 : vector<16x128xf32>
    %cst_106 = arith.constant 5.000000e-01 : f32
    %287 = vector.broadcast %cst_106 : f32 to vector<16x128xf32>
    %288 = arith.addf %286, %287 : vector<16x128xf32>
    %289 = vector.extract_strided_slice %272 {offsets = [0, 256], sizes = [16, 128], strides = [1, 1]} : vector<16x512xf32> to vector<16x128xf32>
    %290 = math.tanh %289 : vector<16x128xf32>
    %291 = vector.extract_strided_slice %272 {offsets = [0, 384], sizes = [16, 128], strides = [1, 1]} : vector<16x512xf32> to vector<16x128xf32>
    %cst_107 = arith.constant 5.000000e-01 : f32
    %292 = vector.broadcast %cst_107 : f32 to vector<16x128xf32>
    %293 = arith.mulf %292, %291 : vector<16x128xf32>
    %294 = math.tanh %293 : vector<16x128xf32>
    %cst_108 = arith.constant 5.000000e-01 : f32
    %295 = vector.broadcast %cst_108 : f32 to vector<16x128xf32>
    %296 = arith.mulf %295, %294 : vector<16x128xf32>
    %cst_109 = arith.constant 5.000000e-01 : f32
    %297 = vector.broadcast %cst_109 : f32 to vector<16x128xf32>
    %298 = arith.addf %296, %297 : vector<16x128xf32>
    %299 = arith.mulf %288, %228 : vector<16x128xf32>
    %300 = arith.mulf %280, %290 : vector<16x128xf32>
    %301 = arith.addf %299, %300 : vector<16x128xf32>
    %302 = math.tanh %301 : vector<16x128xf32>
    %303 = arith.mulf %298, %302 : vector<16x128xf32>
    %c4 = arith.constant 4 : index
    %c0_110 = arith.constant 0 : index
    %c0_111 = arith.constant 0 : index
    %304 = vector.load %arg2[%c4, %c0_110, %c0_111] : memref<8x16x16xf32, #tpu.memory_space<vmem>>, vector<1x16x16xf32>
    %305 = vector.shape_cast %304 : vector<1x16x16xf32> to vector<16x16xf32>
    %cst_112 = arith.constant dense<0.000000e+00> : vector<16x512xf32>
    %306 = tpu.matmul %305, %3, %cst_112 {dimension_numbers = #tpu.dot_dimension_numbers<[1], [0], [0], [1], [0, 0, 1, 1], [], []>} : vector<16x16xf32>, vector<16x512xf32>, vector<16x512xf32> -> vector<16x512xf32>
    %cst_113 = arith.constant dense<0.000000e+00> : vector<16x512xf32>
    %307 = tpu.matmul %268, %4, %cst_113 {dimension_numbers = #tpu.dot_dimension_numbers<[1], [0], [0], [1], [0, 0, 1, 1], [], []>} : vector<16x128xf32>, vector<128x512xf32>, vector<16x512xf32> -> vector<16x512xf32>
    %308 = arith.addf %306, %307 : vector<16x512xf32>
    %309 = vector.broadcast %6 : vector<1x512xf32> to vector<16x512xf32>
    %310 = arith.addf %308, %309 : vector<16x512xf32>
    %311 = vector.extract_strided_slice %310 {offsets = [0, 0], sizes = [16, 128], strides = [1, 1]} : vector<16x512xf32> to vector<16x128xf32>
    %cst_114 = arith.constant 5.000000e-01 : f32
    %312 = vector.broadcast %cst_114 : f32 to vector<16x128xf32>
    %313 = arith.mulf %312, %311 : vector<16x128xf32>
    %314 = math.tanh %313 : vector<16x128xf32>
    %cst_115 = arith.constant 5.000000e-01 : f32
    %315 = vector.broadcast %cst_115 : f32 to vector<16x128xf32>
    %316 = arith.mulf %315, %314 : vector<16x128xf32>
    %cst_116 = arith.constant 5.000000e-01 : f32
    %317 = vector.broadcast %cst_116 : f32 to vector<16x128xf32>
    %318 = arith.addf %316, %317 : vector<16x128xf32>
    %319 = vector.extract_strided_slice %310 {offsets = [0, 128], sizes = [16, 128], strides = [1, 1]} : vector<16x512xf32> to vector<16x128xf32>
    %cst_117 = arith.constant 5.000000e-01 : f32
    %320 = vector.broadcast %cst_117 : f32 to vector<16x128xf32>
    %321 = arith.mulf %320, %319 : vector<16x128xf32>
    %322 = math.tanh %321 : vector<16x128xf32>
    %cst_118 = arith.constant 5.000000e-01 : f32
    %323 = vector.broadcast %cst_118 : f32 to vector<16x128xf32>
    %324 = arith.mulf %323, %322 : vector<16x128xf32>
    %cst_119 = arith.constant 5.000000e-01 : f32
    %325 = vector.broadcast %cst_119 : f32 to vector<16x128xf32>
    %326 = arith.addf %324, %325 : vector<16x128xf32>
    %327 = vector.extract_strided_slice %310 {offsets = [0, 256], sizes = [16, 128], strides = [1, 1]} : vector<16x512xf32> to vector<16x128xf32>
    %328 = math.tanh %327 : vector<16x128xf32>
    %329 = vector.extract_strided_slice %310 {offsets = [0, 384], sizes = [16, 128], strides = [1, 1]} : vector<16x512xf32> to vector<16x128xf32>
    %cst_120 = arith.constant 5.000000e-01 : f32
    %330 = vector.broadcast %cst_120 : f32 to vector<16x128xf32>
    %331 = arith.mulf %330, %329 : vector<16x128xf32>
    %332 = math.tanh %331 : vector<16x128xf32>
    %cst_121 = arith.constant 5.000000e-01 : f32
    %333 = vector.broadcast %cst_121 : f32 to vector<16x128xf32>
    %334 = arith.mulf %333, %332 : vector<16x128xf32>
    %cst_122 = arith.constant 5.000000e-01 : f32
    %335 = vector.broadcast %cst_122 : f32 to vector<16x128xf32>
    %336 = arith.addf %334, %335 : vector<16x128xf32>
    %337 = arith.mulf %326, %266 : vector<16x128xf32>
    %338 = arith.mulf %318, %328 : vector<16x128xf32>
    %339 = arith.addf %337, %338 : vector<16x128xf32>
    %340 = math.tanh %339 : vector<16x128xf32>
    %341 = arith.mulf %336, %340 : vector<16x128xf32>
    %342 = tpu.concatenate %341, %303 in 1 : vector<16x128xf32>, vector<16x128xf32> -> vector<16x256xf32>
    %cst_123 = arith.constant dense<0.000000e+00> : vector<16x512xf32>
    %343 = tpu.matmul %342, %5, %cst_123 {dimension_numbers = #tpu.dot_dimension_numbers<[1], [0], [0], [1], [0, 0, 1, 1], [], []>} : vector<16x256xf32>, vector<256x512xf32>, vector<16x512xf32> -> vector<16x512xf32>
    %344 = vector.broadcast %7 : vector<1x512xf32> to vector<16x512xf32>
    %345 = arith.addf %343, %344 : vector<16x512xf32>
    %346 = vector.extract_strided_slice %345 {offsets = [0, 0], sizes = [16, 128], strides = [1, 1]} : vector<16x512xf32> to vector<16x128xf32>
    %cst_124 = arith.constant 5.000000e-01 : f32
    %347 = vector.broadcast %cst_124 : f32 to vector<16x128xf32>
    %348 = arith.mulf %347, %346 : vector<16x128xf32>
    %349 = math.tanh %348 : vector<16x128xf32>
    %cst_125 = arith.constant 5.000000e-01 : f32
    %350 = vector.broadcast %cst_125 : f32 to vector<16x128xf32>
    %351 = arith.mulf %350, %349 : vector<16x128xf32>
    %cst_126 = arith.constant 5.000000e-01 : f32
    %352 = vector.broadcast %cst_126 : f32 to vector<16x128xf32>
    %353 = arith.addf %351, %352 : vector<16x128xf32>
    %354 = vector.extract_strided_slice %345 {offsets = [0, 128], sizes = [16, 128], strides = [1, 1]} : vector<16x512xf32> to vector<16x128xf32>
    %cst_127 = arith.constant 5.000000e-01 : f32
    %355 = vector.broadcast %cst_127 : f32 to vector<16x128xf32>
    %356 = arith.mulf %355, %354 : vector<16x128xf32>
    %357 = math.tanh %356 : vector<16x128xf32>
    %cst_128 = arith.constant 5.000000e-01 : f32
    %358 = vector.broadcast %cst_128 : f32 to vector<16x128xf32>
    %359 = arith.mulf %358, %357 : vector<16x128xf32>
    %cst_129 = arith.constant 5.000000e-01 : f32
    %360 = vector.broadcast %cst_129 : f32 to vector<16x128xf32>
    %361 = arith.addf %359, %360 : vector<16x128xf32>
    %362 = vector.extract_strided_slice %345 {offsets = [0, 256], sizes = [16, 128], strides = [1, 1]} : vector<16x512xf32> to vector<16x128xf32>
    %363 = math.tanh %362 : vector<16x128xf32>
    %364 = vector.extract_strided_slice %345 {offsets = [0, 384], sizes = [16, 128], strides = [1, 1]} : vector<16x512xf32> to vector<16x128xf32>
    %cst_130 = arith.constant 5.000000e-01 : f32
    %365 = vector.broadcast %cst_130 : f32 to vector<16x128xf32>
    %366 = arith.mulf %365, %364 : vector<16x128xf32>
    %367 = math.tanh %366 : vector<16x128xf32>
    %cst_131 = arith.constant 5.000000e-01 : f32
    %368 = vector.broadcast %cst_131 : f32 to vector<16x128xf32>
    %369 = arith.mulf %368, %367 : vector<16x128xf32>
    %cst_132 = arith.constant 5.000000e-01 : f32
    %370 = vector.broadcast %cst_132 : f32 to vector<16x128xf32>
    %371 = arith.addf %369, %370 : vector<16x128xf32>
    %372 = arith.mulf %361, %301 : vector<16x128xf32>
    %373 = arith.mulf %353, %363 : vector<16x128xf32>
    %374 = arith.addf %372, %373 : vector<16x128xf32>
    %375 = math.tanh %374 : vector<16x128xf32>
    %376 = arith.mulf %371, %375 : vector<16x128xf32>
    %c5 = arith.constant 5 : index
    %c0_133 = arith.constant 0 : index
    %c0_134 = arith.constant 0 : index
    %377 = vector.load %arg2[%c5, %c0_133, %c0_134] : memref<8x16x16xf32, #tpu.memory_space<vmem>>, vector<1x16x16xf32>
    %378 = vector.shape_cast %377 : vector<1x16x16xf32> to vector<16x16xf32>
    %cst_135 = arith.constant dense<0.000000e+00> : vector<16x512xf32>
    %379 = tpu.matmul %378, %3, %cst_135 {dimension_numbers = #tpu.dot_dimension_numbers<[1], [0], [0], [1], [0, 0, 1, 1], [], []>} : vector<16x16xf32>, vector<16x512xf32>, vector<16x512xf32> -> vector<16x512xf32>
    %cst_136 = arith.constant dense<0.000000e+00> : vector<16x512xf32>
    %380 = tpu.matmul %341, %4, %cst_136 {dimension_numbers = #tpu.dot_dimension_numbers<[1], [0], [0], [1], [0, 0, 1, 1], [], []>} : vector<16x128xf32>, vector<128x512xf32>, vector<16x512xf32> -> vector<16x512xf32>
    %381 = arith.addf %379, %380 : vector<16x512xf32>
    %382 = vector.broadcast %6 : vector<1x512xf32> to vector<16x512xf32>
    %383 = arith.addf %381, %382 : vector<16x512xf32>
    %384 = vector.extract_strided_slice %383 {offsets = [0, 0], sizes = [16, 128], strides = [1, 1]} : vector<16x512xf32> to vector<16x128xf32>
    %cst_137 = arith.constant 5.000000e-01 : f32
    %385 = vector.broadcast %cst_137 : f32 to vector<16x128xf32>
    %386 = arith.mulf %385, %384 : vector<16x128xf32>
    %387 = math.tanh %386 : vector<16x128xf32>
    %cst_138 = arith.constant 5.000000e-01 : f32
    %388 = vector.broadcast %cst_138 : f32 to vector<16x128xf32>
    %389 = arith.mulf %388, %387 : vector<16x128xf32>
    %cst_139 = arith.constant 5.000000e-01 : f32
    %390 = vector.broadcast %cst_139 : f32 to vector<16x128xf32>
    %391 = arith.addf %389, %390 : vector<16x128xf32>
    %392 = vector.extract_strided_slice %383 {offsets = [0, 128], sizes = [16, 128], strides = [1, 1]} : vector<16x512xf32> to vector<16x128xf32>
    %cst_140 = arith.constant 5.000000e-01 : f32
    %393 = vector.broadcast %cst_140 : f32 to vector<16x128xf32>
    %394 = arith.mulf %393, %392 : vector<16x128xf32>
    %395 = math.tanh %394 : vector<16x128xf32>
    %cst_141 = arith.constant 5.000000e-01 : f32
    %396 = vector.broadcast %cst_141 : f32 to vector<16x128xf32>
    %397 = arith.mulf %396, %395 : vector<16x128xf32>
    %cst_142 = arith.constant 5.000000e-01 : f32
    %398 = vector.broadcast %cst_142 : f32 to vector<16x128xf32>
    %399 = arith.addf %397, %398 : vector<16x128xf32>
    %400 = vector.extract_strided_slice %383 {offsets = [0, 256], sizes = [16, 128], strides = [1, 1]} : vector<16x512xf32> to vector<16x128xf32>
    %401 = math.tanh %400 : vector<16x128xf32>
    %402 = vector.extract_strided_slice %383 {offsets = [0, 384], sizes = [16, 128], strides = [1, 1]} : vector<16x512xf32> to vector<16x128xf32>
    %cst_143 = arith.constant 5.000000e-01 : f32
    %403 = vector.broadcast %cst_143 : f32 to vector<16x128xf32>
    %404 = arith.mulf %403, %402 : vector<16x128xf32>
    %405 = math.tanh %404 : vector<16x128xf32>
    %cst_144 = arith.constant 5.000000e-01 : f32
    %406 = vector.broadcast %cst_144 : f32 to vector<16x128xf32>
    %407 = arith.mulf %406, %405 : vector<16x128xf32>
    %cst_145 = arith.constant 5.000000e-01 : f32
    %408 = vector.broadcast %cst_145 : f32 to vector<16x128xf32>
    %409 = arith.addf %407, %408 : vector<16x128xf32>
    %410 = arith.mulf %399, %339 : vector<16x128xf32>
    %411 = arith.mulf %391, %401 : vector<16x128xf32>
    %412 = arith.addf %410, %411 : vector<16x128xf32>
    %413 = math.tanh %412 : vector<16x128xf32>
    %414 = arith.mulf %409, %413 : vector<16x128xf32>
    %415 = tpu.concatenate %414, %376 in 1 : vector<16x128xf32>, vector<16x128xf32> -> vector<16x256xf32>
    %cst_146 = arith.constant dense<0.000000e+00> : vector<16x512xf32>
    %416 = tpu.matmul %415, %5, %cst_146 {dimension_numbers = #tpu.dot_dimension_numbers<[1], [0], [0], [1], [0, 0, 1, 1], [], []>} : vector<16x256xf32>, vector<256x512xf32>, vector<16x512xf32> -> vector<16x512xf32>
    %417 = vector.broadcast %7 : vector<1x512xf32> to vector<16x512xf32>
    %418 = arith.addf %416, %417 : vector<16x512xf32>
    %419 = vector.extract_strided_slice %418 {offsets = [0, 0], sizes = [16, 128], strides = [1, 1]} : vector<16x512xf32> to vector<16x128xf32>
    %cst_147 = arith.constant 5.000000e-01 : f32
    %420 = vector.broadcast %cst_147 : f32 to vector<16x128xf32>
    %421 = arith.mulf %420, %419 : vector<16x128xf32>
    %422 = math.tanh %421 : vector<16x128xf32>
    %cst_148 = arith.constant 5.000000e-01 : f32
    %423 = vector.broadcast %cst_148 : f32 to vector<16x128xf32>
    %424 = arith.mulf %423, %422 : vector<16x128xf32>
    %cst_149 = arith.constant 5.000000e-01 : f32
    %425 = vector.broadcast %cst_149 : f32 to vector<16x128xf32>
    %426 = arith.addf %424, %425 : vector<16x128xf32>
    %427 = vector.extract_strided_slice %418 {offsets = [0, 128], sizes = [16, 128], strides = [1, 1]} : vector<16x512xf32> to vector<16x128xf32>
    %cst_150 = arith.constant 5.000000e-01 : f32
    %428 = vector.broadcast %cst_150 : f32 to vector<16x128xf32>
    %429 = arith.mulf %428, %427 : vector<16x128xf32>
    %430 = math.tanh %429 : vector<16x128xf32>
    %cst_151 = arith.constant 5.000000e-01 : f32
    %431 = vector.broadcast %cst_151 : f32 to vector<16x128xf32>
    %432 = arith.mulf %431, %430 : vector<16x128xf32>
    %cst_152 = arith.constant 5.000000e-01 : f32
    %433 = vector.broadcast %cst_152 : f32 to vector<16x128xf32>
    %434 = arith.addf %432, %433 : vector<16x128xf32>
    %435 = vector.extract_strided_slice %418 {offsets = [0, 256], sizes = [16, 128], strides = [1, 1]} : vector<16x512xf32> to vector<16x128xf32>
    %436 = math.tanh %435 : vector<16x128xf32>
    %437 = vector.extract_strided_slice %418 {offsets = [0, 384], sizes = [16, 128], strides = [1, 1]} : vector<16x512xf32> to vector<16x128xf32>
    %cst_153 = arith.constant 5.000000e-01 : f32
    %438 = vector.broadcast %cst_153 : f32 to vector<16x128xf32>
    %439 = arith.mulf %438, %437 : vector<16x128xf32>
    %440 = math.tanh %439 : vector<16x128xf32>
    %cst_154 = arith.constant 5.000000e-01 : f32
    %441 = vector.broadcast %cst_154 : f32 to vector<16x128xf32>
    %442 = arith.mulf %441, %440 : vector<16x128xf32>
    %cst_155 = arith.constant 5.000000e-01 : f32
    %443 = vector.broadcast %cst_155 : f32 to vector<16x128xf32>
    %444 = arith.addf %442, %443 : vector<16x128xf32>
    %445 = arith.mulf %434, %374 : vector<16x128xf32>
    %446 = arith.mulf %426, %436 : vector<16x128xf32>
    %447 = arith.addf %445, %446 : vector<16x128xf32>
    %448 = math.tanh %447 : vector<16x128xf32>
    %449 = arith.mulf %444, %448 : vector<16x128xf32>
    %c6 = arith.constant 6 : index
    %c0_156 = arith.constant 0 : index
    %c0_157 = arith.constant 0 : index
    %450 = vector.load %arg2[%c6, %c0_156, %c0_157] : memref<8x16x16xf32, #tpu.memory_space<vmem>>, vector<1x16x16xf32>
    %451 = vector.shape_cast %450 : vector<1x16x16xf32> to vector<16x16xf32>
    %cst_158 = arith.constant dense<0.000000e+00> : vector<16x512xf32>
    %452 = tpu.matmul %451, %3, %cst_158 {dimension_numbers = #tpu.dot_dimension_numbers<[1], [0], [0], [1], [0, 0, 1, 1], [], []>} : vector<16x16xf32>, vector<16x512xf32>, vector<16x512xf32> -> vector<16x512xf32>
    %cst_159 = arith.constant dense<0.000000e+00> : vector<16x512xf32>
    %453 = tpu.matmul %414, %4, %cst_159 {dimension_numbers = #tpu.dot_dimension_numbers<[1], [0], [0], [1], [0, 0, 1, 1], [], []>} : vector<16x128xf32>, vector<128x512xf32>, vector<16x512xf32> -> vector<16x512xf32>
    %454 = arith.addf %452, %453 : vector<16x512xf32>
    %455 = vector.broadcast %6 : vector<1x512xf32> to vector<16x512xf32>
    %456 = arith.addf %454, %455 : vector<16x512xf32>
    %457 = vector.extract_strided_slice %456 {offsets = [0, 0], sizes = [16, 128], strides = [1, 1]} : vector<16x512xf32> to vector<16x128xf32>
    %cst_160 = arith.constant 5.000000e-01 : f32
    %458 = vector.broadcast %cst_160 : f32 to vector<16x128xf32>
    %459 = arith.mulf %458, %457 : vector<16x128xf32>
    %460 = math.tanh %459 : vector<16x128xf32>
    %cst_161 = arith.constant 5.000000e-01 : f32
    %461 = vector.broadcast %cst_161 : f32 to vector<16x128xf32>
    %462 = arith.mulf %461, %460 : vector<16x128xf32>
    %cst_162 = arith.constant 5.000000e-01 : f32
    %463 = vector.broadcast %cst_162 : f32 to vector<16x128xf32>
    %464 = arith.addf %462, %463 : vector<16x128xf32>
    %465 = vector.extract_strided_slice %456 {offsets = [0, 128], sizes = [16, 128], strides = [1, 1]} : vector<16x512xf32> to vector<16x128xf32>
    %cst_163 = arith.constant 5.000000e-01 : f32
    %466 = vector.broadcast %cst_163 : f32 to vector<16x128xf32>
    %467 = arith.mulf %466, %465 : vector<16x128xf32>
    %468 = math.tanh %467 : vector<16x128xf32>
    %cst_164 = arith.constant 5.000000e-01 : f32
    %469 = vector.broadcast %cst_164 : f32 to vector<16x128xf32>
    %470 = arith.mulf %469, %468 : vector<16x128xf32>
    %cst_165 = arith.constant 5.000000e-01 : f32
    %471 = vector.broadcast %cst_165 : f32 to vector<16x128xf32>
    %472 = arith.addf %470, %471 : vector<16x128xf32>
    %473 = vector.extract_strided_slice %456 {offsets = [0, 256], sizes = [16, 128], strides = [1, 1]} : vector<16x512xf32> to vector<16x128xf32>
    %474 = math.tanh %473 : vector<16x128xf32>
    %475 = vector.extract_strided_slice %456 {offsets = [0, 384], sizes = [16, 128], strides = [1, 1]} : vector<16x512xf32> to vector<16x128xf32>
    %cst_166 = arith.constant 5.000000e-01 : f32
    %476 = vector.broadcast %cst_166 : f32 to vector<16x128xf32>
    %477 = arith.mulf %476, %475 : vector<16x128xf32>
    %478 = math.tanh %477 : vector<16x128xf32>
    %cst_167 = arith.constant 5.000000e-01 : f32
    %479 = vector.broadcast %cst_167 : f32 to vector<16x128xf32>
    %480 = arith.mulf %479, %478 : vector<16x128xf32>
    %cst_168 = arith.constant 5.000000e-01 : f32
    %481 = vector.broadcast %cst_168 : f32 to vector<16x128xf32>
    %482 = arith.addf %480, %481 : vector<16x128xf32>
    %483 = arith.mulf %472, %412 : vector<16x128xf32>
    %484 = arith.mulf %464, %474 : vector<16x128xf32>
    %485 = arith.addf %483, %484 : vector<16x128xf32>
    %486 = math.tanh %485 : vector<16x128xf32>
    %487 = arith.mulf %482, %486 : vector<16x128xf32>
    %488 = tpu.concatenate %487, %449 in 1 : vector<16x128xf32>, vector<16x128xf32> -> vector<16x256xf32>
    %cst_169 = arith.constant dense<0.000000e+00> : vector<16x512xf32>
    %489 = tpu.matmul %488, %5, %cst_169 {dimension_numbers = #tpu.dot_dimension_numbers<[1], [0], [0], [1], [0, 0, 1, 1], [], []>} : vector<16x256xf32>, vector<256x512xf32>, vector<16x512xf32> -> vector<16x512xf32>
    %490 = vector.broadcast %7 : vector<1x512xf32> to vector<16x512xf32>
    %491 = arith.addf %489, %490 : vector<16x512xf32>
    %492 = vector.extract_strided_slice %491 {offsets = [0, 0], sizes = [16, 128], strides = [1, 1]} : vector<16x512xf32> to vector<16x128xf32>
    %cst_170 = arith.constant 5.000000e-01 : f32
    %493 = vector.broadcast %cst_170 : f32 to vector<16x128xf32>
    %494 = arith.mulf %493, %492 : vector<16x128xf32>
    %495 = math.tanh %494 : vector<16x128xf32>
    %cst_171 = arith.constant 5.000000e-01 : f32
    %496 = vector.broadcast %cst_171 : f32 to vector<16x128xf32>
    %497 = arith.mulf %496, %495 : vector<16x128xf32>
    %cst_172 = arith.constant 5.000000e-01 : f32
    %498 = vector.broadcast %cst_172 : f32 to vector<16x128xf32>
    %499 = arith.addf %497, %498 : vector<16x128xf32>
    %500 = vector.extract_strided_slice %491 {offsets = [0, 128], sizes = [16, 128], strides = [1, 1]} : vector<16x512xf32> to vector<16x128xf32>
    %cst_173 = arith.constant 5.000000e-01 : f32
    %501 = vector.broadcast %cst_173 : f32 to vector<16x128xf32>
    %502 = arith.mulf %501, %500 : vector<16x128xf32>
    %503 = math.tanh %502 : vector<16x128xf32>
    %cst_174 = arith.constant 5.000000e-01 : f32
    %504 = vector.broadcast %cst_174 : f32 to vector<16x128xf32>
    %505 = arith.mulf %504, %503 : vector<16x128xf32>
    %cst_175 = arith.constant 5.000000e-01 : f32
    %506 = vector.broadcast %cst_175 : f32 to vector<16x128xf32>
    %507 = arith.addf %505, %506 : vector<16x128xf32>
    %508 = vector.extract_strided_slice %491 {offsets = [0, 256], sizes = [16, 128], strides = [1, 1]} : vector<16x512xf32> to vector<16x128xf32>
    %509 = math.tanh %508 : vector<16x128xf32>
    %510 = vector.extract_strided_slice %491 {offsets = [0, 384], sizes = [16, 128], strides = [1, 1]} : vector<16x512xf32> to vector<16x128xf32>
    %cst_176 = arith.constant 5.000000e-01 : f32
    %511 = vector.broadcast %cst_176 : f32 to vector<16x128xf32>
    %512 = arith.mulf %511, %510 : vector<16x128xf32>
    %513 = math.tanh %512 : vector<16x128xf32>
    %cst_177 = arith.constant 5.000000e-01 : f32
    %514 = vector.broadcast %cst_177 : f32 to vector<16x128xf32>
    %515 = arith.mulf %514, %513 : vector<16x128xf32>
    %cst_178 = arith.constant 5.000000e-01 : f32
    %516 = vector.broadcast %cst_178 : f32 to vector<16x128xf32>
    %517 = arith.addf %515, %516 : vector<16x128xf32>
    %518 = arith.mulf %507, %447 : vector<16x128xf32>
    %519 = arith.mulf %499, %509 : vector<16x128xf32>
    %520 = arith.addf %518, %519 : vector<16x128xf32>
    %521 = math.tanh %520 : vector<16x128xf32>
    %522 = arith.mulf %517, %521 : vector<16x128xf32>
    %c7 = arith.constant 7 : index
    %c0_179 = arith.constant 0 : index
    %c0_180 = arith.constant 0 : index
    %523 = vector.load %arg2[%c7, %c0_179, %c0_180] : memref<8x16x16xf32, #tpu.memory_space<vmem>>, vector<1x16x16xf32>
    %524 = vector.shape_cast %523 : vector<1x16x16xf32> to vector<16x16xf32>
    %cst_181 = arith.constant dense<0.000000e+00> : vector<16x512xf32>
    %525 = tpu.matmul %524, %3, %cst_181 {dimension_numbers = #tpu.dot_dimension_numbers<[1], [0], [0], [1], [0, 0, 1, 1], [], []>} : vector<16x16xf32>, vector<16x512xf32>, vector<16x512xf32> -> vector<16x512xf32>
    %cst_182 = arith.constant dense<0.000000e+00> : vector<16x512xf32>
    %526 = tpu.matmul %487, %4, %cst_182 {dimension_numbers = #tpu.dot_dimension_numbers<[1], [0], [0], [1], [0, 0, 1, 1], [], []>} : vector<16x128xf32>, vector<128x512xf32>, vector<16x512xf32> -> vector<16x512xf32>
    %527 = arith.addf %525, %526 : vector<16x512xf32>
    %528 = vector.broadcast %6 : vector<1x512xf32> to vector<16x512xf32>
    %529 = arith.addf %527, %528 : vector<16x512xf32>
    %530 = vector.extract_strided_slice %529 {offsets = [0, 0], sizes = [16, 128], strides = [1, 1]} : vector<16x512xf32> to vector<16x128xf32>
    %cst_183 = arith.constant 5.000000e-01 : f32
    %531 = vector.broadcast %cst_183 : f32 to vector<16x128xf32>
    %532 = arith.mulf %531, %530 : vector<16x128xf32>
    %533 = math.tanh %532 : vector<16x128xf32>
    %cst_184 = arith.constant 5.000000e-01 : f32
    %534 = vector.broadcast %cst_184 : f32 to vector<16x128xf32>
    %535 = arith.mulf %534, %533 : vector<16x128xf32>
    %cst_185 = arith.constant 5.000000e-01 : f32
    %536 = vector.broadcast %cst_185 : f32 to vector<16x128xf32>
    %537 = arith.addf %535, %536 : vector<16x128xf32>
    %538 = vector.extract_strided_slice %529 {offsets = [0, 128], sizes = [16, 128], strides = [1, 1]} : vector<16x512xf32> to vector<16x128xf32>
    %cst_186 = arith.constant 5.000000e-01 : f32
    %539 = vector.broadcast %cst_186 : f32 to vector<16x128xf32>
    %540 = arith.mulf %539, %538 : vector<16x128xf32>
    %541 = math.tanh %540 : vector<16x128xf32>
    %cst_187 = arith.constant 5.000000e-01 : f32
    %542 = vector.broadcast %cst_187 : f32 to vector<16x128xf32>
    %543 = arith.mulf %542, %541 : vector<16x128xf32>
    %cst_188 = arith.constant 5.000000e-01 : f32
    %544 = vector.broadcast %cst_188 : f32 to vector<16x128xf32>
    %545 = arith.addf %543, %544 : vector<16x128xf32>
    %546 = vector.extract_strided_slice %529 {offsets = [0, 256], sizes = [16, 128], strides = [1, 1]} : vector<16x512xf32> to vector<16x128xf32>
    %547 = math.tanh %546 : vector<16x128xf32>
    %548 = vector.extract_strided_slice %529 {offsets = [0, 384], sizes = [16, 128], strides = [1, 1]} : vector<16x512xf32> to vector<16x128xf32>
    %cst_189 = arith.constant 5.000000e-01 : f32
    %549 = vector.broadcast %cst_189 : f32 to vector<16x128xf32>
    %550 = arith.mulf %549, %548 : vector<16x128xf32>
    %551 = math.tanh %550 : vector<16x128xf32>
    %cst_190 = arith.constant 5.000000e-01 : f32
    %552 = vector.broadcast %cst_190 : f32 to vector<16x128xf32>
    %553 = arith.mulf %552, %551 : vector<16x128xf32>
    %cst_191 = arith.constant 5.000000e-01 : f32
    %554 = vector.broadcast %cst_191 : f32 to vector<16x128xf32>
    %555 = arith.addf %553, %554 : vector<16x128xf32>
    %556 = arith.mulf %545, %485 : vector<16x128xf32>
    %557 = arith.mulf %537, %547 : vector<16x128xf32>
    %558 = arith.addf %556, %557 : vector<16x128xf32>
    %559 = math.tanh %558 : vector<16x128xf32>
    %560 = arith.mulf %555, %559 : vector<16x128xf32>
    %561 = tpu.concatenate %560, %522 in 1 : vector<16x128xf32>, vector<16x128xf32> -> vector<16x256xf32>
    %cst_192 = arith.constant dense<0.000000e+00> : vector<16x512xf32>
    %562 = tpu.matmul %561, %5, %cst_192 {dimension_numbers = #tpu.dot_dimension_numbers<[1], [0], [0], [1], [0, 0, 1, 1], [], []>} : vector<16x256xf32>, vector<256x512xf32>, vector<16x512xf32> -> vector<16x512xf32>
    %563 = vector.broadcast %7 : vector<1x512xf32> to vector<16x512xf32>
    %564 = arith.addf %562, %563 : vector<16x512xf32>
    %565 = vector.extract_strided_slice %564 {offsets = [0, 0], sizes = [16, 128], strides = [1, 1]} : vector<16x512xf32> to vector<16x128xf32>
    %cst_193 = arith.constant 5.000000e-01 : f32
    %566 = vector.broadcast %cst_193 : f32 to vector<16x128xf32>
    %567 = arith.mulf %566, %565 : vector<16x128xf32>
    %568 = math.tanh %567 : vector<16x128xf32>
    %cst_194 = arith.constant 5.000000e-01 : f32
    %569 = vector.broadcast %cst_194 : f32 to vector<16x128xf32>
    %570 = arith.mulf %569, %568 : vector<16x128xf32>
    %cst_195 = arith.constant 5.000000e-01 : f32
    %571 = vector.broadcast %cst_195 : f32 to vector<16x128xf32>
    %572 = arith.addf %570, %571 : vector<16x128xf32>
    %573 = vector.extract_strided_slice %564 {offsets = [0, 128], sizes = [16, 128], strides = [1, 1]} : vector<16x512xf32> to vector<16x128xf32>
    %cst_196 = arith.constant 5.000000e-01 : f32
    %574 = vector.broadcast %cst_196 : f32 to vector<16x128xf32>
    %575 = arith.mulf %574, %573 : vector<16x128xf32>
    %576 = math.tanh %575 : vector<16x128xf32>
    %cst_197 = arith.constant 5.000000e-01 : f32
    %577 = vector.broadcast %cst_197 : f32 to vector<16x128xf32>
    %578 = arith.mulf %577, %576 : vector<16x128xf32>
    %cst_198 = arith.constant 5.000000e-01 : f32
    %579 = vector.broadcast %cst_198 : f32 to vector<16x128xf32>
    %580 = arith.addf %578, %579 : vector<16x128xf32>
    %581 = vector.extract_strided_slice %564 {offsets = [0, 256], sizes = [16, 128], strides = [1, 1]} : vector<16x512xf32> to vector<16x128xf32>
    %582 = math.tanh %581 : vector<16x128xf32>
    %583 = vector.extract_strided_slice %564 {offsets = [0, 384], sizes = [16, 128], strides = [1, 1]} : vector<16x512xf32> to vector<16x128xf32>
    %cst_199 = arith.constant 5.000000e-01 : f32
    %584 = vector.broadcast %cst_199 : f32 to vector<16x128xf32>
    %585 = arith.mulf %584, %583 : vector<16x128xf32>
    %586 = math.tanh %585 : vector<16x128xf32>
    %cst_200 = arith.constant 5.000000e-01 : f32
    %587 = vector.broadcast %cst_200 : f32 to vector<16x128xf32>
    %588 = arith.mulf %587, %586 : vector<16x128xf32>
    %cst_201 = arith.constant 5.000000e-01 : f32
    %589 = vector.broadcast %cst_201 : f32 to vector<16x128xf32>
    %590 = arith.addf %588, %589 : vector<16x128xf32>
    %591 = arith.mulf %580, %520 : vector<16x128xf32>
    %592 = arith.mulf %572, %582 : vector<16x128xf32>
    %593 = arith.addf %591, %592 : vector<16x128xf32>
    %594 = math.tanh %593 : vector<16x128xf32>
    %595 = arith.mulf %590, %594 : vector<16x128xf32>
    %c0_i32_202 = arith.constant 0 : i32
    %596 = arith.cmpi eq, %arg1, %c0_i32_202 : i32
    %597 = arith.extui %596 : i1 to i32
    %c0_i32_203 = arith.constant 0 : i32
    %598 = arith.cmpi ne, %597, %c0_i32_203 : i32
    scf.if %598 {
      %c0_212 = arith.constant 0 : index
      %c0_213 = arith.constant 0 : index
      %603 = vector.load %arg8[%c0_212, %c0_213] : memref<128x128xf32, #tpu.memory_space<vmem>>, vector<128x128xf32>
      %cst_214 = arith.constant dense<0.000000e+00> : vector<16x128xf32>
      %604 = tpu.matmul %595, %603, %cst_214 {dimension_numbers = #tpu.dot_dimension_numbers<[1], [0], [0], [1], [0, 0, 1, 1], [], []>} : vector<16x128xf32>, vector<128x128xf32>, vector<16x128xf32> -> vector<16x128xf32>
      %c0_215 = arith.constant 0 : index
      %c0_216 = arith.constant 0 : index
      %605 = vector.load %arg9[%c0_215, %c0_216] : memref<1x128xf32, #tpu.memory_space<vmem>>, vector<1x128xf32>
      %606 = vector.broadcast %605 : vector<1x128xf32> to vector<16x128xf32>
      %607 = arith.addf %604, %606 : vector<16x128xf32>
      %c0_217 = arith.constant 0 : index
      %c0_218 = arith.constant 0 : index
      %608 = vector.load %arg10[%c0_217, %c0_218] : memref<16x128xf32, #tpu.memory_space<vmem>>, vector<16x128xf32>
      tpu.vector_store %arg10[%c0_217, %c0_218], %607 {strides = array<i32>} : memref<16x128xf32, #tpu.memory_space<vmem>>, vector<16x128xf32>,
    } else {
    }
    %c0_204 = arith.constant 0 : index
    %c0_205 = arith.constant 0 : index
    %599 = vector.load %arg11[%c0_204, %c0_205] : memref<16x128xf32, #tpu.memory_space<vmem>>, vector<16x128xf32>
    tpu.vector_store %arg11[%c0_204, %c0_205], %560 {strides = array<i32>} : memref<16x128xf32, #tpu.memory_space<vmem>>, vector<16x128xf32>,
    %c0_206 = arith.constant 0 : index
    %c0_207 = arith.constant 0 : index
    %600 = vector.load %arg12[%c0_206, %c0_207] : memref<16x128xf32, #tpu.memory_space<vmem>>, vector<16x128xf32>
    tpu.vector_store %arg12[%c0_206, %c0_207], %558 {strides = array<i32>} : memref<16x128xf32, #tpu.memory_space<vmem>>, vector<16x128xf32>,
    %c0_208 = arith.constant 0 : index
    %c0_209 = arith.constant 0 : index
    %601 = vector.load %arg13[%c0_208, %c0_209] : memref<16x128xf32, #tpu.memory_space<vmem>>, vector<16x128xf32>
    tpu.vector_store %arg13[%c0_208, %c0_209], %595 {strides = array<i32>} : memref<16x128xf32, #tpu.memory_space<vmem>>, vector<16x128xf32>,
    %c0_210 = arith.constant 0 : index
    %c0_211 = arith.constant 0 : index
    %602 = vector.load %arg14[%c0_210, %c0_211] : memref<16x128xf32, #tpu.memory_space<vmem>>, vector<16x128xf32>
    tpu.vector_store %arg14[%c0_210, %c0_211], %593 {strides = array<i32>} : memref<16x128xf32, #tpu.memory_space<vmem>>, vector<16x128xf32>,
    return
  }
  func.func @transform_0(%arg0: i32, %arg1: i32) -> (i32, i32, i32) {
    %c0_i32 = arith.constant 0 : i32
    %c0_i32_0 = arith.constant 0 : i32
    return %arg1, %arg0, %c0_i32 : i32, i32, i32
  }
  func.func @transform_1(%arg0: i32, %arg1: i32) -> (i32, i32) {
    %c0_i32 = arith.constant 0 : i32
    %c0_i32_0 = arith.constant 0 : i32
    %c0_i32_1 = arith.constant 0 : i32
    return %c0_i32, %c0_i32_0 : i32, i32
  }
  func.func @transform_2(%arg0: i32, %arg1: i32) -> (i32, i32) {
    %c0_i32 = arith.constant 0 : i32
    %c0_i32_0 = arith.constant 0 : i32
    %c0_i32_1 = arith.constant 0 : i32
    return %c0_i32, %c0_i32_0 : i32, i32
  }
  func.func @transform_3(%arg0: i32, %arg1: i32) -> (i32, i32) {
    %c0_i32 = arith.constant 0 : i32
    %c0_i32_0 = arith.constant 0 : i32
    %c0_i32_1 = arith.constant 0 : i32
    return %c0_i32, %c0_i32_0 : i32, i32
  }
  func.func @transform_4(%arg0: i32, %arg1: i32) -> (i32, i32) {
    %c0_i32 = arith.constant 0 : i32
    %c0_i32_0 = arith.constant 0 : i32
    %c0_i32_1 = arith.constant 0 : i32
    return %c0_i32, %c0_i32_0 : i32, i32
  }
  func.func @transform_5(%arg0: i32, %arg1: i32) -> (i32, i32) {
    %c0_i32 = arith.constant 0 : i32
    %c0_i32_0 = arith.constant 0 : i32
    %c0_i32_1 = arith.constant 0 : i32
    return %c0_i32, %c0_i32_0 : i32, i32
  }
  func.func @transform_6(%arg0: i32, %arg1: i32) -> (i32, i32) {
    %c0_i32 = arith.constant 0 : i32
    %c0_i32_0 = arith.constant 0 : i32
    %c0_i32_1 = arith.constant 0 : i32
    return %c0_i32, %c0_i32_0 : i32, i32
  }
  func.func @transform_7(%arg0: i32, %arg1: i32) -> (i32, i32) {
    %c0_i32 = arith.constant 0 : i32
    %c0_i32_0 = arith.constant 0 : i32
    %c0_i32_1 = arith.constant 0 : i32
    return %c0_i32, %c0_i32_0 : i32, i32
  }
  func.func @transform_8(%arg0: i32, %arg1: i32) -> (i32, i32) {
    %c0_i32 = arith.constant 0 : i32
    %c0_i32_0 = arith.constant 0 : i32
    return %arg0, %c0_i32 : i32, i32
  }
}

</mosaic_0001>

<llo_original>
// kernel: tpu_custom_call.1
$region0: #{tpu_custom_call.1}
  #allocation0 [shape = 'u32[]', space=smem, size = 0x4, offset = 0x4, fixed_abs, tag = 'smem constant byte address 0x4 - core index']
  #allocation1 [shape = 'u32[144,128]{1,0:T(1,128)}', space=vmem, size = 0x12000, scoped, tag = 'internal scratch']
  #allocation2 [shape = 'f32[16,128]{1,0:T(8,128)}', space=vmem, size = 0x2000, scoped, tag = 'scratch operand']
  #allocation3 [shape = 'f32[16,128]{1,0:T(8,128)}', space=vmem, size = 0x2000, scoped, tag = 'scratch operand']
  #allocation4 [shape = 'f32[16,128]{1,0:T(8,128)}', space=vmem, size = 0x2000, scoped, tag = 'scratch operand']
  #allocation5 [shape = 'f32[16,128]{1,0:T(8,128)}', space=vmem, size = 0x2000, scoped, tag = 'scratch operand']
  %s0 = inlined_call_operand.hbm [shape: f32[8,16,16], index: 0, kind: input, shape index: {}]
  %s1 = inlined_call_operand.hbm [shape: f32[16,512], index: 1, kind: input, shape index: {}]
  %s2 = inlined_call_operand.hbm [shape: f32[128,512], index: 2, kind: input, shape index: {}]
  %s3 = inlined_call_operand.hbm [shape: f32[256,512], index: 3, kind: input, shape index: {}]
  %s4 = inlined_call_operand.vmem [shape: f32[1,512], index: 4, kind: input, shape index: {}]
  %s5 = inlined_call_operand.vmem [shape: f32[1,512], index: 5, kind: input, shape index: {}]
  %s6 = inlined_call_operand.hbm [shape: f32[128,128], index: 6, kind: input, shape index: {}]
  %s7 = inlined_call_operand.vmem [shape: f32[1,128], index: 7, kind: input, shape index: {}]
  %s8 = inlined_call_operand.hbm [shape: f32[16,128], index: 8, kind: output, shape index: {}]
  %s9 = sld [smem:[#allocation0]]
  $region70: #{tpu_custom_call.1} parent=0
    _
  %s11 = ssub.s32 1, %s9
  %s12 = scalar_select 0, %s11, %s9
  $region1: #{tpu_custom_call.1} parent=0
    #allocation6 [shape = 'u8[65536]{0}', space=vmem, size = 0x10000, scoped, tag = 'input window, operand 0, single buffered']
    #allocation7 [shape = 's32[1]{0}', space=sflag, size = 0x4, scoped, tag = 'scoped memory for tpu_custom_call.1']
    #allocation8 [shape = 's32[1]{0}', space=sflag, size = 0x4, scoped, tag = 'scoped memory for tpu_custom_call.1']
    #allocation9 [shape = 'u8[32768]{0}', space=vmem, size = 0x8000, scoped, tag = 'input window, operand 1, single buffered']
    #allocation10 [shape = 's32[1]{0}', space=sflag, size = 0x4, scoped, tag = 'scoped memory for tpu_custom_call.1']
    #allocation11 [shape = 'u8[262144]{0}', space=vmem, size = 0x40000, scoped, tag = 'input window, operand 2, single buffered']
    #allocation12 [shape = 'u8[524288]{0}', space=vmem, size = 0x80000, scoped, tag = 'input window, operand 3, single buffered']
    #allocation13 [shape = 's32[1]{0}', space=sflag, size = 0x4, scoped, tag = 'scoped memory for tpu_custom_call.1']
    #allocation14 [shape = 'u8[65536]{0}', space=vmem, size = 0x10000, scoped, tag = 'input window, operand 6, single buffered']
    #allocation15 [shape = 'u8[8192]{0}', space=vmem, size = 0x2000, scoped, tag = 'output window, operand 0, single buffered']
    %13 = vsyncpa [#allocation7], 0
    %14 = vsyncpa [#allocation10], 0
    %15 = vsyncpa [#allocation13], 0
    %16 = vsyncpa [#allocation8], 0
    // Predicated region
    $region2: #{tpu_custom_call.1} parent=1 // pred_check
      _
    $region3: #{tpu_custom_call.1} parent=1 // pred_check_branch
      %18 = sbr.rel (0) target = $region5
    $region4: #{tpu_custom_call.1} parent=1 // pred_region
      %s20 = ssub.s32 2048, 2048
      %21 = vsyncadd [#allocation7], %s20
      %s22 = sshll.u32 [#allocation6], 4
      %s23 = int_to_ptr.vmem [resolvable:$true] %s22
      %28 = dma.hbm_to_vmem [thread:$0]  %s0, 2048, %s23, [#allocation7], 128, 128, 8
    $region5: #{tpu_custom_call.1} parent=1 // pred_fallthru
      _
    // Predicated region
    $region6: #{tpu_custom_call.1} parent=1 // pred_check
      _
    $region7: #{tpu_custom_call.1} parent=1 // pred_check_branch
      %30 = sbr.rel (0) target = $region9
    $region8: #{tpu_custom_call.1} parent=1 // pred_region
      %s32 = ssub.s32 1024, 1024
      %33 = vsyncadd [#allocation10], %s32
      %s34 = sshll.u32 [#allocation9], 4
      %s35 = int_to_ptr.vmem [resolvable:$true] %s34
      %40 = dma.hbm_to_vmem [thread:$0]  %s1, 1024, %s35, [#allocation10], 512, 512, 32
    $region9: #{tpu_custom_call.1} parent=1 // pred_fallthru
      _
    // Predicated region
    $region10: #{tpu_custom_call.1} parent=1 // pred_check
      _
    $region11: #{tpu_custom_call.1} parent=1 // pred_check_branch
      %42 = sbr.rel (0) target = $region13
    $region12: #{tpu_custom_call.1} parent=1 // pred_region
      %s44 = ssub.s32 8192, 8192
      %45 = vsyncadd [#allocation10], %s44
      %s46 = sshll.u32 [#allocation11], 4
      %s47 = int_to_ptr.vmem [resolvable:$true] %s46
      %52 = dma.hbm_to_vmem [thread:$0]  %s2, 8192, %s47, [#allocation10], 512, 512, 32
    $region13: #{tpu_custom_call.1} parent=1 // pred_fallthru
      _
    // Predicated region
    $region14: #{tpu_custom_call.1} parent=1 // pred_check
      _
    $region15: #{tpu_custom_call.1} parent=1 // pred_check_branch
      %54 = sbr.rel (0) target = $region17
    $region16: #{tpu_custom_call.1} parent=1 // pred_region
      %s56 = ssub.s32 16384, 16384
      %57 = vsyncadd [#allocation13], %s56
      %s58 = sshll.u32 [#allocation12], 4
      %s59 = int_to_ptr.vmem [resolvable:$true] %s58
      %64 = dma.hbm_to_vmem [thread:$0]  %s3, 16384, %s59, [#allocation13], 512, 512, 32
    $region17: #{tpu_custom_call.1} parent=1 // pred_fallthru
      _
    // Predicated region
    $region18: #{tpu_custom_call.1} parent=1 // pred_check
      _
    $region19: #{tpu_custom_call.1} parent=1 // pred_check_branch
      %66 = sbr.rel (0) target = $region21
    $region20: #{tpu_custom_call.1} parent=1 // pred_region
      _
    $region21: #{tpu_custom_call.1} parent=1 // pred_fallthru
      _
    // Predicated region
    $region22: #{tpu_custom_call.1} parent=1 // pred_check
      _
    $region23: #{tpu_custom_call.1} parent=1 // pred_check_branch
      %68 = sbr.rel (0) target = $region25
    $region24: #{tpu_custom_call.1} parent=1 // pred_region
      _
    $region25: #{tpu_custom_call.1} parent=1 // pred_fallthru
      _
    // Predicated region
    $region26: #{tpu_custom_call.1} parent=1 // pred_check
      _
    $region27: #{tpu_custom_call.1} parent=1 // pred_check_branch
      %70 = sbr.rel (0) target = $region29
    $region28: #{tpu_custom_call.1} parent=1 // pred_region
      %s72 = ssub.s32 2048, 2048
      %73 = vsyncadd [#allocation13], %s72
      %s74 = sshll.u32 [#allocation14], 4
      %s75 = int_to_ptr.vmem [resolvable:$true] %s74
      %80 = dma.hbm_to_vmem [thread:$0]  %s6, 2048, %s75, [#allocation13], 128, 128, 8
    $region29: #{tpu_custom_call.1} parent=1 // pred_fallthru
      _
    // Predicated region
    $region30: #{tpu_custom_call.1} parent=1 // pred_check
      _
    $region31: #{tpu_custom_call.1} parent=1 // pred_check_branch
      %82 = sbr.rel (0) target = $region33
    $region32: #{tpu_custom_call.1} parent=1 // pred_region
      _
    $region33: #{tpu_custom_call.1} parent=1 // pred_fallthru
      _
    // Predicated region
    $region34: #{tpu_custom_call.1} parent=1 // pred_check
      _
    $region35: #{tpu_custom_call.1} parent=1 // pred_check_branch
      %84 = sbr.rel (0) target = $region37
    $region36: #{tpu_custom_call.1} parent=1 // pred_region
      %85 = dma.done [#allocation7], 2048
    $region37: #{tpu_custom_call.1} parent=1 // pred_fallthru
      _
    // Predicated region
    $region38: #{tpu_custom_call.1} parent=1 // pred_check
      _
    $region39: #{tpu_custom_call.1} parent=1 // pred_check_branch
      %87 = sbr.rel (0) target = $region41
    $region40: #{tpu_custom_call.1} parent=1 // pred_region
      %88 = dma.done [#allocation10], 1024
    $region41: #{tpu_custom_call.1} parent=1 // pred_fallthru
      _
    // Predicated region
    $region42: #{tpu_custom_call.1} parent=1 // pred_check
      _
    $region43: #{tpu_custom_call.1} parent=1 // pred_check_branch
      %90 = sbr.rel (0) target = $region45
    $region44: #{tpu_custom_call.1} parent=1 // pred_region
      %91 = dma.done [#allocation10], 8192
    $region45: #{tpu_custom_call.1} parent=1 // pred_fallthru
      _
    // Predicated region
    $region46: #{tpu_custom_call.1} parent=1 // pred_check
      _
    $region47: #{tpu_custom_call.1} parent=1 // pred_check_branch
      %93 = sbr.rel (0) target = $region49
    $region48: #{tpu_custom_call.1} parent=1 // pred_region
      %94 = dma.done [#allocation13], 16384
    $region49: #{tpu_custom_call.1} parent=1 // pred_fallthru
      _
    // Predicated region
    $region50: #{tpu_custom_call.1} parent=1 // pred_check
      _
    $region51: #{tpu_custom_call.1} parent=1 // pred_check_branch
      %96 = sbr.rel (0) target = $region53
    $region52: #{tpu_custom_call.1} parent=1 // pred_region
      %97 = dma.done [#allocation13], 2048
    $region53: #{tpu_custom_call.1} parent=1 // pred_fallthru
      _
    %p98 = scmp.eq.s32.totalorder 0, 0
    // Predicated region
    $region54: #{tpu_custom_call.1} parent=1 // pred_check
      %p99 = pneg %p98
    $region55: #{tpu_custom_call.1} parent=1 // pred_check_branch
      %101 = sbr.rel (%p99) target = $region57
    $region56: #{tpu_custom_call.1} parent=1 // pred_region
      %102 = vst [vmem:[#allocation2] sm:$0xff] 0.0
      %103 = vst [vmem:[#allocation2 + $0x8] sm:$0xff] 0.0
      %104 = vst [vmem:[#allocation3] sm:$0xff] 0.0
      %105 = vst [vmem:[#allocation3 + $0x8] sm:$0xff] 0.0
      %106 = vst [vmem:[#allocation4] sm:$0xff] 0.0
      %107 = vst [vmem:[#allocation4 + $0x8] sm:$0xff] 0.0
      %108 = vst [vmem:[#allocation5] sm:$0xff] 0.0
      %109 = vst [vmem:[#allocation5 + $0x8] sm:$0xff] 0.0
    $region57: #{tpu_custom_call.1} parent=1 // pred_fallthru
      _
    %v110 = vld [vmem:[#allocation9] sm:$0xff]
    %v111 = vld [vmem:[#allocation9 + $0x8] sm:$0xff]
    %v112 = vld [vmem:[#allocation9 + $0x10] sm:$0xff]
    %v113 = vld [vmem:[#allocation9 + $0x18] sm:$0xff]
    %v114 = vld [vmem:[#allocation9 + $0x20] sm:$0xff]
    %v115 = vld [vmem:[#allocation9 + $0x28] sm:$0xff]
    %v116 = vld [vmem:[#allocation9 + $0x30] sm:$0xff]
    %v117 = vld [vmem:[#allocation9 + $0x38] sm:$0xff]
    %v118 = vld [vmem:[#allocation11] sm:$0xff]
    %v119 = vld [vmem:[#allocation11 + $0x8] sm:$0xff]
    %v120 = vld [vmem:[#allocation11 + $0x10] sm:$0xff]
    %v121 = vld [vmem:[#allocation11 + $0x18] sm:$0xff]
    %v122 = vld [vmem:[#allocation11 + $0x20] sm:$0xff]
    %v123 = vld [vmem:[#allocation11 + $0x28] sm:$0xff]
    %v124 = vld [vmem:[#allocation11 + $0x30] sm:$0xff]
    %v125 = vld [vmem:[#allocation11 + $0x38] sm:$0xff]
    %v126 = vld [vmem:[#allocation11 + $0x40] sm:$0xff]
    %v127 = vld [vmem:[#allocation11 + $0x48] sm:$0xff]
    %v128 = vld [vmem:[#allocation11 + $0x50] sm:$0xff]
    %v129 = vld [vmem:[#allocation11 + $0x58] sm:$0xff]
    %v130 = vld [vmem:[#allocation11 + $0x60] sm:$0xff]
    %v131 = vld [vmem:[#allocation11 + $0x68] sm:$0xff]
    %v132 = vld [vmem:[#allocation11 + $0x70] sm:$0xff]
    %v133 = vld [vmem:[#allocation11 + $0x78] sm:$0xff]
    %v134 = vld [vmem:[#allocation11 + $0x80] sm:$0xff]
    %v135 = vld [vmem:[#allocation11 + $0x88] sm:$0xff]
    %v136 = vld [vmem:[#allocation11 + $0x90] sm:$0xff]
    %v137 = vld [vmem:[#allocation11 + $0x98] sm:$0xff]
    %v138 = vld [vmem:[#allocation11 + $0xa0] sm:$0xff]
    %v139 = vld [vmem:[#allocation11 + $0xa8] sm:$0xff]
    %v140 = vld [vmem:[#allocation11 + $0xb0] sm:$0xff]
    %v141 = vld [vmem:[#allocation11 + $0xb8] sm:$0xff]
    %v142 = vld [vmem:[#allocation11 + $0xc0] sm:$0xff]
    %v143 = vld [vmem:[#allocation11 + $0xc8] sm:$0xff]
    %v144 = vld [vmem:[#allocation11 + $0xd0] sm:$0xff]
    %v145 = vld [vmem:[#allocation11 + $0xd8] sm:$0xff]
    %v146 = vld [vmem:[#allocation11 + $0xe0] sm:$0xff]
    %v147 = vld [vmem:[#allocation11 + $0xe8] sm:$0xff]
    %v148 = vld [vmem:[#allocation11 + $0xf0] sm:$0xff]
    %v149 = vld [vmem:[#allocation11 + $0xf8] sm:$0xff]
    %v150 = vld [vmem:[#allocation11 + $0x100] sm:$0xff]
    %v151 = vld [vmem:[#allocation11 + $0x108] sm:$0xff]
    %v152 = vld [vmem:[#allocation11 + $0x110] sm:$0xff]
    %v153 = vld [vmem:[#allocation11 + $0x118] sm:$0xff]
    %v154 = vld [vmem:[#allocation11 + $0x120] sm:$0xff]
    %v155 = vld [vmem:[#allocation11 + $0x128] sm:$0xff]
    %v156 = vld [vmem:[#allocation11 + $0x130] sm:$0xff]
    %v157 = vld [vmem:[#allocation11 + $0x138] sm:$0xff]
    %v158 = vld [vmem:[#allocation11 + $0x140] sm:$0xff]
    %v159 = vld [vmem:[#allocation11 + $0x148] sm:$0xff]
    %v160 = vld [vmem:[#allocation11 + $0x150] sm:$0xff]
    %v161 = vld [vmem:[#allocation11 + $0x158] sm:$0xff]
    %v162 = vld [vmem:[#allocation11 + $0x160] sm:$0xff]
    %v163 = vld [vmem:[#allocation11 + $0x168] sm:$0xff]
    %v164 = vld [vmem:[#allocation11 + $0x170] sm:$0xff]
    %v165 = vld [vmem:[#allocation11 + $0x178] sm:$0xff]
    %v166 = vld [vmem:[#allocation11 + $0x180] sm:$0xff]
    %v167 = vld [vmem:[#allocation11 + $0x188] sm:$0xff]
    %v168 = vld [vmem:[#allocation11 + $0x190] sm:$0xff]
    %v169 = vld [vmem:[#allocation11 + $0x198] sm:$0xff]
    %v170 = vld [vmem:[#allocation11 + $0x1a0] sm:$0xff]
    %v171 = vld [vmem:[#allocation11 + $0x1a8] sm:$0xff]
    %v172 = vld [vmem:[#allocation11 + $0x1b0] sm:$0xff]
    %v173 = vld [vmem:[#allocation11 + $0x1b8] sm:$0xff]
    %v174 = vld [vmem:[#allocation11 + $0x1c0] sm:$0xff]
    %v175 = vld [vmem:[#allocation11 + $0x1c8] sm:$0xff]
    %v176 = vld [vmem:[#allocation11 + $0x1d0] sm:$0xff]
    %v177 = vld [vmem:[#allocation11 + $0x1d8] sm:$0xff]
    %v178 = vld [vmem:[#allocation11 + $0x1e0] sm:$0xff]
    %v179 = vld [vmem:[#allocation11 + $0x1e8] sm:$0xff]
    %v180 = vld [vmem:[#allocation11 + $0x1f0] sm:$0xff]
    %v181 = vld [vmem:[#allocation11 + $0x1f8] sm:$0xff]
    %v182 = vld [vmem:[#allocation12] sm:$0xff]
    %v183 = vld [vmem:[#allocation12 + $0x8] sm:$0xff]
    %v184 = vld [vmem:[#allocation12 + $0x10] sm:$0xff]
    %v185 = vld [vmem:[#allocation12 + $0x18] sm:$0xff]
    %v186 = vld [vmem:[#allocation12 + $0x20] sm:$0xff]
    %v187 = vld [vmem:[#allocation12 + $0x28] sm:$0xff]
    %v188 = vld [vmem:[#allocation12 + $0x30] sm:$0xff]
    %v189 = vld [vmem:[#allocation12 + $0x38] sm:$0xff]
    %v190 = vld [vmem:[#allocation12 + $0x40] sm:$0xff]
    %v191 = vld [vmem:[#allocation12 + $0x48] sm:$0xff]
    %v192 = vld [vmem:[#allocation12 + $0x50] sm:$0xff]
    %v193 = vld [vmem:[#allocation12 + $0x58] sm:$0xff]
    %v194 = vld [vmem:[#allocation12 + $0x60] sm:$0xff]
    %v195 = vld [vmem:[#allocation12 + $0x68] sm:$0xff]
    %v196 = vld [vmem:[#allocation12 + $0x70] sm:$0xff]
    %v197 = vld [vmem:[#allocation12 + $0x78] sm:$0xff]
    %v198 = vld [vmem:[#allocation12 + $0x80] sm:$0xff]
    %v199 = vld [vmem:[#allocation12 + $0x88] sm:$0xff]
    %v200 = vld [vmem:[#allocation12 + $0x90] sm:$0xff]
    %v201 = vld [vmem:[#allocation12 + $0x98] sm:$0xff]
    %v202 = vld [vmem:[#allocation12 + $0xa0] sm:$0xff]
    %v203 = vld [vmem:[#allocation12 + $0xa8] sm:$0xff]
    %v204 = vld [vmem:[#allocation12 + $0xb0] sm:$0xff]
    %v205 = vld [vmem:[#allocation12 + $0xb8] sm:$0xff]
    %v206 = vld [vmem:[#allocation12 + $0xc0] sm:$0xff]
    %v207 = vld [vmem:[#allocation12 + $0xc8] sm:$0xff]
    %v208 = vld [vmem:[#allocation12 + $0xd0] sm:$0xff]
    %v209 = vld [vmem:[#allocation12 + $0xd8] sm:$0xff]
    %v210 = vld [vmem:[#allocation12 + $0xe0] sm:$0xff]
    %v211 = vld [vmem:[#allocation12 + $0xe8] sm:$0xff]
    %v212 = vld [vmem:[#allocation12 + $0xf0] sm:$0xff]
    %v213 = vld [vmem:[#allocation12 + $0xf8] sm:$0xff]
    %v214 = vld [vmem:[#allocation12 + $0x100] sm:$0xff]
    %v215 = vld [vmem:[#allocation12 + $0x108] sm:$0xff]
    %v216 = vld [vmem:[#allocation12 + $0x110] sm:$0xff]
    %v217 = vld [vmem:[#allocation12 + $0x118] sm:$0xff]
    %v218 = vld [vmem:[#allocation12 + $0x120] sm:$0xff]
    %v219 = vld [vmem:[#allocation12 + $0x128] sm:$0xff]
    %v220 = vld [vmem:[#allocation12 + $0x130] sm:$0xff]
    %v221 = vld [vmem:[#allocation12 + $0x138] sm:$0xff]
    %v222 = vld [vmem:[#allocation12 + $0x140] sm:$0xff]
    %v223 = vld [vmem:[#allocation12 + $0x148] sm:$0xff]
    %v224 = vld [vmem:[#allocation12 + $0x150] sm:$0xff]
    %v225 = vld [vmem:[#allocation12 + $0x158] sm:$0xff]
    %v226 = vld [vmem:[#allocation12 + $0x160] sm:$0xff]
    %v227 = vld [vmem:[#allocation12 + $0x168] sm:$0xff]
    %v228 = vld [vmem:[#allocation12 + $0x170] sm:$0xff]
    %v229 = vld [vmem:[#allocation12 + $0x178] sm:$0xff]
    %v230 = vld [vmem:[#allocation12 + $0x180] sm:$0xff]
    %v231 = vld [vmem:[#allocation12 + $0x188] sm:$0xff]
    %v232 = vld [vmem:[#allocation12 + $0x190] sm:$0xff]
    %v233 = vld [vmem:[#allocation12 + $0x198] sm:$0xff]
    %v234 = vld [vmem:[#allocation12 + $0x1a0] sm:$0xff]
    %v235 = vld [vmem:[#allocation12 + $0x1a8] sm:$0xff]
    %v236 = vld [vmem:[#allocation12 + $0x1b0] sm:$0xff]
    %v237 = vld [vmem:[#allocation12 + $0x1b8] sm:$0xff]
    %v238 = vld [vmem:[#allocation12 + $0x1c0] sm:$0xff]
    %v239 = vld [vmem:[#allocation12 + $0x1c8] sm:$0xff]
    %v240 = vld [vmem:[#allocation12 + $0x1d0] sm:$0xff]
    %v241 = vld [vmem:[#allocation12 + $0x1d8] sm:$0xff]
    %v242 = vld [vmem:[#allocation12 + $0x1e0] sm:$0xff]
    %v243 = vld [vmem:[#allocation12 + $0x1e8] sm:$0xff]
    %v244 = vld [vmem:[#allocation12 + $0x1f0] sm:$0xff]
    %v245 = vld [vmem:[#allocation12 + $0x1f8] sm:$0xff]
    %v246 = vld [vmem:[#allocation12 + $0x200] sm:$0xff]
    %v247 = vld [vmem:[#allocation12 + $0x208] sm:$0xff]
    %v248 = vld [vmem:[#allocation12 + $0x210] sm:$0xff]
    %v249 = vld [vmem:[#allocation12 + $0x218] sm:$0xff]
    %v250 = vld [vmem:[#allocation12 + $0x220] sm:$0xff]
    %v251 = vld [vmem:[#allocation12 + $0x228] sm:$0xff]
    %v252 = vld [vmem:[#allocation12 + $0x230] sm:$0xff]
    %v253 = vld [vmem:[#allocation12 + $0x238] sm:$0xff]
    %v254 = vld [vmem:[#allocation12 + $0x240] sm:$0xff]
    %v255 = vld [vmem:[#allocation12 + $0x248] sm:$0xff]
    %v256 = vld [vmem:[#allocation12 + $0x250] sm:$0xff]
    %v257 = vld [vmem:[#allocation12 + $0x258] sm:$0xff]
    %v258 = vld [vmem:[#allocation12 + $0x260] sm:$0xff]
    %v259 = vld [vmem:[#allocation12 + $0x268] sm:$0xff]
    %v260 = vld [vmem:[#allocation12 + $0x270] sm:$0xff]
    %v261 = vld [vmem:[#allocation12 + $0x278] sm:$0xff]
    %v262 = vld [vmem:[#allocation12 + $0x280] sm:$0xff]
    %v263 = vld [vmem:[#allocation12 + $0x288] sm:$0xff]
    %v264 = vld [vmem:[#allocation12 + $0x290] sm:$0xff]
    %v265 = vld [vmem:[#allocation12 + $0x298] sm:$0xff]
    %v266 = vld [vmem:[#allocation12 + $0x2a0] sm:$0xff]
    %v267 = vld [vmem:[#allocation12 + $0x2a8] sm:$0xff]
    %v268 = vld [vmem:[#allocation12 + $0x2b0] sm:$0xff]
    %v269 = vld [vmem:[#allocation12 + $0x2b8] sm:$0xff]
    %v270 = vld [vmem:[#allocation12 + $0x2c0] sm:$0xff]
    %v271 = vld [vmem:[#allocation12 + $0x2c8] sm:$0xff]
    %v272 = vld [vmem:[#allocation12 + $0x2d0] sm:$0xff]
    %v273 = vld [vmem:[#allocation12 + $0x2d8] sm:$0xff]
    %v274 = vld [vmem:[#allocation12 + $0x2e0] sm:$0xff]
    %v275 = vld [vmem:[#allocation12 + $0x2e8] sm:$0xff]
    %v276 = vld [vmem:[#allocation12 + $0x2f0] sm:$0xff]
    %v277 = vld [vmem:[#allocation12 + $0x2f8] sm:$0xff]
    %v278 = vld [vmem:[#allocation12 + $0x300] sm:$0xff]
    %v279 = vld [vmem:[#allocation12 + $0x308] sm:$0xff]
    %v280 = vld [vmem:[#allocation12 + $0x310] sm:$0xff]
    %v281 = vld [vmem:[#allocation12 + $0x318] sm:$0xff]
    %v282 = vld [vmem:[#allocation12 + $0x320] sm:$0xff]
    %v283 = vld [vmem:[#allocation12 + $0x328] sm:$0xff]
    %v284 = vld [vmem:[#allocation12 + $0x330] sm:$0xff]
    %v285 = vld [vmem:[#allocation12 + $0x338] sm:$0xff]
    %v286 = vld [vmem:[#allocation12 + $0x340] sm:$0xff]
    %v287 = vld [vmem:[#allocation12 + $0x348] sm:$0xff]
    %v288 = vld [vmem:[#allocation12 + $0x350] sm:$0xff]
    %v289 = vld [vmem:[#allocation12 + $0x358] sm:$0xff]
    %v290 = vld [vmem:[#allocation12 + $0x360] sm:$0xff]
    %v291 = vld [vmem:[#allocation12 + $0x368] sm:$0xff]
    %v292 = vld [vmem:[#allocation12 + $0x370] sm:$0xff]
    %v293 = vld [vmem:[#allocation12 + $0x378] sm:$0xff]
    %v294 = vld [vmem:[#allocation12 + $0x380] sm:$0xff]
    %v295 = vld [vmem:[#allocation12 + $0x388] sm:$0xff]
    %v296 = vld [vmem:[#allocation12 + $0x390] sm:$0xff]
    %v297 = vld [vmem:[#allocation12 + $0x398] sm:$0xff]
    %v298 = vld [vmem:[#allocation12 + $0x3a0] sm:$0xff]
    %v299 = vld [vmem:[#allocation12 + $0x3a8] sm:$0xff]
    %v300 = vld [vmem:[#allocation12 + $0x3b0] sm:$0xff]
    %v301 = vld [vmem:[#allocation12 + $0x3b8] sm:$0xff]
    %v302 = vld [vmem:[#allocation12 + $0x3c0] sm:$0xff]
    %v303 = vld [vmem:[#allocation12 + $0x3c8] sm:$0xff]
    %v304 = vld [vmem:[#allocation12 + $0x3d0] sm:$0xff]
    %v305 = vld [vmem:[#allocation12 + $0x3d8] sm:$0xff]
    %v306 = vld [vmem:[#allocation12 + $0x3e0] sm:$0xff]
    %v307 = vld [vmem:[#allocation12 + $0x3e8] sm:$0xff]
    %v308 = vld [vmem:[#allocation12 + $0x3f0] sm:$0xff]
    %v309 = vld [vmem:[#allocation12 + $0x3f8] sm:$0xff]
    %v310 = vld [vmem:[%s4] sm:$0xf]
    %v311 = vld [vmem:[%s5] sm:$0xf]
    %v312 = vld [vmem:[#allocation2] sm:$0xff]
    %v313 = vld [vmem:[#allocation2 + $0x8] sm:$0xff]
    %v314 = vld [vmem:[#allocation3] sm:$0xff]
    %v315 = vld [vmem:[#allocation3 + $0x8] sm:$0xff]
    %v316 = vld [vmem:[#allocation4] sm:$0xff]
    %v317 = vld [vmem:[#allocation4 + $0x8] sm:$0xff]
    %v318 = vld [vmem:[#allocation5] sm:$0xff]
    %v319 = vld [vmem:[#allocation5 + $0x8] sm:$0xff]
    %v320 = vld [vmem:[#allocation6] sm:$0xff]
    %v321 = vld [vmem:[#allocation6 + $0x8] sm:$0xff]
    %322 = vmatprep.subr.mxu0 %v179
    %323 = vmatpush1.msra.mxu0 %v178
    %324 = vmatprep.subr.mxu0 %v175
    %325 = vmatpush1.msra.mxu0 %v174
    %326 = vmatprep.subr.mxu0 %v171
    %327 = vmatpush1.msra.mxu0 %v170
    %328 = vmatprep.subr.mxu0 %v167
    %329 = vmatpush1.msra.mxu0 %v166
    %330 = vmatprep.subr.mxu0 %v163
    %331 = vmatpush1.msra.mxu0 %v162
    %332 = vmatprep.subr.mxu0 %v159
    %333 = vmatpush1.msra.mxu0 %v158
    %334 = vmatprep.subr.mxu0 %v155
    %335 = vmatpush1.msra.mxu0 %v154
    %336 = vmatprep.subr.mxu0 %v151
    %337 = vmatpush1.msra.mxu0 %v150
    %338 = vmatprep.subr.mxu0 %v147
    %339 = vmatpush1.msra.mxu0 %v146
    %340 = vmatprep.subr.mxu0 %v143
    %341 = vmatpush1.msra.mxu0 %v142
    %342 = vmatprep.subr.mxu0 %v139
    %343 = vmatpush1.msra.mxu0 %v138
    %344 = vmatprep.subr.mxu0 %v135
    %345 = vmatpush1.msra.mxu0 %v134
    %346 = vmatprep.subr.mxu0 %v131
    %347 = vmatpush1.msra.mxu0 %v130
    %348 = vmatprep.subr.mxu0 %v127
    %349 = vmatpush1.msra.mxu0 %v126
    %350 = vmatprep.subr.mxu0 %v123
    %351 = vmatpush1.msra.mxu0 %v122
    %352 = vmatprep.subr.mxu0 %v119
    %353 = vmatpush1.msra.mxu0 %v118
    %354 = vmatprep.subr.mxu0 0.0
    %355 = vmatpush2.msra.mxu0 0.0
    %356 = vmatprep.subr.mxu0 0.0
    %357 = vmatpush2.msra.mxu0 0.0
    %358 = vmatprep.subr.mxu0 0.0
    %359 = vmatpush2.msra.mxu0 0.0
    %360 = vmatprep.subr.mxu0 0.0
    %361 = vmatpush2.msra.mxu0 0.0
    %362 = vmatprep.subr.mxu0 0.0
    %363 = vmatpush2.msra.mxu0 0.0
    %364 = vmatprep.subr.mxu0 0.0
    %365 = vmatpush2.msra.mxu0 0.0
    %366 = vmatprep.subr.mxu0 0.0
    %367 = vmatpush2.msra.mxu0 0.0
    %368 = vmatprep.subr.mxu0 0.0
    %369 = vmatpush2.msra.mxu0 0.0
    %370 = vmatprep.subr.mxu0 0.0
    %371 = vmatpush2.msra.mxu0 0.0
    %372 = vmatprep.subr.mxu0 0.0
    %373 = vmatpush2.msra.mxu0 0.0
    %374 = vmatprep.subr.mxu0 0.0
    %375 = vmatpush2.msra.mxu0 0.0
    %376 = vmatprep.subr.mxu0 0.0
    %377 = vmatpush2.msra.mxu0 0.0
    %378 = vmatprep.subr.mxu0 0.0
    %379 = vmatpush2.msra.mxu0 0.0
    %380 = vmatprep.subr.mxu0 0.0
    %381 = vmatpush2.msra.mxu0 0.0
    %382 = vmatprep.subr.mxu0 0.0
    %383 = vmatpush2.msra.mxu0 0.0
    %384 = vmatprep.subr.mxu0 0.0
    %385 = vmatpush2.msra.mxu0 0.0
    %386 = vmatprep.mubr.f32.mxu0 0.0
    %387 = vmatmul.mubr.f32.gmra.mxu0 %v312
    %v388 = vpop.f32.mrf.mxu0
    %v389 = vadd.f32 0.0, %v388
    %v390 = vpop.f32.mrf.mxu0
    %v391 = vadd.f32 0.0, %v390
    %392 = vmatprep.mubr.f32.mxu0 0.0
    %393 = vmatmul.mubr.f32.gmra.mxu0 %v313
    %v394 = vpop.f32.mrf.mxu0
    %v395 = vadd.f32 0.0, %v394
    %v396 = vpop.f32.mrf.mxu0
    %v397 = vadd.f32 0.0, %v396
    %398 = vdwg.mxu0
    %399 = vmatprep.subr.mxu0 %v181
    %400 = vmatpush1.msra.mxu0 %v180
    %401 = vmatprep.subr.mxu0 %v177
    %402 = vmatpush1.msra.mxu0 %v176
    %403 = vmatprep.subr.mxu0 %v173
    %404 = vmatpush1.msra.mxu0 %v172
    %405 = vmatprep.subr.mxu0 %v169
    %406 = vmatpush1.msra.mxu0 %v168
    %407 = vmatprep.subr.mxu0 %v165
    %408 = vmatpush1.msra.mxu0 %v164
    %409 = vmatprep.subr.mxu0 %v161
    %410 = vmatpush1.msra.mxu0 %v160
    %411 = vmatprep.subr.mxu0 %v157
    %412 = vmatpush1.msra.mxu0 %v156
    %413 = vmatprep.subr.mxu0 %v153
    %414 = vmatpush1.msra.mxu0 %v152
    %415 = vmatprep.subr.mxu0 %v149
    %416 = vmatpush1.msra.mxu0 %v148
    %417 = vmatprep.subr.mxu0 %v145
    %418 = vmatpush1.msra.mxu0 %v144
    %419 = vmatprep.subr.mxu0 %v141
    %420 = vmatpush1.msra.mxu0 %v140
    %421 = vmatprep.subr.mxu0 %v137
    %422 = vmatpush1.msra.mxu0 %v136
    %423 = vmatprep.subr.mxu0 %v133
    %424 = vmatpush1.msra.mxu0 %v132
    %425 = vmatprep.subr.mxu0 %v129
    %426 = vmatpush1.msra.mxu0 %v128
    %427 = vmatprep.subr.mxu0 %v125
    %428 = vmatpush1.msra.mxu0 %v124
    %429 = vmatprep.subr.mxu0 %v121
    %430 = vmatpush1.msra.mxu0 %v120
    %431 = vmatprep.subr.mxu0 0.0
    %432 = vmatpush2.msra.mxu0 0.0
    %433 = vmatprep.subr.mxu0 0.0
    %434 = vmatpush2.msra.mxu0 0.0
    %435 = vmatprep.subr.mxu0 0.0
    %436 = vmatpush2.msra.mxu0 0.0
    %437 = vmatprep.subr.mxu0 0.0
    %438 = vmatpush2.msra.mxu0 0.0
    %439 = vmatprep.subr.mxu0 0.0
    %440 = vmatpush2.msra.mxu0 0.0
    %441 = vmatprep.subr.mxu0 0.0
    %442 = vmatpush2.msra.mxu0 0.0
    %443 = vmatprep.subr.mxu0 0.0
    %444 = vmatpush2.msra.mxu0 0.0
    %445 = vmatprep.subr.mxu0 0.0
    %446 = vmatpush2.msra.mxu0 0.0
    %447 = vmatprep.subr.mxu0 0.0
    %448 = vmatpush2.msra.mxu0 0.0
    %449 = vmatprep.subr.mxu0 0.0
    %450 = vmatpush2.msra.mxu0 0.0
    %451 = vmatprep.subr.mxu0 0.0
    %452 = vmatpush2.msra.mxu0 0.0
    %453 = vmatprep.subr.mxu0 0.0
    %454 = vmatpush2.msra.mxu0 0.0
    %455 = vmatprep.subr.mxu0 0.0
    %456 = vmatpush2.msra.mxu0 0.0
    %457 = vmatprep.subr.mxu0 0.0
    %458 = vmatpush2.msra.mxu0 0.0
    %459 = vmatprep.subr.mxu0 0.0
    %460 = vmatpush2.msra.mxu0 0.0
    %461 = vmatprep.subr.mxu0 0.0
    %462 = vmatpush2.msra.mxu0 0.0
    %463 = vmatprep.mubr.f32.mxu0 0.0
    %464 = vmatmul.mubr.f32.gmra.mxu0 %v312
    %v465 = vpop.f32.mrf.mxu0
    %v466 = vadd.f32 0.0, %v465
    %v467 = vpop.f32.mrf.mxu0
    %v468 = vadd.f32 0.0, %v467
    %469 = vmatprep.mubr.f32.mxu0 0.0
    %470 = vmatmul.mubr.f32.gmra.mxu0 %v313
    %v471 = vpop.f32.mrf.mxu0
    %v472 = vadd.f32 0.0, %v471
    %v473 = vpop.f32.mrf.mxu0
    %v474 = vadd.f32 0.0, %v473
    %475 = vdwg.mxu0
    %vm476 = vcmask 130048
    %v478 = vsel %vm476, %v320, 0
    %v481 = vsel %vm476, %v321, 0
    %483 = vmatprep.subr.mxu0 0.0
    %484 = vmatpush1.msra.mxu0 0.0
    %485 = vmatprep.subr.mxu0 0.0
    %486 = vmatpush1.msra.mxu0 0.0
    %487 = vmatprep.subr.mxu0 0.0
    %488 = vmatpush1.msra.mxu0 0.0
    %489 = vmatprep.subr.mxu0 0.0
    %490 = vmatpush1.msra.mxu0 0.0
    %491 = vmatprep.subr.mxu0 0.0
    %492 = vmatpush1.msra.mxu0 0.0
    %493 = vmatprep.subr.mxu0 0.0
    %494 = vmatpush1.msra.mxu0 0.0
    %495 = vmatprep.subr.mxu0 0.0
    %496 = vmatpush1.msra.mxu0 0.0
    %497 = vmatprep.subr.mxu0 0.0
    %498 = vmatpush1.msra.mxu0 0.0
    %499 = vmatprep.subr.mxu0 0.0
    %500 = vmatpush1.msra.mxu0 0.0
    %501 = vmatprep.subr.mxu0 0.0
    %502 = vmatpush1.msra.mxu0 0.0
    %503 = vmatprep.subr.mxu0 0.0
    %504 = vmatpush1.msra.mxu0 0.0
    %505 = vmatprep.subr.mxu0 0.0
    %506 = vmatpush1.msra.mxu0 0.0
    %507 = vmatprep.subr.mxu0 0.0
    %508 = vmatpush1.msra.mxu0 0.0
    %509 = vmatprep.subr.mxu0 0.0
    %510 = vmatpush1.msra.mxu0 0.0
    %511 = vmatprep.subr.mxu0 %v115
    %512 = vmatpush1.msra.mxu0 %v114
    %513 = vmatprep.subr.mxu0 %v111
    %514 = vmatpush1.msra.mxu0 %v110
    %515 = vmatprep.subr.mxu0 0.0
    %516 = vmatpush2.msra.mxu0 0.0
    %517 = vmatprep.subr.mxu0 0.0
    %518 = vmatpush2.msra.mxu0 0.0
    %519 = vmatprep.subr.mxu0 0.0
    %520 = vmatpush2.msra.mxu0 0.0
    %521 = vmatprep.subr.mxu0 0.0
    %522 = vmatpush2.msra.mxu0 0.0
    %523 = vmatprep.subr.mxu0 0.0
    %524 = vmatpush2.msra.mxu0 0.0
    %525 = vmatprep.subr.mxu0 0.0
    %526 = vmatpush2.msra.mxu0 0.0
    %527 = vmatprep.subr.mxu0 0.0
    %528 = vmatpush2.msra.mxu0 0.0
    %529 = vmatprep.subr.mxu0 0.0
    %530 = vmatpush2.msra.mxu0 0.0
    %531 = vmatprep.subr.mxu0 0.0
    %532 = vmatpush2.msra.mxu0 0.0
    %533 = vmatprep.subr.mxu0 0.0
    %534 = vmatpush2.msra.mxu0 0.0
    %535 = vmatprep.subr.mxu0 0.0
    %536 = vmatpush2.msra.mxu0 0.0
    %537 = vmatprep.subr.mxu0 0.0
    %538 = vmatpush2.msra.mxu0 0.0
    %539 = vmatprep.subr.mxu0 0.0
    %540 = vmatpush2.msra.mxu0 0.0
    %541 = vmatprep.subr.mxu0 0.0
    %542 = vmatpush2.msra.mxu0 0.0
    %543 = vmatprep.subr.mxu0 0.0
    %544 = vmatpush2.msra.mxu0 0.0
    %545 = vmatprep.subr.mxu0 0.0
    %546 = vmatpush2.msra.mxu0 0.0
    %547 = vmatprep.mubr.f32.mxu0 0.0
    %548 = vmatmul.mubr.f32.gmra.mxu0 %v478
    %v549 = vpop.f32.mrf.mxu0
    %v550 = vadd.f32 %v389, %v549
    %v551 = vpop.f32.mrf.mxu0
    %v552 = vadd.f32 %v391, %v551
    %553 = vmatprep.mubr.f32.mxu0 0.0
    %554 = vmatmul.mubr.f32.gmra.mxu0 %v481
    %v555 = vpop.f32.mrf.mxu0
    %v556 = vadd.f32 %v395, %v555
    %v557 = vpop.f32.mrf.mxu0
    %v558 = vadd.f32 %v397, %v557
    %559 = vdwg.mxu0
    %560 = vmatprep.subr.mxu0 0.0
    %561 = vmatpush1.msra.mxu0 0.0
    %562 = vmatprep.subr.mxu0 0.0
    %563 = vmatpush1.msra.mxu0 0.0
    %564 = vmatprep.subr.mxu0 0.0
    %565 = vmatpush1.msra.mxu0 0.0
    %566 = vmatprep.subr.mxu0 0.0
    %567 = vmatpush1.msra.mxu0 0.0
    %568 = vmatprep.subr.mxu0 0.0
    %569 = vmatpush1.msra.mxu0 0.0
    %570 = vmatprep.subr.mxu0 0.0
    %571 = vmatpush1.msra.mxu0 0.0
    %572 = vmatprep.subr.mxu0 0.0
    %573 = vmatpush1.msra.mxu0 0.0
    %574 = vmatprep.subr.mxu0 0.0
    %575 = vmatpush1.msra.mxu0 0.0
    %576 = vmatprep.subr.mxu0 0.0
    %577 = vmatpush1.msra.mxu0 0.0
    %578 = vmatprep.subr.mxu0 0.0
    %579 = vmatpush1.msra.mxu0 0.0
    %580 = vmatprep.subr.mxu0 0.0
    %581 = vmatpush1.msra.mxu0 0.0
    %582 = vmatprep.subr.mxu0 0.0
    %583 = vmatpush1.msra.mxu0 0.0
    %584 = vmatprep.subr.mxu0 0.0
    %585 = vmatpush1.msra.mxu0 0.0
    %586 = vmatprep.subr.mxu0 0.0
    %587 = vmatpush1.msra.mxu0 0.0
    %588 = vmatprep.subr.mxu0 %v117
    %589 = vmatpush1.msra.mxu0 %v116
    %590 = vmatprep.subr.mxu0 %v113
    %591 = vmatpush1.msra.mxu0 %v112
    %592 = vmatprep.subr.mxu0 0.0
    %593 = vmatpush2.msra.mxu0 0.0
    %594 = vmatprep.subr.mxu0 0.0
    %595 = vmatpush2.msra.mxu0 0.0
    %596 = vmatprep.subr.mxu0 0.0
    %597 = vmatpush2.msra.mxu0 0.0
    %598 = vmatprep.subr.mxu0 0.0
    %599 = vmatpush2.msra.mxu0 0.0
    %600 = vmatprep.subr.mxu0 0.0
    %601 = vmatpush2.msra.mxu0 0.0
    %602 = vmatprep.subr.mxu0 0.0
    %603 = vmatpush2.msra.mxu0 0.0
    %604 = vmatprep.subr.mxu0 0.0
    %605 = vmatpush2.msra.mxu0 0.0
    %606 = vmatprep.subr.mxu0 0.0
    %607 = vmatpush2.msra.mxu0 0.0
    %608 = vmatprep.subr.mxu0 0.0
    %609 = vmatpush2.msra.mxu0 0.0
    %610 = vmatprep.subr.mxu0 0.0
    %611 = vmatpush2.msra.mxu0 0.0
    %612 = vmatprep.subr.mxu0 0.0
    %613 = vmatpush2.msra.mxu0 0.0
    %614 = vmatprep.subr.mxu0 0.0
    %615 = vmatpush2.msra.mxu0 0.0
    %616 = vmatprep.subr.mxu0 0.0
    %617 = vmatpush2.msra.mxu0 0.0
    %618 = vmatprep.subr.mxu0 0.0
    %619 = vmatpush2.msra.mxu0 0.0
    %620 = vmatprep.subr.mxu0 0.0
    %621 = vmatpush2.msra.mxu0 0.0
    %622 = vmatprep.subr.mxu0 0.0
    %623 = vmatpush2.msra.mxu0 0.0
    %624 = vmatprep.mubr.f32.mxu0 0.0
    %625 = vmatmul.mubr.f32.gmra.mxu0 %v478
    %v626 = vpop.f32.mrf.mxu0
    %v627 = vadd.f32 %v466, %v626
    %v628 = vpop.f32.mrf.mxu0
    %v629 = vadd.f32 %v468, %v628
    %630 = vmatprep.mubr.f32.mxu0 0.0
    %631 = vmatmul.mubr.f32.gmra.mxu0 %v481
    %v632 = vpop.f32.mrf.mxu0
    %v633 = vadd.f32 %v472, %v632
    %v634 = vpop.f32.mrf.mxu0
    %v635 = vadd.f32 %v474, %v634
    %636 = vdwg.mxu0
    %v638 = vlaneseq
    %v639 = vshrl.u32 %v638, 7
    %v640 = vsub.s32 0, %v639
    %v641 = vrot.slane %v310, %v640
    %v642 = vlaneseq
    %v643 = vshrl.u32 %v642, 7
    %v644 = vsub.s32 1, %v643
    %v645 = vrot.slane %v310, %v644
    %v646 = vlaneseq
    %v647 = vshrl.u32 %v646, 7
    %v648 = vsub.s32 2, %v647
    %v649 = vrot.slane %v310, %v648
    %v650 = vlaneseq
    %v651 = vshrl.u32 %v650, 7
    %v652 = vsub.s32 3, %v651
    %v653 = vrot.slane %v310, %v652
    %v658 = vadd.f32 %v550, %v641
    %v659 = vadd.f32 %v552, %v645
    %v660 = vadd.f32 %v627, %v649
    %v661 = vadd.f32 %v629, %v653
    %v662 = vadd.f32 %v556, %v641
    %v663 = vadd.f32 %v558, %v645
    %v664 = vadd.f32 %v633, %v649
    %v665 = vadd.f32 %v635, %v653
    %v666 = vmul.f32 %v658, 0.5
    %v667 = vmul.f32 %v662, 0.5
    %v668 = vtanh.pop %v666
    %v669 = vtanh.pop %v667
    %v670 = vmul.f32 %v668, 0.5
    %v671 = vmul.f32 %v669, 0.5
    %v672 = vadd.f32 %v670, 0.5
    %v673 = vadd.f32 %v671, 0.5
    %v674 = vmul.f32 %v659, 0.5
    %v675 = vmul.f32 %v663, 0.5
    %v676 = vtanh.pop %v674
    %v677 = vtanh.pop %v675
    %v678 = vmul.f32 %v676, 0.5
    %v679 = vmul.f32 %v677, 0.5
    %v680 = vadd.f32 %v678, 0.5
    %v681 = vadd.f32 %v679, 0.5
    %v682 = vtanh.pop %v660
    %v683 = vtanh.pop %v664
    %v684 = vmul.f32 %v661, 0.5
    %v685 = vmul.f32 %v665, 0.5
    %v686 = vtanh.pop %v684
    %v687 = vtanh.pop %v685
    %v688 = vmul.f32 %v686, 0.5
    %v689 = vmul.f32 %v687, 0.5
    %v690 = vadd.f32 %v688, 0.5
    %v691 = vadd.f32 %v689, 0.5
    %v692 = vmul.f32 %v680, %v314
    %v693 = vmul.f32 %v681, %v315
    %v694 = vmul.f32 %v672, %v682
    %v695 = vmul.f32 %v673, %v683
    %v696 = vadd.f32 %v692, %v694
    %v697 = vadd.f32 %v693, %v695
    %v698 = vtanh.pop %v696
    %v699 = vtanh.pop %v697
    %v700 = vmul.f32 %v690, %v698
    %v701 = vmul.f32 %v691, %v699
    %v703 = vlaneseq
    %v704 = vshrl.u32 %v703, 7
    %v705 = vsub.s32 0, %v704
    %v706 = vrot.slane %v311, %v705
    %v707 = vlaneseq
    %v708 = vshrl.u32 %v707, 7
    %v709 = vsub.s32 1, %v708
    %v710 = vrot.slane %v311, %v709
    %v711 = vlaneseq
    %v712 = vshrl.u32 %v711, 7
    %v713 = vsub.s32 2, %v712
    %v714 = vrot.slane %v311, %v713
    %v715 = vlaneseq
    %v716 = vshrl.u32 %v715, 7
    %v717 = vsub.s32 3, %v716
    %v718 = vrot.slane %v311, %v717
    %723 = vmatprep.subr.mxu0 %v243
    %724 = vmatpush1.msra.mxu0 %v242
    %725 = vmatprep.subr.mxu0 %v239
    %726 = vmatpush1.msra.mxu0 %v238
    %727 = vmatprep.subr.mxu0 %v235
    %728 = vmatpush1.msra.mxu0 %v234
    %729 = vmatprep.subr.mxu0 %v231
    %730 = vmatpush1.msra.mxu0 %v230
    %731 = vmatprep.subr.mxu0 %v227
    %732 = vmatpush1.msra.mxu0 %v226
    %733 = vmatprep.subr.mxu0 %v223
    %734 = vmatpush1.msra.mxu0 %v222
    %735 = vmatprep.subr.mxu0 %v219
    %736 = vmatpush1.msra.mxu0 %v218
    %737 = vmatprep.subr.mxu0 %v215
    %738 = vmatpush1.msra.mxu0 %v214
    %739 = vmatprep.subr.mxu0 %v211
    %740 = vmatpush1.msra.mxu0 %v210
    %741 = vmatprep.subr.mxu0 %v207
    %742 = vmatpush1.msra.mxu0 %v206
    %743 = vmatprep.subr.mxu0 %v203
    %744 = vmatpush1.msra.mxu0 %v202
    %745 = vmatprep.subr.mxu0 %v199
    %746 = vmatpush1.msra.mxu0 %v198
    %747 = vmatprep.subr.mxu0 %v195
    %748 = vmatpush1.msra.mxu0 %v194
    %749 = vmatprep.subr.mxu0 %v191
    %750 = vmatpush1.msra.mxu0 %v190
    %751 = vmatprep.subr.mxu0 %v187
    %752 = vmatpush1.msra.mxu0 %v186
    %753 = vmatprep.subr.mxu0 %v183
    %754 = vmatpush1.msra.mxu0 %v182
    %755 = vmatprep.subr.mxu0 %v307
    %756 = vmatpush2.msra.mxu0 %v306
    %757 = vmatprep.subr.mxu0 %v303
    %758 = vmatpush2.msra.mxu0 %v302
    %759 = vmatprep.subr.mxu0 %v299
    %760 = vmatpush2.msra.mxu0 %v298
    %761 = vmatprep.subr.mxu0 %v295
    %762 = vmatpush2.msra.mxu0 %v294
    %763 = vmatprep.subr.mxu0 %v291
    %764 = vmatpush2.msra.mxu0 %v290
    %765 = vmatprep.subr.mxu0 %v287
    %766 = vmatpush2.msra.mxu0 %v286
    %767 = vmatprep.subr.mxu0 %v283
    %768 = vmatpush2.msra.mxu0 %v282
    %769 = vmatprep.subr.mxu0 %v279
    %770 = vmatpush2.msra.mxu0 %v278
    %771 = vmatprep.subr.mxu0 %v275
    %772 = vmatpush2.msra.mxu0 %v274
    %773 = vmatprep.subr.mxu0 %v271
    %774 = vmatpush2.msra.mxu0 %v270
    %775 = vmatprep.subr.mxu0 %v267
    %776 = vmatpush2.msra.mxu0 %v266
    %777 = vmatprep.subr.mxu0 %v263
    %778 = vmatpush2.msra.mxu0 %v262
    %779 = vmatprep.subr.mxu0 %v259
    %780 = vmatpush2.msra.mxu0 %v258
    %781 = vmatprep.subr.mxu0 %v255
    %782 = vmatpush2.msra.mxu0 %v254
    %783 = vmatprep.subr.mxu0 %v251
    %784 = vmatpush2.msra.mxu0 %v250
    %785 = vmatprep.subr.mxu0 %v247
    %786 = vmatpush2.msra.mxu0 %v246
    %787 = vmatprep.mubr.f32.mxu0 %v316
    %788 = vmatmul.mubr.f32.gmra.mxu0 %v700
    %v789 = vpop.f32.mrf.mxu0
    %v790 = vadd.f32 %v706, %v789
    %v791 = vpop.f32.mrf.mxu0
    %v792 = vadd.f32 %v710, %v791
    %793 = vmatprep.mubr.f32.mxu0 %v317
    %794 = vmatmul.mubr.f32.gmra.mxu0 %v701
    %v795 = vpop.f32.mrf.mxu0
    %v796 = vadd.f32 %v706, %v795
    %v797 = vpop.f32.mrf.mxu0
    %v798 = vadd.f32 %v710, %v797
    %799 = vdwg.mxu0
    %800 = vmatprep.subr.mxu0 %v245
    %801 = vmatpush1.msra.mxu0 %v244
    %802 = vmatprep.subr.mxu0 %v241
    %803 = vmatpush1.msra.mxu0 %v240
    %804 = vmatprep.subr.mxu0 %v237
    %805 = vmatpush1.msra.mxu0 %v236
    %806 = vmatprep.subr.mxu0 %v233
    %807 = vmatpush1.msra.mxu0 %v232
    %808 = vmatprep.subr.mxu0 %v229
    %809 = vmatpush1.msra.mxu0 %v228
    %810 = vmatprep.subr.mxu0 %v225
    %811 = vmatpush1.msra.mxu0 %v224
    %812 = vmatprep.subr.mxu0 %v221
    %813 = vmatpush1.msra.mxu0 %v220
    %814 = vmatprep.subr.mxu0 %v217
    %815 = vmatpush1.msra.mxu0 %v216
    %816 = vmatprep.subr.mxu0 %v213
    %817 = vmatpush1.msra.mxu0 %v212
    %818 = vmatprep.subr.mxu0 %v209
    %819 = vmatpush1.msra.mxu0 %v208
    %820 = vmatprep.subr.mxu0 %v205
    %821 = vmatpush1.msra.mxu0 %v204
    %822 = vmatprep.subr.mxu0 %v201
    %823 = vmatpush1.msra.mxu0 %v200
    %824 = vmatprep.subr.mxu0 %v197
    %825 = vmatpush1.msra.mxu0 %v196
    %826 = vmatprep.subr.mxu0 %v193
    %827 = vmatpush1.msra.mxu0 %v192
    %828 = vmatprep.subr.mxu0 %v189
    %829 = vmatpush1.msra.mxu0 %v188
    %830 = vmatprep.subr.mxu0 %v185
    %831 = vmatpush1.msra.mxu0 %v184
    %832 = vmatprep.subr.mxu0 %v309
    %833 = vmatpush2.msra.mxu0 %v308
    %834 = vmatprep.subr.mxu0 %v305
    %835 = vmatpush2.msra.mxu0 %v304
    %836 = vmatprep.subr.mxu0 %v301
    %837 = vmatpush2.msra.mxu0 %v300
    %838 = vmatprep.subr.mxu0 %v297
    %839 = vmatpush2.msra.mxu0 %v296
    %840 = vmatprep.subr.mxu0 %v293
    %841 = vmatpush2.msra.mxu0 %v292
    %842 = vmatprep.subr.mxu0 %v289
    %843 = vmatpush2.msra.mxu0 %v288
    %844 = vmatprep.subr.mxu0 %v285
    %845 = vmatpush2.msra.mxu0 %v284
    %846 = vmatprep.subr.mxu0 %v281
    %847 = vmatpush2.msra.mxu0 %v280
    %848 = vmatprep.subr.mxu0 %v277
    %849 = vmatpush2.msra.mxu0 %v276
    %850 = vmatprep.subr.mxu0 %v273
    %851 = vmatpush2.msra.mxu0 %v272
    %852 = vmatprep.subr.mxu0 %v269
    %853 = vmatpush2.msra.mxu0 %v268
    %854 = vmatprep.subr.mxu0 %v265
    %855 = vmatpush2.msra.mxu0 %v264
    %856 = vmatprep.subr.mxu0 %v261
    %857 = vmatpush2.msra.mxu0 %v260
    %858 = vmatprep.subr.mxu0 %v257
    %859 = vmatpush2.msra.mxu0 %v256
    %860 = vmatprep.subr.mxu0 %v253
    %861 = vmatpush2.msra.mxu0 %v252
    %862 = vmatprep.subr.mxu0 %v249
    %863 = vmatpush2.msra.mxu0 %v248
    %864 = vmatprep.mubr.f32.mxu0 %v316
    %865 = vmatmul.mubr.f32.gmra.mxu0 %v700
    %v866 = vpop.f32.mrf.mxu0
    %v867 = vadd.f32 %v714, %v866
    %v868 = vpop.f32.mrf.mxu0
    %v869 = vadd.f32 %v718, %v868
    %870 = vmatprep.mubr.f32.mxu0 %v317
    %871 = vmatmul.mubr.f32.gmra.mxu0 %v701
    %v872 = vpop.f32.mrf.mxu0
    %v873 = vadd.f32 %v714, %v872
    %v874 = vpop.f32.mrf.mxu0
    %v875 = vadd.f32 %v718, %v874
    %876 = vdwg.mxu0
    %v877 = vmul.f32 %v790, 0.5
    %v878 = vmul.f32 %v796, 0.5
    %v879 = vtanh.pop %v877
    %v880 = vtanh.pop %v878
    %v881 = vmul.f32 %v879, 0.5
    %v882 = vmul.f32 %v880, 0.5
    %v883 = vadd.f32 %v881, 0.5
    %v884 = vadd.f32 %v882, 0.5
    %v885 = vmul.f32 %v792, 0.5
    %v886 = vmul.f32 %v798, 0.5
    %v887 = vtanh.pop %v885
    %v888 = vtanh.pop %v886
    %v889 = vmul.f32 %v887, 0.5
    %v890 = vmul.f32 %v888, 0.5
    %v891 = vadd.f32 %v889, 0.5
    %v892 = vadd.f32 %v890, 0.5
    %v893 = vtanh.pop %v867
    %v894 = vtanh.pop %v873
    %v895 = vmul.f32 %v869, 0.5
    %v896 = vmul.f32 %v875, 0.5
    %v897 = vtanh.pop %v895
    %v898 = vtanh.pop %v896
    %v899 = vmul.f32 %v897, 0.5
    %v900 = vmul.f32 %v898, 0.5
    %v901 = vadd.f32 %v899, 0.5
    %v902 = vadd.f32 %v900, 0.5
    %v903 = vmul.f32 %v891, %v318
    %v904 = vmul.f32 %v892, %v319
    %v905 = vmul.f32 %v883, %v893
    %v906 = vmul.f32 %v884, %v894
    %v907 = vadd.f32 %v903, %v905
    %v908 = vadd.f32 %v904, %v906
    %v909 = vtanh.pop %v907
    %v910 = vtanh.pop %v908
    %v911 = vmul.f32 %v901, %v909
    %v912 = vmul.f32 %v902, %v910
    %s913 = scalar_lea.vmem [#allocation6], 16
    %v914 = vld [vmem:[%s913] sm:$0xff]
    %v915 = vld [vmem:[%s913 + $0x8] sm:$0xff]
    %916 = vmatprep.subr.mxu0 %v179
    %917 = vmatpush1.msra.mxu0 %v178
    %918 = vmatprep.subr.mxu0 %v175
    %919 = vmatpush1.msra.mxu0 %v174
    %920 = vmatprep.subr.mxu0 %v171
    %921 = vmatpush1.msra.mxu0 %v170
    %922 = vmatprep.subr.mxu0 %v167
    %923 = vmatpush1.msra.mxu0 %v166
    %924 = vmatprep.subr.mxu0 %v163
    %925 = vmatpush1.msra.mxu0 %v162
    %926 = vmatprep.subr.mxu0 %v159
    %927 = vmatpush1.msra.mxu0 %v158
    %928 = vmatprep.subr.mxu0 %v155
    %929 = vmatpush1.msra.mxu0 %v154
    %930 = vmatprep.subr.mxu0 %v151
    %931 = vmatpush1.msra.mxu0 %v150
    %932 = vmatprep.subr.mxu0 %v147
    %933 = vmatpush1.msra.mxu0 %v146
    %934 = vmatprep.subr.mxu0 %v143
    %935 = vmatpush1.msra.mxu0 %v142
    %936 = vmatprep.subr.mxu0 %v139
    %937 = vmatpush1.msra.mxu0 %v138
    %938 = vmatprep.subr.mxu0 %v135
    %939 = vmatpush1.msra.mxu0 %v134
    %940 = vmatprep.subr.mxu0 %v131
    %941 = vmatpush1.msra.mxu0 %v130
    %942 = vmatprep.subr.mxu0 %v127
    %943 = vmatpush1.msra.mxu0 %v126
    %944 = vmatprep.subr.mxu0 %v123
    %945 = vmatpush1.msra.mxu0 %v122
    %946 = vmatprep.subr.mxu0 %v119
    %947 = vmatpush1.msra.mxu0 %v118
    %948 = vmatprep.subr.mxu0 0.0
    %949 = vmatpush2.msra.mxu0 0.0
    %950 = vmatprep.subr.mxu0 0.0
    %951 = vmatpush2.msra.mxu0 0.0
    %952 = vmatprep.subr.mxu0 0.0
    %953 = vmatpush2.msra.mxu0 0.0
    %954 = vmatprep.subr.mxu0 0.0
    %955 = vmatpush2.msra.mxu0 0.0
    %956 = vmatprep.subr.mxu0 0.0
    %957 = vmatpush2.msra.mxu0 0.0
    %958 = vmatprep.subr.mxu0 0.0
    %959 = vmatpush2.msra.mxu0 0.0
    %960 = vmatprep.subr.mxu0 0.0
    %961 = vmatpush2.msra.mxu0 0.0
    %962 = vmatprep.subr.mxu0 0.0
    %963 = vmatpush2.msra.mxu0 0.0
    %964 = vmatprep.subr.mxu0 0.0
    %965 = vmatpush2.msra.mxu0 0.0
    %966 = vmatprep.subr.mxu0 0.0
    %967 = vmatpush2.msra.mxu0 0.0
    %968 = vmatprep.subr.mxu0 0.0
    %969 = vmatpush2.msra.mxu0 0.0
    %970 = vmatprep.subr.mxu0 0.0
    %971 = vmatpush2.msra.mxu0 0.0
    %972 = vmatprep.subr.mxu0 0.0
    %973 = vmatpush2.msra.mxu0 0.0
    %974 = vmatprep.subr.mxu0 0.0
    %975 = vmatpush2.msra.mxu0 0.0
    %976 = vmatprep.subr.mxu0 0.0
    %977 = vmatpush2.msra.mxu0 0.0
    %978 = vmatprep.subr.mxu0 0.0
    %979 = vmatpush2.msra.mxu0 0.0
    %980 = vmatprep.mubr.f32.mxu0 0.0
    %981 = vmatmul.mubr.f32.gmra.mxu0 %v700
    %v982 = vpop.f32.mrf.mxu0
    %v983 = vadd.f32 0.0, %v982
    %v984 = vpop.f32.mrf.mxu0
    %v985 = vadd.f32 0.0, %v984
    %986 = vmatprep.mubr.f32.mxu0 0.0
    %987 = vmatmul.mubr.f32.gmra.mxu0 %v701
    %v988 = vpop.f32.mrf.mxu0
    %v989 = vadd.f32 0.0, %v988
    %v990 = vpop.f32.mrf.mxu0
    %v991 = vadd.f32 0.0, %v990
    %992 = vdwg.mxu0
    %993 = vmatprep.subr.mxu0 %v181
    %994 = vmatpush1.msra.mxu0 %v180
    %995 = vmatprep.subr.mxu0 %v177
    %996 = vmatpush1.msra.mxu0 %v176
    %997 = vmatprep.subr.mxu0 %v173
    %998 = vmatpush1.msra.mxu0 %v172
    %999 = vmatprep.subr.mxu0 %v169
    %1000 = vmatpush1.msra.mxu0 %v168
    %1001 = vmatprep.subr.mxu0 %v165
    %1002 = vmatpush1.msra.mxu0 %v164
    %1003 = vmatprep.subr.mxu0 %v161
    %1004 = vmatpush1.msra.mxu0 %v160
    %1005 = vmatprep.subr.mxu0 %v157
    %1006 = vmatpush1.msra.mxu0 %v156
    %1007 = vmatprep.subr.mxu0 %v153
    %1008 = vmatpush1.msra.mxu0 %v152
    %1009 = vmatprep.subr.mxu0 %v149
    %1010 = vmatpush1.msra.mxu0 %v148
    %1011 = vmatprep.subr.mxu0 %v145
    %1012 = vmatpush1.msra.mxu0 %v144
    %1013 = vmatprep.subr.mxu0 %v141
    %1014 = vmatpush1.msra.mxu0 %v140
    %1015 = vmatprep.subr.mxu0 %v137
    %1016 = vmatpush1.msra.mxu0 %v136
    %1017 = vmatprep.subr.mxu0 %v133
    %1018 = vmatpush1.msra.mxu0 %v132
    %1019 = vmatprep.subr.mxu0 %v129
    %1020 = vmatpush1.msra.mxu0 %v128
    %1021 = vmatprep.subr.mxu0 %v125
    %1022 = vmatpush1.msra.mxu0 %v124
    %1023 = vmatprep.subr.mxu0 %v121
    %1024 = vmatpush1.msra.mxu0 %v120
    %1025 = vmatprep.subr.mxu0 0.0
    %1026 = vmatpush2.msra.mxu0 0.0
    %1027 = vmatprep.subr.mxu0 0.0
    %1028 = vmatpush2.msra.mxu0 0.0
    %1029 = vmatprep.subr.mxu0 0.0
    %1030 = vmatpush2.msra.mxu0 0.0
    %1031 = vmatprep.subr.mxu0 0.0
    %1032 = vmatpush2.msra.mxu0 0.0
    %1033 = vmatprep.subr.mxu0 0.0
    %1034 = vmatpush2.msra.mxu0 0.0
    %1035 = vmatprep.subr.mxu0 0.0
    %1036 = vmatpush2.msra.mxu0 0.0
    %1037 = vmatprep.subr.mxu0 0.0
    %1038 = vmatpush2.msra.mxu0 0.0
    %1039 = vmatprep.subr.mxu0 0.0
    %1040 = vmatpush2.msra.mxu0 0.0
    %1041 = vmatprep.subr.mxu0 0.0
    %1042 = vmatpush2.msra.mxu0 0.0
    %1043 = vmatprep.subr.mxu0 0.0
    %1044 = vmatpush2.msra.mxu0 0.0
    %1045 = vmatprep.subr.mxu0 0.0
    %1046 = vmatpush2.msra.mxu0 0.0
    %1047 = vmatprep.subr.mxu0 0.0
    %1048 = vmatpush2.msra.mxu0 0.0
    %1049 = vmatprep.subr.mxu0 0.0
    %1050 = vmatpush2.msra.mxu0 0.0
    %1051 = vmatprep.subr.mxu0 0.0
    %1052 = vmatpush2.msra.mxu0 0.0
    %1053 = vmatprep.subr.mxu0 0.0
    %1054 = vmatpush2.msra.mxu0 0.0
    %1055 = vmatprep.subr.mxu0 0.0
    %1056 = vmatpush2.msra.mxu0 0.0
    %1057 = vmatprep.mubr.f32.mxu0 0.0
    %1058 = vmatmul.mubr.f32.gmra.mxu0 %v700
    %v1059 = vpop.f32.mrf.mxu0
    %v1060 = vadd.f32 0.0, %v1059
    %v1061 = vpop.f32.mrf.mxu0
    %v1062 = vadd.f32 0.0, %v1061
    %1063 = vmatprep.mubr.f32.mxu0 0.0
    %1064 = vmatmul.mubr.f32.gmra.mxu0 %v701
    %v1065 = vpop.f32.mrf.mxu0
    %v1066 = vadd.f32 0.0, %v1065
    %v1067 = vpop.f32.mrf.mxu0
    %v1068 = vadd.f32 0.0, %v1067
    %1069 = vdwg.mxu0
    %v1071 = vsel %vm476, %v914, 0
    %v1074 = vsel %vm476, %v915, 0
    %1076 = vmatprep.subr.mxu0 0.0
    %1077 = vmatpush1.msra.mxu0 0.0
    %1078 = vmatprep.subr.mxu0 0.0
    %1079 = vmatpush1.msra.mxu0 0.0
    %1080 = vmatprep.subr.mxu0 0.0
    %1081 = vmatpush1.msra.mxu0 0.0
    %1082 = vmatprep.subr.mxu0 0.0
    %1083 = vmatpush1.msra.mxu0 0.0
    %1084 = vmatprep.subr.mxu0 0.0
    %1085 = vmatpush1.msra.mxu0 0.0
    %1086 = vmatprep.subr.mxu0 0.0
    %1087 = vmatpush1.msra.mxu0 0.0
    %1088 = vmatprep.subr.mxu0 0.0
    %1089 = vmatpush1.msra.mxu0 0.0
    %1090 = vmatprep.subr.mxu0 0.0
    %1091 = vmatpush1.msra.mxu0 0.0
    %1092 = vmatprep.subr.mxu0 0.0
    %1093 = vmatpush1.msra.mxu0 0.0
    %1094 = vmatprep.subr.mxu0 0.0
    %1095 = vmatpush1.msra.mxu0 0.0
    %1096 = vmatprep.subr.mxu0 0.0
    %1097 = vmatpush1.msra.mxu0 0.0
    %1098 = vmatprep.subr.mxu0 0.0
    %1099 = vmatpush1.msra.mxu0 0.0
    %1100 = vmatprep.subr.mxu0 0.0
    %1101 = vmatpush1.msra.mxu0 0.0
    %1102 = vmatprep.subr.mxu0 0.0
    %1103 = vmatpush1.msra.mxu0 0.0
    %1104 = vmatprep.subr.mxu0 %v115
    %1105 = vmatpush1.msra.mxu0 %v114
    %1106 = vmatprep.subr.mxu0 %v111
    %1107 = vmatpush1.msra.mxu0 %v110
    %1108 = vmatprep.subr.mxu0 0.0
    %1109 = vmatpush2.msra.mxu0 0.0
    %1110 = vmatprep.subr.mxu0 0.0
    %1111 = vmatpush2.msra.mxu0 0.0
    %1112 = vmatprep.subr.mxu0 0.0
    %1113 = vmatpush2.msra.mxu0 0.0
    %1114 = vmatprep.subr.mxu0 0.0
    %1115 = vmatpush2.msra.mxu0 0.0
    %1116 = vmatprep.subr.mxu0 0.0
    %1117 = vmatpush2.msra.mxu0 0.0
    %1118 = vmatprep.subr.mxu0 0.0
    %1119 = vmatpush2.msra.mxu0 0.0
    %1120 = vmatprep.subr.mxu0 0.0
    %1121 = vmatpush2.msra.mxu0 0.0
    %1122 = vmatprep.subr.mxu0 0.0
    %1123 = vmatpush2.msra.mxu0 0.0
    %1124 = vmatprep.subr.mxu0 0.0
    %1125 = vmatpush2.msra.mxu0 0.0
    %1126 = vmatprep.subr.mxu0 0.0
    %1127 = vmatpush2.msra.mxu0 0.0
    %1128 = vmatprep.subr.mxu0 0.0
    %1129 = vmatpush2.msra.mxu0 0.0
    %1130 = vmatprep.subr.mxu0 0.0
    %1131 = vmatpush2.msra.mxu0 0.0
    %1132 = vmatprep.subr.mxu0 0.0
    %1133 = vmatpush2.msra.mxu0 0.0
    %1134 = vmatprep.subr.mxu0 0.0
    %1135 = vmatpush2.msra.mxu0 0.0
    %1136 = vmatprep.subr.mxu0 0.0
    %1137 = vmatpush2.msra.mxu0 0.0
    %1138 = vmatprep.subr.mxu0 0.0
    %1139 = vmatpush2.msra.mxu0 0.0
    %1140 = vmatprep.mubr.f32.mxu0 0.0
    %1141 = vmatmul.mubr.f32.gmra.mxu0 %v1071
    %v1142 = vpop.f32.mrf.mxu0
    %v1143 = vadd.f32 %v983, %v1142
    %v1144 = vpop.f32.mrf.mxu0
    %v1145 = vadd.f32 %v985, %v1144
    %1146 = vmatprep.mubr.f32.mxu0 0.0
    %1147 = vmatmul.mubr.f32.gmra.mxu0 %v1074
    %v1148 = vpop.f32.mrf.mxu0
    %v1149 = vadd.f32 %v989, %v1148
    %v1150 = vpop.f32.mrf.mxu0
    %v1151 = vadd.f32 %v991, %v1150
    %1152 = vdwg.mxu0
    %1153 = vmatprep.subr.mxu0 0.0
    %1154 = vmatpush1.msra.mxu0 0.0
    %1155 = vmatprep.subr.mxu0 0.0
    %1156 = vmatpush1.msra.mxu0 0.0
    %1157 = vmatprep.subr.mxu0 0.0
    %1158 = vmatpush1.msra.mxu0 0.0
    %1159 = vmatprep.subr.mxu0 0.0
    %1160 = vmatpush1.msra.mxu0 0.0
    %1161 = vmatprep.subr.mxu0 0.0
    %1162 = vmatpush1.msra.mxu0 0.0
    %1163 = vmatprep.subr.mxu0 0.0
    %1164 = vmatpush1.msra.mxu0 0.0
    %1165 = vmatprep.subr.mxu0 0.0
    %1166 = vmatpush1.msra.mxu0 0.0
    %1167 = vmatprep.subr.mxu0 0.0
    %1168 = vmatpush1.msra.mxu0 0.0
    %1169 = vmatprep.subr.mxu0 0.0
    %1170 = vmatpush1.msra.mxu0 0.0
    %1171 = vmatprep.subr.mxu0 0.0
    %1172 = vmatpush1.msra.mxu0 0.0
    %1173 = vmatprep.subr.mxu0 0.0
    %1174 = vmatpush1.msra.mxu0 0.0
    %1175 = vmatprep.subr.mxu0 0.0
    %1176 = vmatpush1.msra.mxu0 0.0
    %1177 = vmatprep.subr.mxu0 0.0
    %1178 = vmatpush1.msra.mxu0 0.0
    %1179 = vmatprep.subr.mxu0 0.0
    %1180 = vmatpush1.msra.mxu0 0.0
    %1181 = vmatprep.subr.mxu0 %v117
    %1182 = vmatpush1.msra.mxu0 %v116
    %1183 = vmatprep.subr.mxu0 %v113
    %1184 = vmatpush1.msra.mxu0 %v112
    %1185 = vmatprep.subr.mxu0 0.0
    %1186 = vmatpush2.msra.mxu0 0.0
    %1187 = vmatprep.subr.mxu0 0.0
    %1188 = vmatpush2.msra.mxu0 0.0
    %1189 = vmatprep.subr.mxu0 0.0
    %1190 = vmatpush2.msra.mxu0 0.0
    %1191 = vmatprep.subr.mxu0 0.0
    %1192 = vmatpush2.msra.mxu0 0.0
    %1193 = vmatprep.subr.mxu0 0.0
    %1194 = vmatpush2.msra.mxu0 0.0
    %1195 = vmatprep.subr.mxu0 0.0
    %1196 = vmatpush2.msra.mxu0 0.0
    %1197 = vmatprep.subr.mxu0 0.0
    %1198 = vmatpush2.msra.mxu0 0.0
    %1199 = vmatprep.subr.mxu0 0.0
    %1200 = vmatpush2.msra.mxu0 0.0
    %1201 = vmatprep.subr.mxu0 0.0
    %1202 = vmatpush2.msra.mxu0 0.0
    %1203 = vmatprep.subr.mxu0 0.0
    %1204 = vmatpush2.msra.mxu0 0.0
    %1205 = vmatprep.subr.mxu0 0.0
    %1206 = vmatpush2.msra.mxu0 0.0
    %1207 = vmatprep.subr.mxu0 0.0
    %1208 = vmatpush2.msra.mxu0 0.0
    %1209 = vmatprep.subr.mxu0 0.0
    %1210 = vmatpush2.msra.mxu0 0.0
    %1211 = vmatprep.subr.mxu0 0.0
    %1212 = vmatpush2.msra.mxu0 0.0
    %1213 = vmatprep.subr.mxu0 0.0
    %1214 = vmatpush2.msra.mxu0 0.0
    %1215 = vmatprep.subr.mxu0 0.0
    %1216 = vmatpush2.msra.mxu0 0.0
    %1217 = vmatprep.mubr.f32.mxu0 0.0
    %1218 = vmatmul.mubr.f32.gmra.mxu0 %v1071
    %v1219 = vpop.f32.mrf.mxu0
    %v1220 = vadd.f32 %v1060, %v1219
    %v1221 = vpop.f32.mrf.mxu0
    %v1222 = vadd.f32 %v1062, %v1221
    %1223 = vmatprep.mubr.f32.mxu0 0.0
    %1224 = vmatmul.mubr.f32.gmra.mxu0 %v1074
    %v1225 = vpop.f32.mrf.mxu0
    %v1226 = vadd.f32 %v1066, %v1225
    %v1227 = vpop.f32.mrf.mxu0
    %v1228 = vadd.f32 %v1068, %v1227
    %1229 = vdwg.mxu0
    %v1230 = vadd.f32 %v1143, %v641
    %v1231 = vadd.f32 %v1145, %v645
    %v1232 = vadd.f32 %v1220, %v649
    %v1233 = vadd.f32 %v1222, %v653
    %v1234 = vadd.f32 %v1149, %v641
    %v1235 = vadd.f32 %v1151, %v645
    %v1236 = vadd.f32 %v1226, %v649
    %v1237 = vadd.f32 %v1228, %v653
    %v1238 = vmul.f32 %v1230, 0.5
    %v1239 = vmul.f32 %v1234, 0.5
    %v1240 = vtanh.pop %v1238
    %v1241 = vtanh.pop %v1239
    %v1242 = vmul.f32 %v1240, 0.5
    %v1243 = vmul.f32 %v1241, 0.5
    %v1244 = vadd.f32 %v1242, 0.5
    %v1245 = vadd.f32 %v1243, 0.5
    %v1246 = vmul.f32 %v1231, 0.5
    %v1247 = vmul.f32 %v1235, 0.5
    %v1248 = vtanh.pop %v1246
    %v1249 = vtanh.pop %v1247
    %v1250 = vmul.f32 %v1248, 0.5
    %v1251 = vmul.f32 %v1249, 0.5
    %v1252 = vadd.f32 %v1250, 0.5
    %v1253 = vadd.f32 %v1251, 0.5
    %v1254 = vtanh.pop %v1232
    %v1255 = vtanh.pop %v1236
    %v1256 = vmul.f32 %v1233, 0.5
    %v1257 = vmul.f32 %v1237, 0.5
    %v1258 = vtanh.pop %v1256
    %v1259 = vtanh.pop %v1257
    %v1260 = vmul.f32 %v1258, 0.5
    %v1261 = vmul.f32 %v1259, 0.5
    %v1262 = vadd.f32 %v1260, 0.5
    %v1263 = vadd.f32 %v1261, 0.5
    %v1264 = vmul.f32 %v1252, %v696
    %v1265 = vmul.f32 %v1253, %v697
    %v1266 = vmul.f32 %v1244, %v1254
    %v1267 = vmul.f32 %v1245, %v1255
    %v1268 = vadd.f32 %v1264, %v1266
    %v1269 = vadd.f32 %v1265, %v1267
    %v1270 = vtanh.pop %v1268
    %v1271 = vtanh.pop %v1269
    %v1272 = vmul.f32 %v1262, %v1270
    %v1273 = vmul.f32 %v1263, %v1271
    %1274 = vmatprep.subr.mxu0 %v243
    %1275 = vmatpush1.msra.mxu0 %v242
    %1276 = vmatprep.subr.mxu0 %v239
    %1277 = vmatpush1.msra.mxu0 %v238
    %1278 = vmatprep.subr.mxu0 %v235
    %1279 = vmatpush1.msra.mxu0 %v234
    %1280 = vmatprep.subr.mxu0 %v231
    %1281 = vmatpush1.msra.mxu0 %v230
    %1282 = vmatprep.subr.mxu0 %v227
    %1283 = vmatpush1.msra.mxu0 %v226
    %1284 = vmatprep.subr.mxu0 %v223
    %1285 = vmatpush1.msra.mxu0 %v222
    %1286 = vmatprep.subr.mxu0 %v219
    %1287 = vmatpush1.msra.mxu0 %v218
    %1288 = vmatprep.subr.mxu0 %v215
    %1289 = vmatpush1.msra.mxu0 %v214
    %1290 = vmatprep.subr.mxu0 %v211
    %1291 = vmatpush1.msra.mxu0 %v210
    %1292 = vmatprep.subr.mxu0 %v207
    %1293 = vmatpush1.msra.mxu0 %v206
    %1294 = vmatprep.subr.mxu0 %v203
    %1295 = vmatpush1.msra.mxu0 %v202
    %1296 = vmatprep.subr.mxu0 %v199
    %1297 = vmatpush1.msra.mxu0 %v198
    %1298 = vmatprep.subr.mxu0 %v195
    %1299 = vmatpush1.msra.mxu0 %v194
    %1300 = vmatprep.subr.mxu0 %v191
    %1301 = vmatpush1.msra.mxu0 %v190
    %1302 = vmatprep.subr.mxu0 %v187
    %1303 = vmatpush1.msra.mxu0 %v186
    %1304 = vmatprep.subr.mxu0 %v183
    %1305 = vmatpush1.msra.mxu0 %v182
    %1306 = vmatprep.subr.mxu0 %v307
    %1307 = vmatpush2.msra.mxu0 %v306
    %1308 = vmatprep.subr.mxu0 %v303
    %1309 = vmatpush2.msra.mxu0 %v302
    %1310 = vmatprep.subr.mxu0 %v299
    %1311 = vmatpush2.msra.mxu0 %v298
    %1312 = vmatprep.subr.mxu0 %v295
    %1313 = vmatpush2.msra.mxu0 %v294
    %1314 = vmatprep.subr.mxu0 %v291
    %1315 = vmatpush2.msra.mxu0 %v290
    %1316 = vmatprep.subr.mxu0 %v287
    %1317 = vmatpush2.msra.mxu0 %v286
    %1318 = vmatprep.subr.mxu0 %v283
    %1319 = vmatpush2.msra.mxu0 %v282
    %1320 = vmatprep.subr.mxu0 %v279
    %1321 = vmatpush2.msra.mxu0 %v278
    %1322 = vmatprep.subr.mxu0 %v275
    %1323 = vmatpush2.msra.mxu0 %v274
    %1324 = vmatprep.subr.mxu0 %v271
    %1325 = vmatpush2.msra.mxu0 %v270
    %1326 = vmatprep.subr.mxu0 %v267
    %1327 = vmatpush2.msra.mxu0 %v266
    %1328 = vmatprep.subr.mxu0 %v263
    %1329 = vmatpush2.msra.mxu0 %v262
    %1330 = vmatprep.subr.mxu0 %v259
    %1331 = vmatpush2.msra.mxu0 %v258
    %1332 = vmatprep.subr.mxu0 %v255
    %1333 = vmatpush2.msra.mxu0 %v254
    %1334 = vmatprep.subr.mxu0 %v251
    %1335 = vmatpush2.msra.mxu0 %v250
    %1336 = vmatprep.subr.mxu0 %v247
    %1337 = vmatpush2.msra.mxu0 %v246
    %1338 = vmatprep.mubr.f32.mxu0 %v911
    %1339 = vmatmul.mubr.f32.gmra.mxu0 %v1272
    %v1340 = vpop.f32.mrf.mxu0
    %v1341 = vadd.f32 %v706, %v1340
    %v1342 = vpop.f32.mrf.mxu0
    %v1343 = vadd.f32 %v710, %v1342
    %1344 = vmatprep.mubr.f32.mxu0 %v912
    %1345 = vmatmul.mubr.f32.gmra.mxu0 %v1273
    %v1346 = vpop.f32.mrf.mxu0
    %v1347 = vadd.f32 %v706, %v1346
    %v1348 = vpop.f32.mrf.mxu0
    %v1349 = vadd.f32 %v710, %v1348
    %1350 = vdwg.mxu0
    %1351 = vmatprep.subr.mxu0 %v245
    %1352 = vmatpush1.msra.mxu0 %v244
    %1353 = vmatprep.subr.mxu0 %v241
    %1354 = vmatpush1.msra.mxu0 %v240
    %1355 = vmatprep.subr.mxu0 %v237
    %1356 = vmatpush1.msra.mxu0 %v236
    %1357 = vmatprep.subr.mxu0 %v233
    %1358 = vmatpush1.msra.mxu0 %v232
    %1359 = vmatprep.subr.mxu0 %v229
    %1360 = vmatpush1.msra.mxu0 %v228
    %1361 = vmatprep.subr.mxu0 %v225
    %1362 = vmatpush1.msra.mxu0 %v224
    %1363 = vmatprep.subr.mxu0 %v221
    %1364 = vmatpush1.msra.mxu0 %v220
    %1365 = vmatprep.subr.mxu0 %v217
    %1366 = vmatpush1.msra.mxu0 %v216
    %1367 = vmatprep.subr.mxu0 %v213
    %1368 = vmatpush1.msra.mxu0 %v212
    %1369 = vmatprep.subr.mxu0 %v209
    %1370 = vmatpush1.msra.mxu0 %v208
    %1371 = vmatprep.subr.mxu0 %v205
    %1372 = vmatpush1.msra.mxu0 %v204
    %1373 = vmatprep.subr.mxu0 %v201
    %1374 = vmatpush1.msra.mxu0 %v200
    %1375 = vmatprep.subr.mxu0 %v197
    %1376 = vmatpush1.msra.mxu0 %v196
    %1377 = vmatprep.subr.mxu0 %v193
    %1378 = vmatpush1.msra.mxu0 %v192
    %1379 = vmatprep.subr.mxu0 %v189
    %1380 = vmatpush1.msra.mxu0 %v188
    %1381 = vmatprep.subr.mxu0 %v185
    %1382 = vmatpush1.msra.mxu0 %v184
    %1383 = vmatprep.subr.mxu0 %v309
    %1384 = vmatpush2.msra.mxu0 %v308
    %1385 = vmatprep.subr.mxu0 %v305
    %1386 = vmatpush2.msra.mxu0 %v304
    %1387 = vmatprep.subr.mxu0 %v301
    %1388 = vmatpush2.msra.mxu0 %v300
    %1389 = vmatprep.subr.mxu0 %v297
    %1390 = vmatpush2.msra.mxu0 %v296
    %1391 = vmatprep.subr.mxu0 %v293
    %1392 = vmatpush2.msra.mxu0 %v292
    %1393 = vmatprep.subr.mxu0 %v289
    %1394 = vmatpush2.msra.mxu0 %v288
    %1395 = vmatprep.subr.mxu0 %v285
    %1396 = vmatpush2.msra.mxu0 %v284
    %1397 = vmatprep.subr.mxu0 %v281
    %1398 = vmatpush2.msra.mxu0 %v280
    %1399 = vmatprep.subr.mxu0 %v277
    %1400 = vmatpush2.msra.mxu0 %v276
    %1401 = vmatprep.subr.mxu0 %v273
    %1402 = vmatpush2.msra.mxu0 %v272
    %1403 = vmatprep.subr.mxu0 %v269
    %1404 = vmatpush2.msra.mxu0 %v268
    %1405 = vmatprep.subr.mxu0 %v265
    %1406 = vmatpush2.msra.mxu0 %v264
    %1407 = vmatprep.subr.mxu0 %v261
    %1408 = vmatpush2.msra.mxu0 %v260
    %1409 = vmatprep.subr.mxu0 %v257
    %1410 = vmatpush2.msra.mxu0 %v256
    %1411 = vmatprep.subr.mxu0 %v253
    %1412 = vmatpush2.msra.mxu0 %v252
    %1413 = vmatprep.subr.mxu0 %v249
    %1414 = vmatpush2.msra.mxu0 %v248
    %1415 = vmatprep.mubr.f32.mxu0 %v911
    %1416 = vmatmul.mubr.f32.gmra.mxu0 %v1272
    %v1417 = vpop.f32.mrf.mxu0
    %v1418 = vadd.f32 %v714, %v1417
    %v1419 = vpop.f32.mrf.mxu0
    %v1420 = vadd.f32 %v718, %v1419
    %1421 = vmatprep.mubr.f32.mxu0 %v912
    %1422 = vmatmul.mubr.f32.gmra.mxu0 %v1273
    %v1423 = vpop.f32.mrf.mxu0
    %v1424 = vadd.f32 %v714, %v1423
    %v1425 = vpop.f32.mrf.mxu0
    %v1426 = vadd.f32 %v718, %v1425
    %1427 = vdwg.mxu0
    %v1428 = vmul.f32 %v1341, 0.5
    %v1429 = vmul.f32 %v1347, 0.5
    %v1430 = vtanh.pop %v1428
    %v1431 = vtanh.pop %v1429
    %v1432 = vmul.f32 %v1430, 0.5
    %v1433 = vmul.f32 %v1431, 0.5
    %v1434 = vadd.f32 %v1432, 0.5
    %v1435 = vadd.f32 %v1433, 0.5
    %v1436 = vmul.f32 %v1343, 0.5
    %v1437 = vmul.f32 %v1349, 0.5
    %v1438 = vtanh.pop %v1436
    %v1439 = vtanh.pop %v1437
    %v1440 = vmul.f32 %v1438, 0.5
    %v1441 = vmul.f32 %v1439, 0.5
    %v1442 = vadd.f32 %v1440, 0.5
    %v1443 = vadd.f32 %v1441, 0.5
    %v1444 = vtanh.pop %v1418
    %v1445 = vtanh.pop %v1424
    %v1446 = vmul.f32 %v1420, 0.5
    %v1447 = vmul.f32 %v1426, 0.5
    %v1448 = vtanh.pop %v1446
    %v1449 = vtanh.pop %v1447
    %v1450 = vmul.f32 %v1448, 0.5
    %v1451 = vmul.f32 %v1449, 0.5
    %v1452 = vadd.f32 %v1450, 0.5
    %v1453 = vadd.f32 %v1451, 0.5
    %v1454 = vmul.f32 %v1442, %v907
    %v1455 = vmul.f32 %v1443, %v908
    %v1456 = vmul.f32 %v1434, %v1444
    %v1457 = vmul.f32 %v1435, %v1445
    %v1458 = vadd.f32 %v1454, %v1456
    %v1459 = vadd.f32 %v1455, %v1457
    %v1460 = vtanh.pop %v1458
    %v1461 = vtanh.pop %v1459
    %v1462 = vmul.f32 %v1452, %v1460
    %v1463 = vmul.f32 %v1453, %v1461
    %s1464 = scalar_lea.vmem [#allocation6], 32
    %v1465 = vld [vmem:[%s1464] sm:$0xff]
    %v1466 = vld [vmem:[%s1464 + $0x8] sm:$0xff]
    %1467 = vmatprep.subr.mxu0 %v179
    %1468 = vmatpush1.msra.mxu0 %v178
    %1469 = vmatprep.subr.mxu0 %v175
    %1470 = vmatpush1.msra.mxu0 %v174
    %1471 = vmatprep.subr.mxu0 %v171
    %1472 = vmatpush1.msra.mxu0 %v170
    %1473 = vmatprep.subr.mxu0 %v167
    %1474 = vmatpush1.msra.mxu0 %v166
    %1475 = vmatprep.subr.mxu0 %v163
    %1476 = vmatpush1.msra.mxu0 %v162
    %1477 = vmatprep.subr.mxu0 %v159
    %1478 = vmatpush1.msra.mxu0 %v158
    %1479 = vmatprep.subr.mxu0 %v155
    %1480 = vmatpush1.msra.mxu0 %v154
    %1481 = vmatprep.subr.mxu0 %v151
    %1482 = vmatpush1.msra.mxu0 %v150
    %1483 = vmatprep.subr.mxu0 %v147
    %1484 = vmatpush1.msra.mxu0 %v146
    %1485 = vmatprep.subr.mxu0 %v143
    %1486 = vmatpush1.msra.mxu0 %v142
    %1487 = vmatprep.subr.mxu0 %v139
    %1488 = vmatpush1.msra.mxu0 %v138
    %1489 = vmatprep.subr.mxu0 %v135
    %1490 = vmatpush1.msra.mxu0 %v134
    %1491 = vmatprep.subr.mxu0 %v131
    %1492 = vmatpush1.msra.mxu0 %v130
    %1493 = vmatprep.subr.mxu0 %v127
    %1494 = vmatpush1.msra.mxu0 %v126
    %1495 = vmatprep.subr.mxu0 %v123
    %1496 = vmatpush1.msra.mxu0 %v122
    %1497 = vmatprep.subr.mxu0 %v119
    %1498 = vmatpush1.msra.mxu0 %v118
    %1499 = vmatprep.subr.mxu0 0.0
    %1500 = vmatpush2.msra.mxu0 0.0
    %1501 = vmatprep.subr.mxu0 0.0
    %1502 = vmatpush2.msra.mxu0 0.0
    %1503 = vmatprep.subr.mxu0 0.0
    %1504 = vmatpush2.msra.mxu0 0.0
    %1505 = vmatprep.subr.mxu0 0.0
    %1506 = vmatpush2.msra.mxu0 0.0
    %1507 = vmatprep.subr.mxu0 0.0
    %1508 = vmatpush2.msra.mxu0 0.0
    %1509 = vmatprep.subr.mxu0 0.0
    %1510 = vmatpush2.msra.mxu0 0.0
    %1511 = vmatprep.subr.mxu0 0.0
    %1512 = vmatpush2.msra.mxu0 0.0
    %1513 = vmatprep.subr.mxu0 0.0
    %1514 = vmatpush2.msra.mxu0 0.0
    %1515 = vmatprep.subr.mxu0 0.0
    %1516 = vmatpush2.msra.mxu0 0.0
    %1517 = vmatprep.subr.mxu0 0.0
    %1518 = vmatpush2.msra.mxu0 0.0
    %1519 = vmatprep.subr.mxu0 0.0
    %1520 = vmatpush2.msra.mxu0 0.0
    %1521 = vmatprep.subr.mxu0 0.0
    %1522 = vmatpush2.msra.mxu0 0.0
    %1523 = vmatprep.subr.mxu0 0.0
    %1524 = vmatpush2.msra.mxu0 0.0
    %1525 = vmatprep.subr.mxu0 0.0
    %1526 = vmatpush2.msra.mxu0 0.0
    %1527 = vmatprep.subr.mxu0 0.0
    %1528 = vmatpush2.msra.mxu0 0.0
    %1529 = vmatprep.subr.mxu0 0.0
    %1530 = vmatpush2.msra.mxu0 0.0
    %1531 = vmatprep.mubr.f32.mxu0 0.0
    %1532 = vmatmul.mubr.f32.gmra.mxu0 %v1272
    %v1533 = vpop.f32.mrf.mxu0
    %v1534 = vadd.f32 0.0, %v1533
    %v1535 = vpop.f32.mrf.mxu0
    %v1536 = vadd.f32 0.0, %v1535
    %1537 = vmatprep.mubr.f32.mxu0 0.0
    %1538 = vmatmul.mubr.f32.gmra.mxu0 %v1273
    %v1539 = vpop.f32.mrf.mxu0
    %v1540 = vadd.f32 0.0, %v1539
    %v1541 = vpop.f32.mrf.mxu0
    %v1542 = vadd.f32 0.0, %v1541
    %1543 = vdwg.mxu0
    %1544 = vmatprep.subr.mxu0 %v181
    %1545 = vmatpush1.msra.mxu0 %v180
    %1546 = vmatprep.subr.mxu0 %v177
    %1547 = vmatpush1.msra.mxu0 %v176
    %1548 = vmatprep.subr.mxu0 %v173
    %1549 = vmatpush1.msra.mxu0 %v172
    %1550 = vmatprep.subr.mxu0 %v169
    %1551 = vmatpush1.msra.mxu0 %v168
    %1552 = vmatprep.subr.mxu0 %v165
    %1553 = vmatpush1.msra.mxu0 %v164
    %1554 = vmatprep.subr.mxu0 %v161
    %1555 = vmatpush1.msra.mxu0 %v160
    %1556 = vmatprep.subr.mxu0 %v157
    %1557 = vmatpush1.msra.mxu0 %v156
    %1558 = vmatprep.subr.mxu0 %v153
    %1559 = vmatpush1.msra.mxu0 %v152
    %1560 = vmatprep.subr.mxu0 %v149
    %1561 = vmatpush1.msra.mxu0 %v148
    %1562 = vmatprep.subr.mxu0 %v145
    %1563 = vmatpush1.msra.mxu0 %v144
    %1564 = vmatprep.subr.mxu0 %v141
    %1565 = vmatpush1.msra.mxu0 %v140
    %1566 = vmatprep.subr.mxu0 %v137
    %1567 = vmatpush1.msra.mxu0 %v136
    %1568 = vmatprep.subr.mxu0 %v133
    %1569 = vmatpush1.msra.mxu0 %v132
    %1570 = vmatprep.subr.mxu0 %v129
    %1571 = vmatpush1.msra.mxu0 %v128
    %1572 = vmatprep.subr.mxu0 %v125
    %1573 = vmatpush1.msra.mxu0 %v124
    %1574 = vmatprep.subr.mxu0 %v121
    %1575 = vmatpush1.msra.mxu0 %v120
    %1576 = vmatprep.subr.mxu0 0.0
    %1577 = vmatpush2.msra.mxu0 0.0
    %1578 = vmatprep.subr.mxu0 0.0
    %1579 = vmatpush2.msra.mxu0 0.0
    %1580 = vmatprep.subr.mxu0 0.0
    %1581 = vmatpush2.msra.mxu0 0.0
    %1582 = vmatprep.subr.mxu0 0.0
    %1583 = vmatpush2.msra.mxu0 0.0
    %1584 = vmatprep.subr.mxu0 0.0
    %1585 = vmatpush2.msra.mxu0 0.0
    %1586 = vmatprep.subr.mxu0 0.0
    %1587 = vmatpush2.msra.mxu0 0.0
    %1588 = vmatprep.subr.mxu0 0.0
    %1589 = vmatpush2.msra.mxu0 0.0
    %1590 = vmatprep.subr.mxu0 0.0
    %1591 = vmatpush2.msra.mxu0 0.0
    %1592 = vmatprep.subr.mxu0 0.0
    %1593 = vmatpush2.msra.mxu0 0.0
    %1594 = vmatprep.subr.mxu0 0.0
    %1595 = vmatpush2.msra.mxu0 0.0
    %1596 = vmatprep.subr.mxu0 0.0
    %1597 = vmatpush2.msra.mxu0 0.0
    %1598 = vmatprep.subr.mxu0 0.0
    %1599 = vmatpush2.msra.mxu0 0.0
    %1600 = vmatprep.subr.mxu0 0.0
    %1601 = vmatpush2.msra.mxu0 0.0
    %1602 = vmatprep.subr.mxu0 0.0
    %1603 = vmatpush2.msra.mxu0 0.0
    %1604 = vmatprep.subr.mxu0 0.0
    %1605 = vmatpush2.msra.mxu0 0.0
    %1606 = vmatprep.subr.mxu0 0.0
    %1607 = vmatpush2.msra.mxu0 0.0
    %1608 = vmatprep.mubr.f32.mxu0 0.0
    %1609 = vmatmul.mubr.f32.gmra.mxu0 %v1272
    %v1610 = vpop.f32.mrf.mxu0
    %v1611 = vadd.f32 0.0, %v1610
    %v1612 = vpop.f32.mrf.mxu0
    %v1613 = vadd.f32 0.0, %v1612
    %1614 = vmatprep.mubr.f32.mxu0 0.0
    %1615 = vmatmul.mubr.f32.gmra.mxu0 %v1273
    %v1616 = vpop.f32.mrf.mxu0
    %v1617 = vadd.f32 0.0, %v1616
    %v1618 = vpop.f32.mrf.mxu0
    %v1619 = vadd.f32 0.0, %v1618
    %1620 = vdwg.mxu0
    %v1622 = vsel %vm476, %v1465, 0
    %v1625 = vsel %vm476, %v1466, 0
    %1627 = vmatprep.subr.mxu0 0.0
    %1628 = vmatpush1.msra.mxu0 0.0
    %1629 = vmatprep.subr.mxu0 0.0
    %1630 = vmatpush1.msra.mxu0 0.0
    %1631 = vmatprep.subr.mxu0 0.0
    %1632 = vmatpush1.msra.mxu0 0.0
    %1633 = vmatprep.subr.mxu0 0.0
    %1634 = vmatpush1.msra.mxu0 0.0
    %1635 = vmatprep.subr.mxu0 0.0
    %1636 = vmatpush1.msra.mxu0 0.0
    %1637 = vmatprep.subr.mxu0 0.0
    %1638 = vmatpush1.msra.mxu0 0.0
    %1639 = vmatprep.subr.mxu0 0.0
    %1640 = vmatpush1.msra.mxu0 0.0
    %1641 = vmatprep.subr.mxu0 0.0
    %1642 = vmatpush1.msra.mxu0 0.0
    %1643 = vmatprep.subr.mxu0 0.0
    %1644 = vmatpush1.msra.mxu0 0.0
    %1645 = vmatprep.subr.mxu0 0.0
    %1646 = vmatpush1.msra.mxu0 0.0
    %1647 = vmatprep.subr.mxu0 0.0
    %1648 = vmatpush1.msra.mxu0 0.0
    %1649 = vmatprep.subr.mxu0 0.0
    %1650 = vmatpush1.msra.mxu0 0.0
    %1651 = vmatprep.subr.mxu0 0.0
    %1652 = vmatpush1.msra.mxu0 0.0
    %1653 = vmatprep.subr.mxu0 0.0
    %1654 = vmatpush1.msra.mxu0 0.0
    %1655 = vmatprep.subr.mxu0 %v115
    %1656 = vmatpush1.msra.mxu0 %v114
    %1657 = vmatprep.subr.mxu0 %v111
    %1658 = vmatpush1.msra.mxu0 %v110
    %1659 = vmatprep.subr.mxu0 0.0
    %1660 = vmatpush2.msra.mxu0 0.0
    %1661 = vmatprep.subr.mxu0 0.0
    %1662 = vmatpush2.msra.mxu0 0.0
    %1663 = vmatprep.subr.mxu0 0.0
    %1664 = vmatpush2.msra.mxu0 0.0
    %1665 = vmatprep.subr.mxu0 0.0
    %1666 = vmatpush2.msra.mxu0 0.0
    %1667 = vmatprep.subr.mxu0 0.0
    %1668 = vmatpush2.msra.mxu0 0.0
    %1669 = vmatprep.subr.mxu0 0.0
    %1670 = vmatpush2.msra.mxu0 0.0
    %1671 = vmatprep.subr.mxu0 0.0
    %1672 = vmatpush2.msra.mxu0 0.0
    %1673 = vmatprep.subr.mxu0 0.0
    %1674 = vmatpush2.msra.mxu0 0.0
    %1675 = vmatprep.subr.mxu0 0.0
    %1676 = vmatpush2.msra.mxu0 0.0
    %1677 = vmatprep.subr.mxu0 0.0
    %1678 = vmatpush2.msra.mxu0 0.0
    %1679 = vmatprep.subr.mxu0 0.0
    %1680 = vmatpush2.msra.mxu0 0.0
    %1681 = vmatprep.subr.mxu0 0.0
    %1682 = vmatpush2.msra.mxu0 0.0
    %1683 = vmatprep.subr.mxu0 0.0
    %1684 = vmatpush2.msra.mxu0 0.0
    %1685 = vmatprep.subr.mxu0 0.0
    %1686 = vmatpush2.msra.mxu0 0.0
    %1687 = vmatprep.subr.mxu0 0.0
    %1688 = vmatpush2.msra.mxu0 0.0
    %1689 = vmatprep.subr.mxu0 0.0
    %1690 = vmatpush2.msra.mxu0 0.0
    %1691 = vmatprep.mubr.f32.mxu0 0.0
    %1692 = vmatmul.mubr.f32.gmra.mxu0 %v1622
    %v1693 = vpop.f32.mrf.mxu0
    %v1694 = vadd.f32 %v1534, %v1693
    %v1695 = vpop.f32.mrf.mxu0
    %v1696 = vadd.f32 %v1536, %v1695
    %1697 = vmatprep.mubr.f32.mxu0 0.0
    %1698 = vmatmul.mubr.f32.gmra.mxu0 %v1625
    %v1699 = vpop.f32.mrf.mxu0
    %v1700 = vadd.f32 %v1540, %v1699
    %v1701 = vpop.f32.mrf.mxu0
    %v1702 = vadd.f32 %v1542, %v1701
    %1703 = vdwg.mxu0
    %1704 = vmatprep.subr.mxu0 0.0
    %1705 = vmatpush1.msra.mxu0 0.0
    %1706 = vmatprep.subr.mxu0 0.0
    %1707 = vmatpush1.msra.mxu0 0.0
    %1708 = vmatprep.subr.mxu0 0.0
    %1709 = vmatpush1.msra.mxu0 0.0
    %1710 = vmatprep.subr.mxu0 0.0
    %1711 = vmatpush1.msra.mxu0 0.0
    %1712 = vmatprep.subr.mxu0 0.0
    %1713 = vmatpush1.msra.mxu0 0.0
    %1714 = vmatprep.subr.mxu0 0.0
    %1715 = vmatpush1.msra.mxu0 0.0
    %1716 = vmatprep.subr.mxu0 0.0
    %1717 = vmatpush1.msra.mxu0 0.0
    %1718 = vmatprep.subr.mxu0 0.0
    %1719 = vmatpush1.msra.mxu0 0.0
    %1720 = vmatprep.subr.mxu0 0.0
    %1721 = vmatpush1.msra.mxu0 0.0
    %1722 = vmatprep.subr.mxu0 0.0
    %1723 = vmatpush1.msra.mxu0 0.0
    %1724 = vmatprep.subr.mxu0 0.0
    %1725 = vmatpush1.msra.mxu0 0.0
    %1726 = vmatprep.subr.mxu0 0.0
    %1727 = vmatpush1.msra.mxu0 0.0
    %1728 = vmatprep.subr.mxu0 0.0
    %1729 = vmatpush1.msra.mxu0 0.0
    %1730 = vmatprep.subr.mxu0 0.0
    %1731 = vmatpush1.msra.mxu0 0.0
    %1732 = vmatprep.subr.mxu0 %v117
    %1733 = vmatpush1.msra.mxu0 %v116
    %1734 = vmatprep.subr.mxu0 %v113
    %1735 = vmatpush1.msra.mxu0 %v112
    %1736 = vmatprep.subr.mxu0 0.0
    %1737 = vmatpush2.msra.mxu0 0.0
    %1738 = vmatprep.subr.mxu0 0.0
    %1739 = vmatpush2.msra.mxu0 0.0
    %1740 = vmatprep.subr.mxu0 0.0
    %1741 = vmatpush2.msra.mxu0 0.0
    %1742 = vmatprep.subr.mxu0 0.0
    %1743 = vmatpush2.msra.mxu0 0.0
    %1744 = vmatprep.subr.mxu0 0.0
    %1745 = vmatpush2.msra.mxu0 0.0
    %1746 = vmatprep.subr.mxu0 0.0
    %1747 = vmatpush2.msra.mxu0 0.0
    %1748 = vmatprep.subr.mxu0 0.0
    %1749 = vmatpush2.msra.mxu0 0.0
    %1750 = vmatprep.subr.mxu0 0.0
    %1751 = vmatpush2.msra.mxu0 0.0
    %1752 = vmatprep.subr.mxu0 0.0
    %1753 = vmatpush2.msra.mxu0 0.0
    %1754 = vmatprep.subr.mxu0 0.0
    %1755 = vmatpush2.msra.mxu0 0.0
    %1756 = vmatprep.subr.mxu0 0.0
    %1757 = vmatpush2.msra.mxu0 0.0
    %1758 = vmatprep.subr.mxu0 0.0
    %1759 = vmatpush2.msra.mxu0 0.0
    %1760 = vmatprep.subr.mxu0 0.0
    %1761 = vmatpush2.msra.mxu0 0.0
    %1762 = vmatprep.subr.mxu0 0.0
    %1763 = vmatpush2.msra.mxu0 0.0
    %1764 = vmatprep.subr.mxu0 0.0
    %1765 = vmatpush2.msra.mxu0 0.0
    %1766 = vmatprep.subr.mxu0 0.0
    %1767 = vmatpush2.msra.mxu0 0.0
    %1768 = vmatprep.mubr.f32.mxu0 0.0
    %1769 = vmatmul.mubr.f32.gmra.mxu0 %v1622
    %v1770 = vpop.f32.mrf.mxu0
    %v1771 = vadd.f32 %v1611, %v1770
    %v1772 = vpop.f32.mrf.mxu0
    %v1773 = vadd.f32 %v1613, %v1772
    %1774 = vmatprep.mubr.f32.mxu0 0.0
    %1775 = vmatmul.mubr.f32.gmra.mxu0 %v1625
    %v1776 = vpop.f32.mrf.mxu0
    %v1777 = vadd.f32 %v1617, %v1776
    %v1778 = vpop.f32.mrf.mxu0
    %v1779 = vadd.f32 %v1619, %v1778
    %1780 = vdwg.mxu0
    %v1781 = vadd.f32 %v1694, %v641
    %v1782 = vadd.f32 %v1696, %v645
    %v1783 = vadd.f32 %v1771, %v649
    %v1784 = vadd.f32 %v1773, %v653
    %v1785 = vadd.f32 %v1700, %v641
    %v1786 = vadd.f32 %v1702, %v645
    %v1787 = vadd.f32 %v1777, %v649
    %v1788 = vadd.f32 %v1779, %v653
    %v1789 = vmul.f32 %v1781, 0.5
    %v1790 = vmul.f32 %v1785, 0.5
    %v1791 = vtanh.pop %v1789
    %v1792 = vtanh.pop %v1790
    %v1793 = vmul.f32 %v1791, 0.5
    %v1794 = vmul.f32 %v1792, 0.5
    %v1795 = vadd.f32 %v1793, 0.5
    %v1796 = vadd.f32 %v1794, 0.5
    %v1797 = vmul.f32 %v1782, 0.5
    %v1798 = vmul.f32 %v1786, 0.5
    %v1799 = vtanh.pop %v1797
    %v1800 = vtanh.pop %v1798
    %v1801 = vmul.f32 %v1799, 0.5
    %v1802 = vmul.f32 %v1800, 0.5
    %v1803 = vadd.f32 %v1801, 0.5
    %v1804 = vadd.f32 %v1802, 0.5
    %v1805 = vtanh.pop %v1783
    %v1806 = vtanh.pop %v1787
    %v1807 = vmul.f32 %v1784, 0.5
    %v1808 = vmul.f32 %v1788, 0.5
    %v1809 = vtanh.pop %v1807
    %v1810 = vtanh.pop %v1808
    %v1811 = vmul.f32 %v1809, 0.5
    %v1812 = vmul.f32 %v1810, 0.5
    %v1813 = vadd.f32 %v1811, 0.5
    %v1814 = vadd.f32 %v1812, 0.5
    %v1815 = vmul.f32 %v1803, %v1268
    %v1816 = vmul.f32 %v1804, %v1269
    %v1817 = vmul.f32 %v1795, %v1805
    %v1818 = vmul.f32 %v1796, %v1806
    %v1819 = vadd.f32 %v1815, %v1817
    %v1820 = vadd.f32 %v1816, %v1818
    %v1821 = vtanh.pop %v1819
    %v1822 = vtanh.pop %v1820
    %v1823 = vmul.f32 %v1813, %v1821
    %v1824 = vmul.f32 %v1814, %v1822
    %1825 = vmatprep.subr.mxu0 %v243
    %1826 = vmatpush1.msra.mxu0 %v242
    %1827 = vmatprep.subr.mxu0 %v239
    %1828 = vmatpush1.msra.mxu0 %v238
    %1829 = vmatprep.subr.mxu0 %v235
    %1830 = vmatpush1.msra.mxu0 %v234
    %1831 = vmatprep.subr.mxu0 %v231
    %1832 = vmatpush1.msra.mxu0 %v230
    %1833 = vmatprep.subr.mxu0 %v227
    %1834 = vmatpush1.msra.mxu0 %v226
    %1835 = vmatprep.subr.mxu0 %v223
    %1836 = vmatpush1.msra.mxu0 %v222
    %1837 = vmatprep.subr.mxu0 %v219
    %1838 = vmatpush1.msra.mxu0 %v218
    %1839 = vmatprep.subr.mxu0 %v215
    %1840 = vmatpush1.msra.mxu0 %v214
    %1841 = vmatprep.subr.mxu0 %v211
    %1842 = vmatpush1.msra.mxu0 %v210
    %1843 = vmatprep.subr.mxu0 %v207
    %1844 = vmatpush1.msra.mxu0 %v206
    %1845 = vmatprep.subr.mxu0 %v203
    %1846 = vmatpush1.msra.mxu0 %v202
    %1847 = vmatprep.subr.mxu0 %v199
    %1848 = vmatpush1.msra.mxu0 %v198
    %1849 = vmatprep.subr.mxu0 %v195
    %1850 = vmatpush1.msra.mxu0 %v194
    %1851 = vmatprep.subr.mxu0 %v191
    %1852 = vmatpush1.msra.mxu0 %v190
    %1853 = vmatprep.subr.mxu0 %v187
    %1854 = vmatpush1.msra.mxu0 %v186
    %1855 = vmatprep.subr.mxu0 %v183
    %1856 = vmatpush1.msra.mxu0 %v182
    %1857 = vmatprep.subr.mxu0 %v307
    %1858 = vmatpush2.msra.mxu0 %v306
    %1859 = vmatprep.subr.mxu0 %v303
    %1860 = vmatpush2.msra.mxu0 %v302
    %1861 = vmatprep.subr.mxu0 %v299
    %1862 = vmatpush2.msra.mxu0 %v298
    %1863 = vmatprep.subr.mxu0 %v295
    %1864 = vmatpush2.msra.mxu0 %v294
    %1865 = vmatprep.subr.mxu0 %v291
    %1866 = vmatpush2.msra.mxu0 %v290
    %1867 = vmatprep.subr.mxu0 %v287
    %1868 = vmatpush2.msra.mxu0 %v286
    %1869 = vmatprep.subr.mxu0 %v283
    %1870 = vmatpush2.msra.mxu0 %v282
    %1871 = vmatprep.subr.mxu0 %v279
    %1872 = vmatpush2.msra.mxu0 %v278
    %1873 = vmatprep.subr.mxu0 %v275
    %1874 = vmatpush2.msra.mxu0 %v274
    %1875 = vmatprep.subr.mxu0 %v271
    %1876 = vmatpush2.msra.mxu0 %v270
    %1877 = vmatprep.subr.mxu0 %v267
    %1878 = vmatpush2.msra.mxu0 %v266
    %1879 = vmatprep.subr.mxu0 %v263
    %1880 = vmatpush2.msra.mxu0 %v262
    %1881 = vmatprep.subr.mxu0 %v259
    %1882 = vmatpush2.msra.mxu0 %v258
    %1883 = vmatprep.subr.mxu0 %v255
    %1884 = vmatpush2.msra.mxu0 %v254
    %1885 = vmatprep.subr.mxu0 %v251
    %1886 = vmatpush2.msra.mxu0 %v250
    %1887 = vmatprep.subr.mxu0 %v247
    %1888 = vmatpush2.msra.mxu0 %v246
    %1889 = vmatprep.mubr.f32.mxu0 %v1462
    %1890 = vmatmul.mubr.f32.gmra.mxu0 %v1823
    %v1891 = vpop.f32.mrf.mxu0
    %v1892 = vadd.f32 %v706, %v1891
    %v1893 = vpop.f32.mrf.mxu0
    %v1894 = vadd.f32 %v710, %v1893
    %1895 = vmatprep.mubr.f32.mxu0 %v1463
    %1896 = vmatmul.mubr.f32.gmra.mxu0 %v1824
    %v1897 = vpop.f32.mrf.mxu0
    %v1898 = vadd.f32 %v706, %v1897
    %v1899 = vpop.f32.mrf.mxu0
    %v1900 = vadd.f32 %v710, %v1899
    %1901 = vdwg.mxu0
    %1902 = vmatprep.subr.mxu0 %v245
    %1903 = vmatpush1.msra.mxu0 %v244
    %1904 = vmatprep.subr.mxu0 %v241
    %1905 = vmatpush1.msra.mxu0 %v240
    %1906 = vmatprep.subr.mxu0 %v237
    %1907 = vmatpush1.msra.mxu0 %v236
    %1908 = vmatprep.subr.mxu0 %v233
    %1909 = vmatpush1.msra.mxu0 %v232
    %1910 = vmatprep.subr.mxu0 %v229
    %1911 = vmatpush1.msra.mxu0 %v228
    %1912 = vmatprep.subr.mxu0 %v225
    %1913 = vmatpush1.msra.mxu0 %v224
    %1914 = vmatprep.subr.mxu0 %v221
    %1915 = vmatpush1.msra.mxu0 %v220
    %1916 = vmatprep.subr.mxu0 %v217
    %1917 = vmatpush1.msra.mxu0 %v216
    %1918 = vmatprep.subr.mxu0 %v213
    %1919 = vmatpush1.msra.mxu0 %v212
    %1920 = vmatprep.subr.mxu0 %v209
    %1921 = vmatpush1.msra.mxu0 %v208
    %1922 = vmatprep.subr.mxu0 %v205
    %1923 = vmatpush1.msra.mxu0 %v204
    %1924 = vmatprep.subr.mxu0 %v201
    %1925 = vmatpush1.msra.mxu0 %v200
    %1926 = vmatprep.subr.mxu0 %v197
    %1927 = vmatpush1.msra.mxu0 %v196
    %1928 = vmatprep.subr.mxu0 %v193
    %1929 = vmatpush1.msra.mxu0 %v192
    %1930 = vmatprep.subr.mxu0 %v189
    %1931 = vmatpush1.msra.mxu0 %v188
    %1932 = vmatprep.subr.mxu0 %v185
    %1933 = vmatpush1.msra.mxu0 %v184
    %1934 = vmatprep.subr.mxu0 %v309
    %1935 = vmatpush2.msra.mxu0 %v308
    %1936 = vmatprep.subr.mxu0 %v305
    %1937 = vmatpush2.msra.mxu0 %v304
    %1938 = vmatprep.subr.mxu0 %v301
    %1939 = vmatpush2.msra.mxu0 %v300
    %1940 = vmatprep.subr.mxu0 %v297
    %1941 = vmatpush2.msra.mxu0 %v296
    %1942 = vmatprep.subr.mxu0 %v293
    %1943 = vmatpush2.msra.mxu0 %v292
    %1944 = vmatprep.subr.mxu0 %v289
    %1945 = vmatpush2.msra.mxu0 %v288
    %1946 = vmatprep.subr.mxu0 %v285
    %1947 = vmatpush2.msra.mxu0 %v284
    %1948 = vmatprep.subr.mxu0 %v281
    %1949 = vmatpush2.msra.mxu0 %v280
    %1950 = vmatprep.subr.mxu0 %v277
    %1951 = vmatpush2.msra.mxu0 %v276
    %1952 = vmatprep.subr.mxu0 %v273
    %1953 = vmatpush2.msra.mxu0 %v272
    %1954 = vmatprep.subr.mxu0 %v269
    %1955 = vmatpush2.msra.mxu0 %v268
    %1956 = vmatprep.subr.mxu0 %v265
    %1957 = vmatpush2.msra.mxu0 %v264
    %1958 = vmatprep.subr.mxu0 %v261
    %1959 = vmatpush2.msra.mxu0 %v260
    %1960 = vmatprep.subr.mxu0 %v257
    %1961 = vmatpush2.msra.mxu0 %v256
    %1962 = vmatprep.subr.mxu0 %v253
    %1963 = vmatpush2.msra.mxu0 %v252
    %1964 = vmatprep.subr.mxu0 %v249
    %1965 = vmatpush2.msra.mxu0 %v248
    %1966 = vmatprep.mubr.f32.mxu0 %v1462
    %1967 = vmatmul.mubr.f32.gmra.mxu0 %v1823
    %v1968 = vpop.f32.mrf.mxu0
    %v1969 = vadd.f32 %v714, %v1968
    %v1970 = vpop.f32.mrf.mxu0
    %v1971 = vadd.f32 %v718, %v1970
    %1972 = vmatprep.mubr.f32.mxu0 %v1463
    %1973 = vmatmul.mubr.f32.gmra.mxu0 %v1824
    %v1974 = vpop.f32.mrf.mxu0
    %v1975 = vadd.f32 %v714, %v1974
    %v1976 = vpop.f32.mrf.mxu0
    %v1977 = vadd.f32 %v718, %v1976
    %1978 = vdwg.mxu0
    %v1979 = vmul.f32 %v1892, 0.5
    %v1980 = vmul.f32 %v1898, 0.5
    %v1981 = vtanh.pop %v1979
    %v1982 = vtanh.pop %v1980
    %v1983 = vmul.f32 %v1981, 0.5
    %v1984 = vmul.f32 %v1982, 0.5
    %v1985 = vadd.f32 %v1983, 0.5
    %v1986 = vadd.f32 %v1984, 0.5
    %v1987 = vmul.f32 %v1894, 0.5
    %v1988 = vmul.f32 %v1900, 0.5
    %v1989 = vtanh.pop %v1987
    %v1990 = vtanh.pop %v1988
    %v1991 = vmul.f32 %v1989, 0.5
    %v1992 = vmul.f32 %v1990, 0.5
    %v1993 = vadd.f32 %v1991, 0.5
    %v1994 = vadd.f32 %v1992, 0.5
    %v1995 = vtanh.pop %v1969
    %v1996 = vtanh.pop %v1975
    %v1997 = vmul.f32 %v1971, 0.5
    %v1998 = vmul.f32 %v1977, 0.5
    %v1999 = vtanh.pop %v1997
    %v2000 = vtanh.pop %v1998
    %v2001 = vmul.f32 %v1999, 0.5
    %v2002 = vmul.f32 %v2000, 0.5
    %v2003 = vadd.f32 %v2001, 0.5
    %v2004 = vadd.f32 %v2002, 0.5
    %v2005 = vmul.f32 %v1993, %v1458
    %v2006 = vmul.f32 %v1994, %v1459
    %v2007 = vmul.f32 %v1985, %v1995
    %v2008 = vmul.f32 %v1986, %v1996
    %v2009 = vadd.f32 %v2005, %v2007
    %v2010 = vadd.f32 %v2006, %v2008
    %v2011 = vtanh.pop %v2009
    %v2012 = vtanh.pop %v2010
    %v2013 = vmul.f32 %v2003, %v2011
    %v2014 = vmul.f32 %v2004, %v2012
    %s2015 = scalar_lea.vmem [#allocation6], 48
    %v2016 = vld [vmem:[%s2015] sm:$0xff]
    %v2017 = vld [vmem:[%s2015 + $0x8] sm:$0xff]
    %2018 = vmatprep.subr.mxu0 %v179
    %2019 = vmatpush1.msra.mxu0 %v178
    %2020 = vmatprep.subr.mxu0 %v175
    %2021 = vmatpush1.msra.mxu0 %v174
    %2022 = vmatprep.subr.mxu0 %v171
    %2023 = vmatpush1.msra.mxu0 %v170
    %2024 = vmatprep.subr.mxu0 %v167
    %2025 = vmatpush1.msra.mxu0 %v166
    %2026 = vmatprep.subr.mxu0 %v163
    %2027 = vmatpush1.msra.mxu0 %v162
    %2028 = vmatprep.subr.mxu0 %v159
    %2029 = vmatpush1.msra.mxu0 %v158
    %2030 = vmatprep.subr.mxu0 %v155
    %2031 = vmatpush1.msra.mxu0 %v154
    %2032 = vmatprep.subr.mxu0 %v151
    %2033 = vmatpush1.msra.mxu0 %v150
    %2034 = vmatprep.subr.mxu0 %v147
    %2035 = vmatpush1.msra.mxu0 %v146
    %2036 = vmatprep.subr.mxu0 %v143
    %2037 = vmatpush1.msra.mxu0 %v142
    %2038 = vmatprep.subr.mxu0 %v139
    %2039 = vmatpush1.msra.mxu0 %v138
    %2040 = vmatprep.subr.mxu0 %v135
    %2041 = vmatpush1.msra.mxu0 %v134
    %2042 = vmatprep.subr.mxu0 %v131
    %2043 = vmatpush1.msra.mxu0 %v130
    %2044 = vmatprep.subr.mxu0 %v127
    %2045 = vmatpush1.msra.mxu0 %v126
    %2046 = vmatprep.subr.mxu0 %v123
    %2047 = vmatpush1.msra.mxu0 %v122
    %2048 = vmatprep.subr.mxu0 %v119
    %2049 = vmatpush1.msra.mxu0 %v118
    %2050 = vmatprep.subr.mxu0 0.0
    %2051 = vmatpush2.msra.mxu0 0.0
    %2052 = vmatprep.subr.mxu0 0.0
    %2053 = vmatpush2.msra.mxu0 0.0
    %2054 = vmatprep.subr.mxu0 0.0
    %2055 = vmatpush2.msra.mxu0 0.0
    %2056 = vmatprep.subr.mxu0 0.0
    %2057 = vmatpush2.msra.mxu0 0.0
    %2058 = vmatprep.subr.mxu0 0.0
    %2059 = vmatpush2.msra.mxu0 0.0
    %2060 = vmatprep.subr.mxu0 0.0
    %2061 = vmatpush2.msra.mxu0 0.0
    %2062 = vmatprep.subr.mxu0 0.0
    %2063 = vmatpush2.msra.mxu0 0.0
    %2064 = vmatprep.subr.mxu0 0.0
    %2065 = vmatpush2.msra.mxu0 0.0
    %2066 = vmatprep.subr.mxu0 0.0
    %2067 = vmatpush2.msra.mxu0 0.0
    %2068 = vmatprep.subr.mxu0 0.0
    %2069 = vmatpush2.msra.mxu0 0.0
    %2070 = vmatprep.subr.mxu0 0.0
    %2071 = vmatpush2.msra.mxu0 0.0
    %2072 = vmatprep.subr.mxu0 0.0
    %2073 = vmatpush2.msra.mxu0 0.0
    %2074 = vmatprep.subr.mxu0 0.0
    %2075 = vmatpush2.msra.mxu0 0.0
    %2076 = vmatprep.subr.mxu0 0.0
    %2077 = vmatpush2.msra.mxu0 0.0
    %2078 = vmatprep.subr.mxu0 0.0
    %2079 = vmatpush2.msra.mxu0 0.0
    %2080 = vmatprep.subr.mxu0 0.0
    %2081 = vmatpush2.msra.mxu0 0.0
    %2082 = vmatprep.mubr.f32.mxu0 0.0
    %2083 = vmatmul.mubr.f32.gmra.mxu0 %v1823
    %v2084 = vpop.f32.mrf.mxu0
    %v2085 = vadd.f32 0.0, %v2084
    %v2086 = vpop.f32.mrf.mxu0
    %v2087 = vadd.f32 0.0, %v2086
    %2088 = vmatprep.mubr.f32.mxu0 0.0
    %2089 = vmatmul.mubr.f32.gmra.mxu0 %v1824
    %v2090 = vpop.f32.mrf.mxu0
    %v2091 = vadd.f32 0.0, %v2090
    %v2092 = vpop.f32.mrf.mxu0
    %v2093 = vadd.f32 0.0, %v2092
    %2094 = vdwg.mxu0
    %2095 = vmatprep.subr.mxu0 %v181
    %2096 = vmatpush1.msra.mxu0 %v180
    %2097 = vmatprep.subr.mxu0 %v177
    %2098 = vmatpush1.msra.mxu0 %v176
    %2099 = vmatprep.subr.mxu0 %v173
    %2100 = vmatpush1.msra.mxu0 %v172
    %2101 = vmatprep.subr.mxu0 %v169
    %2102 = vmatpush1.msra.mxu0 %v168
    %2103 = vmatprep.subr.mxu0 %v165
    %2104 = vmatpush1.msra.mxu0 %v164
    %2105 = vmatprep.subr.mxu0 %v161
    %2106 = vmatpush1.msra.mxu0 %v160
    %2107 = vmatprep.subr.mxu0 %v157
    %2108 = vmatpush1.msra.mxu0 %v156
    %2109 = vmatprep.subr.mxu0 %v153
    %2110 = vmatpush1.msra.mxu0 %v152
    %2111 = vmatprep.subr.mxu0 %v149
    %2112 = vmatpush1.msra.mxu0 %v148
    %2113 = vmatprep.subr.mxu0 %v145
    %2114 = vmatpush1.msra.mxu0 %v144
    %2115 = vmatprep.subr.mxu0 %v141
    %2116 = vmatpush1.msra.mxu0 %v140
    %2117 = vmatprep.subr.mxu0 %v137
    %2118 = vmatpush1.msra.mxu0 %v136
    %2119 = vmatprep.subr.mxu0 %v133
    %2120 = vmatpush1.msra.mxu0 %v132
    %2121 = vmatprep.subr.mxu0 %v129
    %2122 = vmatpush1.msra.mxu0 %v128
    %2123 = vmatprep.subr.mxu0 %v125
    %2124 = vmatpush1.msra.mxu0 %v124
    %2125 = vmatprep.subr.mxu0 %v121
    %2126 = vmatpush1.msra.mxu0 %v120
    %2127 = vmatprep.subr.mxu0 0.0
    %2128 = vmatpush2.msra.mxu0 0.0
    %2129 = vmatprep.subr.mxu0 0.0
    %2130 = vmatpush2.msra.mxu0 0.0
    %2131 = vmatprep.subr.mxu0 0.0
    %2132 = vmatpush2.msra.mxu0 0.0
    %2133 = vmatprep.subr.mxu0 0.0
    %2134 = vmatpush2.msra.mxu0 0.0
    %2135 = vmatprep.subr.mxu0 0.0
    %2136 = vmatpush2.msra.mxu0 0.0
    %2137 = vmatprep.subr.mxu0 0.0
    %2138 = vmatpush2.msra.mxu0 0.0
    %2139 = vmatprep.subr.mxu0 0.0
    %2140 = vmatpush2.msra.mxu0 0.0
    %2141 = vmatprep.subr.mxu0 0.0
    %2142 = vmatpush2.msra.mxu0 0.0
    %2143 = vmatprep.subr.mxu0 0.0
    %2144 = vmatpush2.msra.mxu0 0.0
    %2145 = vmatprep.subr.mxu0 0.0
    %2146 = vmatpush2.msra.mxu0 0.0
    %2147 = vmatprep.subr.mxu0 0.0
    %2148 = vmatpush2.msra.mxu0 0.0
    %2149 = vmatprep.subr.mxu0 0.0
    %2150 = vmatpush2.msra.mxu0 0.0
    %2151 = vmatprep.subr.mxu0 0.0
    %2152 = vmatpush2.msra.mxu0 0.0
    %2153 = vmatprep.subr.mxu0 0.0
    %2154 = vmatpush2.msra.mxu0 0.0
    %2155 = vmatprep.subr.mxu0 0.0
    %2156 = vmatpush2.msra.mxu0 0.0
    %2157 = vmatprep.subr.mxu0 0.0
    %2158 = vmatpush2.msra.mxu0 0.0
    %2159 = vmatprep.mubr.f32.mxu0 0.0
    %2160 = vmatmul.mubr.f32.gmra.mxu0 %v1823
    %v2161 = vpop.f32.mrf.mxu0
    %v2162 = vadd.f32 0.0, %v2161
    %v2163 = vpop.f32.mrf.mxu0
    %v2164 = vadd.f32 0.0, %v2163
    %2165 = vmatprep.mubr.f32.mxu0 0.0
    %2166 = vmatmul.mubr.f32.gmra.mxu0 %v1824
    %v2167 = vpop.f32.mrf.mxu0
    %v2168 = vadd.f32 0.0, %v2167
    %v2169 = vpop.f32.mrf.mxu0
    %v2170 = vadd.f32 0.0, %v2169
    %2171 = vdwg.mxu0
    %v2173 = vsel %vm476, %v2016, 0
    %v2176 = vsel %vm476, %v2017, 0
    %2178 = vmatprep.subr.mxu0 0.0
    %2179 = vmatpush1.msra.mxu0 0.0
    %2180 = vmatprep.subr.mxu0 0.0
    %2181 = vmatpush1.msra.mxu0 0.0
    %2182 = vmatprep.subr.mxu0 0.0
    %2183 = vmatpush1.msra.mxu0 0.0
    %2184 = vmatprep.subr.mxu0 0.0
    %2185 = vmatpush1.msra.mxu0 0.0
    %2186 = vmatprep.subr.mxu0 0.0
    %2187 = vmatpush1.msra.mxu0 0.0
    %2188 = vmatprep.subr.mxu0 0.0
    %2189 = vmatpush1.msra.mxu0 0.0
    %2190 = vmatprep.subr.mxu0 0.0
    %2191 = vmatpush1.msra.mxu0 0.0
    %2192 = vmatprep.subr.mxu0 0.0
    %2193 = vmatpush1.msra.mxu0 0.0
    %2194 = vmatprep.subr.mxu0 0.0
    %2195 = vmatpush1.msra.mxu0 0.0
    %2196 = vmatprep.subr.mxu0 0.0
    %2197 = vmatpush1.msra.mxu0 0.0
    %2198 = vmatprep.subr.mxu0 0.0
    %2199 = vmatpush1.msra.mxu0 0.0
    %2200 = vmatprep.subr.mxu0 0.0
    %2201 = vmatpush1.msra.mxu0 0.0
    %2202 = vmatprep.subr.mxu0 0.0
    %2203 = vmatpush1.msra.mxu0 0.0
    %2204 = vmatprep.subr.mxu0 0.0
    %2205 = vmatpush1.msra.mxu0 0.0
    %2206 = vmatprep.subr.mxu0 %v115
    %2207 = vmatpush1.msra.mxu0 %v114
    %2208 = vmatprep.subr.mxu0 %v111
    %2209 = vmatpush1.msra.mxu0 %v110
    %2210 = vmatprep.subr.mxu0 0.0
    %2211 = vmatpush2.msra.mxu0 0.0
    %2212 = vmatprep.subr.mxu0 0.0
    %2213 = vmatpush2.msra.mxu0 0.0
    %2214 = vmatprep.subr.mxu0 0.0
    %2215 = vmatpush2.msra.mxu0 0.0
    %2216 = vmatprep.subr.mxu0 0.0
    %2217 = vmatpush2.msra.mxu0 0.0
    %2218 = vmatprep.subr.mxu0 0.0
    %2219 = vmatpush2.msra.mxu0 0.0
    %2220 = vmatprep.subr.mxu0 0.0
    %2221 = vmatpush2.msra.mxu0 0.0
    %2222 = vmatprep.subr.mxu0 0.0
    %2223 = vmatpush2.msra.mxu0 0.0
    %2224 = vmatprep.subr.mxu0 0.0
    %2225 = vmatpush2.msra.mxu0 0.0
    %2226 = vmatprep.subr.mxu0 0.0
    %2227 = vmatpush2.msra.mxu0 0.0
    %2228 = vmatprep.subr.mxu0 0.0
    %2229 = vmatpush2.msra.mxu0 0.0
    %2230 = vmatprep.subr.mxu0 0.0
    %2231 = vmatpush2.msra.mxu0 0.0
    %2232 = vmatprep.subr.mxu0 0.0
    %2233 = vmatpush2.msra.mxu0 0.0
    %2234 = vmatprep.subr.mxu0 0.0
    %2235 = vmatpush2.msra.mxu0 0.0
    %2236 = vmatprep.subr.mxu0 0.0
    %2237 = vmatpush2.msra.mxu0 0.0
    %2238 = vmatprep.subr.mxu0 0.0
    %2239 = vmatpush2.msra.mxu0 0.0
    %2240 = vmatprep.subr.mxu0 0.0
    %2241 = vmatpush2.msra.mxu0 0.0
    %2242 = vmatprep.mubr.f32.mxu0 0.0
    %2243 = vmatmul.mubr.f32.gmra.mxu0 %v2173
    %v2244 = vpop.f32.mrf.mxu0
    %v2245 = vadd.f32 %v2085, %v2244
    %v2246 = vpop.f32.mrf.mxu0
    %v2247 = vadd.f32 %v2087, %v2246
    %2248 = vmatprep.mubr.f32.mxu0 0.0
    %2249 = vmatmul.mubr.f32.gmra.mxu0 %v2176
    %v2250 = vpop.f32.mrf.mxu0
    %v2251 = vadd.f32 %v2091, %v2250
    %v2252 = vpop.f32.mrf.mxu0
    %v2253 = vadd.f32 %v2093, %v2252
    %2254 = vdwg.mxu0
    %2255 = vmatprep.subr.mxu0 0.0
    %2256 = vmatpush1.msra.mxu0 0.0
    %2257 = vmatprep.subr.mxu0 0.0
    %2258 = vmatpush1.msra.mxu0 0.0
    %2259 = vmatprep.subr.mxu0 0.0
    %2260 = vmatpush1.msra.mxu0 0.0
    %2261 = vmatprep.subr.mxu0 0.0
    %2262 = vmatpush1.msra.mxu0 0.0
    %2263 = vmatprep.subr.mxu0 0.0
    %2264 = vmatpush1.msra.mxu0 0.0
    %2265 = vmatprep.subr.mxu0 0.0
    %2266 = vmatpush1.msra.mxu0 0.0
    %2267 = vmatprep.subr.mxu0 0.0
    %2268 = vmatpush1.msra.mxu0 0.0
    %2269 = vmatprep.subr.mxu0 0.0
    %2270 = vmatpush1.msra.mxu0 0.0
    %2271 = vmatprep.subr.mxu0 0.0
    %2272 = vmatpush1.msra.mxu0 0.0
    %2273 = vmatprep.subr.mxu0 0.0
    %2274 = vmatpush1.msra.mxu0 0.0
    %2275 = vmatprep.subr.mxu0 0.0
    %2276 = vmatpush1.msra.mxu0 0.0
    %2277 = vmatprep.subr.mxu0 0.0
    %2278 = vmatpush1.msra.mxu0 0.0
    %2279 = vmatprep.subr.mxu0 0.0
    %2280 = vmatpush1.msra.mxu0 0.0
    %2281 = vmatprep.subr.mxu0 0.0
    %2282 = vmatpush1.msra.mxu0 0.0
    %2283 = vmatprep.subr.mxu0 %v117
    %2284 = vmatpush1.msra.mxu0 %v116
    %2285 = vmatprep.subr.mxu0 %v113
    %2286 = vmatpush1.msra.mxu0 %v112
    %2287 = vmatprep.subr.mxu0 0.0
    %2288 = vmatpush2.msra.mxu0 0.0
    %2289 = vmatprep.subr.mxu0 0.0
    %2290 = vmatpush2.msra.mxu0 0.0
    %2291 = vmatprep.subr.mxu0 0.0
    %2292 = vmatpush2.msra.mxu0 0.0
    %2293 = vmatprep.subr.mxu0 0.0
    %2294 = vmatpush2.msra.mxu0 0.0
    %2295 = vmatprep.subr.mxu0 0.0
    %2296 = vmatpush2.msra.mxu0 0.0
    %2297 = vmatprep.subr.mxu0 0.0
    %2298 = vmatpush2.msra.mxu0 0.0
    %2299 = vmatprep.subr.mxu0 0.0
    %2300 = vmatpush2.msra.mxu0 0.0
    %2301 = vmatprep.subr.mxu0 0.0
    %2302 = vmatpush2.msra.mxu0 0.0
    %2303 = vmatprep.subr.mxu0 0.0
    %2304 = vmatpush2.msra.mxu0 0.0
    %2305 = vmatprep.subr.mxu0 0.0
    %2306 = vmatpush2.msra.mxu0 0.0
    %2307 = vmatprep.subr.mxu0 0.0
    %2308 = vmatpush2.msra.mxu0 0.0
    %2309 = vmatprep.subr.mxu0 0.0
    %2310 = vmatpush2.msra.mxu0 0.0
    %2311 = vmatprep.subr.mxu0 0.0
    %2312 = vmatpush2.msra.mxu0 0.0
    %2313 = vmatprep.subr.mxu0 0.0
    %2314 = vmatpush2.msra.mxu0 0.0
    %2315 = vmatprep.subr.mxu0 0.0
    %2316 = vmatpush2.msra.mxu0 0.0
    %2317 = vmatprep.subr.mxu0 0.0
    %2318 = vmatpush2.msra.mxu0 0.0
    %2319 = vmatprep.mubr.f32.mxu0 0.0
    %2320 = vmatmul.mubr.f32.gmra.mxu0 %v2173
    %v2321 = vpop.f32.mrf.mxu0
    %v2322 = vadd.f32 %v2162, %v2321
    %v2323 = vpop.f32.mrf.mxu0
    %v2324 = vadd.f32 %v2164, %v2323
    %2325 = vmatprep.mubr.f32.mxu0 0.0
    %2326 = vmatmul.mubr.f32.gmra.mxu0 %v2176
    %v2327 = vpop.f32.mrf.mxu0
    %v2328 = vadd.f32 %v2168, %v2327
    %v2329 = vpop.f32.mrf.mxu0
    %v2330 = vadd.f32 %v2170, %v2329
    %2331 = vdwg.mxu0
    %v2332 = vadd.f32 %v2245, %v641
    %v2333 = vadd.f32 %v2247, %v645
    %v2334 = vadd.f32 %v2322, %v649
    %v2335 = vadd.f32 %v2324, %v653
    %v2336 = vadd.f32 %v2251, %v641
    %v2337 = vadd.f32 %v2253, %v645
    %v2338 = vadd.f32 %v2328, %v649
    %v2339 = vadd.f32 %v2330, %v653
    %v2340 = vmul.f32 %v2332, 0.5
    %v2341 = vmul.f32 %v2336, 0.5
    %v2342 = vtanh.pop %v2340
    %v2343 = vtanh.pop %v2341
    %v2344 = vmul.f32 %v2342, 0.5
    %v2345 = vmul.f32 %v2343, 0.5
    %v2346 = vadd.f32 %v2344, 0.5
    %v2347 = vadd.f32 %v2345, 0.5
    %v2348 = vmul.f32 %v2333, 0.5
    %v2349 = vmul.f32 %v2337, 0.5
    %v2350 = vtanh.pop %v2348
    %v2351 = vtanh.pop %v2349
    %v2352 = vmul.f32 %v2350, 0.5
    %v2353 = vmul.f32 %v2351, 0.5
    %v2354 = vadd.f32 %v2352, 0.5
    %v2355 = vadd.f32 %v2353, 0.5
    %v2356 = vtanh.pop %v2334
    %v2357 = vtanh.pop %v2338
    %v2358 = vmul.f32 %v2335, 0.5
    %v2359 = vmul.f32 %v2339, 0.5
    %v2360 = vtanh.pop %v2358
    %v2361 = vtanh.pop %v2359
    %v2362 = vmul.f32 %v2360, 0.5
    %v2363 = vmul.f32 %v2361, 0.5
    %v2364 = vadd.f32 %v2362, 0.5
    %v2365 = vadd.f32 %v2363, 0.5
    %v2366 = vmul.f32 %v2354, %v1819
    %v2367 = vmul.f32 %v2355, %v1820
    %v2368 = vmul.f32 %v2346, %v2356
    %v2369 = vmul.f32 %v2347, %v2357
    %v2370 = vadd.f32 %v2366, %v2368
    %v2371 = vadd.f32 %v2367, %v2369
    %v2372 = vtanh.pop %v2370
    %v2373 = vtanh.pop %v2371
    %v2374 = vmul.f32 %v2364, %v2372
    %v2375 = vmul.f32 %v2365, %v2373
    %2376 = vmatprep.subr.mxu0 %v243
    %2377 = vmatpush1.msra.mxu0 %v242
    %2378 = vmatprep.subr.mxu0 %v239
    %2379 = vmatpush1.msra.mxu0 %v238
    %2380 = vmatprep.subr.mxu0 %v235
    %2381 = vmatpush1.msra.mxu0 %v234
    %2382 = vmatprep.subr.mxu0 %v231
    %2383 = vmatpush1.msra.mxu0 %v230
    %2384 = vmatprep.subr.mxu0 %v227
    %2385 = vmatpush1.msra.mxu0 %v226
    %2386 = vmatprep.subr.mxu0 %v223
    %2387 = vmatpush1.msra.mxu0 %v222
    %2388 = vmatprep.subr.mxu0 %v219
    %2389 = vmatpush1.msra.mxu0 %v218
    %2390 = vmatprep.subr.mxu0 %v215
    %2391 = vmatpush1.msra.mxu0 %v214
    %2392 = vmatprep.subr.mxu0 %v211
    %2393 = vmatpush1.msra.mxu0 %v210
    %2394 = vmatprep.subr.mxu0 %v207
    %2395 = vmatpush1.msra.mxu0 %v206
    %2396 = vmatprep.subr.mxu0 %v203
    %2397 = vmatpush1.msra.mxu0 %v202
    %2398 = vmatprep.subr.mxu0 %v199
    %2399 = vmatpush1.msra.mxu0 %v198
    %2400 = vmatprep.subr.mxu0 %v195
    %2401 = vmatpush1.msra.mxu0 %v194
    %2402 = vmatprep.subr.mxu0 %v191
    %2403 = vmatpush1.msra.mxu0 %v190
    %2404 = vmatprep.subr.mxu0 %v187
    %2405 = vmatpush1.msra.mxu0 %v186
    %2406 = vmatprep.subr.mxu0 %v183
    %2407 = vmatpush1.msra.mxu0 %v182
    %2408 = vmatprep.subr.mxu0 %v307
    %2409 = vmatpush2.msra.mxu0 %v306
    %2410 = vmatprep.subr.mxu0 %v303
    %2411 = vmatpush2.msra.mxu0 %v302
    %2412 = vmatprep.subr.mxu0 %v299
    %2413 = vmatpush2.msra.mxu0 %v298
    %2414 = vmatprep.subr.mxu0 %v295
    %2415 = vmatpush2.msra.mxu0 %v294
    %2416 = vmatprep.subr.mxu0 %v291
    %2417 = vmatpush2.msra.mxu0 %v290
    %2418 = vmatprep.subr.mxu0 %v287
    %2419 = vmatpush2.msra.mxu0 %v286
    %2420 = vmatprep.subr.mxu0 %v283
    %2421 = vmatpush2.msra.mxu0 %v282
    %2422 = vmatprep.subr.mxu0 %v279
    %2423 = vmatpush2.msra.mxu0 %v278
    %2424 = vmatprep.subr.mxu0 %v275
    %2425 = vmatpush2.msra.mxu0 %v274
    %2426 = vmatprep.subr.mxu0 %v271
    %2427 = vmatpush2.msra.mxu0 %v270
    %2428 = vmatprep.subr.mxu0 %v267
    %2429 = vmatpush2.msra.mxu0 %v266
    %2430 = vmatprep.subr.mxu0 %v263
    %2431 = vmatpush2.msra.mxu0 %v262
    %2432 = vmatprep.subr.mxu0 %v259
    %2433 = vmatpush2.msra.mxu0 %v258
    %2434 = vmatprep.subr.mxu0 %v255
    %2435 = vmatpush2.msra.mxu0 %v254
    %2436 = vmatprep.subr.mxu0 %v251
    %2437 = vmatpush2.msra.mxu0 %v250
    %2438 = vmatprep.subr.mxu0 %v247
    %2439 = vmatpush2.msra.mxu0 %v246
    %2440 = vmatprep.mubr.f32.mxu0 %v2013
    %2441 = vmatmul.mubr.f32.gmra.mxu0 %v2374
    %v2442 = vpop.f32.mrf.mxu0
    %v2443 = vadd.f32 %v706, %v2442
    %v2444 = vpop.f32.mrf.mxu0
    %v2445 = vadd.f32 %v710, %v2444
    %2446 = vmatprep.mubr.f32.mxu0 %v2014
    %2447 = vmatmul.mubr.f32.gmra.mxu0 %v2375
    %v2448 = vpop.f32.mrf.mxu0
    %v2449 = vadd.f32 %v706, %v2448
    %v2450 = vpop.f32.mrf.mxu0
    %v2451 = vadd.f32 %v710, %v2450
    %2452 = vdwg.mxu0
    %2453 = vmatprep.subr.mxu0 %v245
    %2454 = vmatpush1.msra.mxu0 %v244
    %2455 = vmatprep.subr.mxu0 %v241
    %2456 = vmatpush1.msra.mxu0 %v240
    %2457 = vmatprep.subr.mxu0 %v237
    %2458 = vmatpush1.msra.mxu0 %v236
    %2459 = vmatprep.subr.mxu0 %v233
    %2460 = vmatpush1.msra.mxu0 %v232
    %2461 = vmatprep.subr.mxu0 %v229
    %2462 = vmatpush1.msra.mxu0 %v228
    %2463 = vmatprep.subr.mxu0 %v225
    %2464 = vmatpush1.msra.mxu0 %v224
    %2465 = vmatprep.subr.mxu0 %v221
    %2466 = vmatpush1.msra.mxu0 %v220
    %2467 = vmatprep.subr.mxu0 %v217
    %2468 = vmatpush1.msra.mxu0 %v216
    %2469 = vmatprep.subr.mxu0 %v213
    %2470 = vmatpush1.msra.mxu0 %v212
    %2471 = vmatprep.subr.mxu0 %v209
    %2472 = vmatpush1.msra.mxu0 %v208
    %2473 = vmatprep.subr.mxu0 %v205
    %2474 = vmatpush1.msra.mxu0 %v204
    %2475 = vmatprep.subr.mxu0 %v201
    %2476 = vmatpush1.msra.mxu0 %v200
    %2477 = vmatprep.subr.mxu0 %v197
    %2478 = vmatpush1.msra.mxu0 %v196
    %2479 = vmatprep.subr.mxu0 %v193
    %2480 = vmatpush1.msra.mxu0 %v192
    %2481 = vmatprep.subr.mxu0 %v189
    %2482 = vmatpush1.msra.mxu0 %v188
    %2483 = vmatprep.subr.mxu0 %v185
    %2484 = vmatpush1.msra.mxu0 %v184
    %2485 = vmatprep.subr.mxu0 %v309
    %2486 = vmatpush2.msra.mxu0 %v308
    %2487 = vmatprep.subr.mxu0 %v305
    %2488 = vmatpush2.msra.mxu0 %v304
    %2489 = vmatprep.subr.mxu0 %v301
    %2490 = vmatpush2.msra.mxu0 %v300
    %2491 = vmatprep.subr.mxu0 %v297
    %2492 = vmatpush2.msra.mxu0 %v296
    %2493 = vmatprep.subr.mxu0 %v293
    %2494 = vmatpush2.msra.mxu0 %v292
    %2495 = vmatprep.subr.mxu0 %v289
    %2496 = vmatpush2.msra.mxu0 %v288
    %2497 = vmatprep.subr.mxu0 %v285
    %2498 = vmatpush2.msra.mxu0 %v284
    %2499 = vmatprep.subr.mxu0 %v281
    %2500 = vmatpush2.msra.mxu0 %v280
    %2501 = vmatprep.subr.mxu0 %v277
    %2502 = vmatpush2.msra.mxu0 %v276
    %2503 = vmatprep.subr.mxu0 %v273
    %2504 = vmatpush2.msra.mxu0 %v272
    %2505 = vmatprep.subr.mxu0 %v269
    %2506 = vmatpush2.msra.mxu0 %v268
    %2507 = vmatprep.subr.mxu0 %v265
    %2508 = vmatpush2.msra.mxu0 %v264
    %2509 = vmatprep.subr.mxu0 %v261
    %2510 = vmatpush2.msra.mxu0 %v260
    %2511 = vmatprep.subr.mxu0 %v257
    %2512 = vmatpush2.msra.mxu0 %v256
    %2513 = vmatprep.subr.mxu0 %v253
    %2514 = vmatpush2.msra.mxu0 %v252
    %2515 = vmatprep.subr.mxu0 %v249
    %2516 = vmatpush2.msra.mxu0 %v248
    %2517 = vmatprep.mubr.f32.mxu0 %v2013
    %2518 = vmatmul.mubr.f32.gmra.mxu0 %v2374
    %v2519 = vpop.f32.mrf.mxu0
    %v2520 = vadd.f32 %v714, %v2519
    %v2521 = vpop.f32.mrf.mxu0
    %v2522 = vadd.f32 %v718, %v2521
    %2523 = vmatprep.mubr.f32.mxu0 %v2014
    %2524 = vmatmul.mubr.f32.gmra.mxu0 %v2375
    %v2525 = vpop.f32.mrf.mxu0
    %v2526 = vadd.f32 %v714, %v2525
    %v2527 = vpop.f32.mrf.mxu0
    %v2528 = vadd.f32 %v718, %v2527
    %2529 = vdwg.mxu0
    %v2530 = vmul.f32 %v2443, 0.5
    %v2531 = vmul.f32 %v2449, 0.5
    %v2532 = vtanh.pop %v2530
    %v2533 = vtanh.pop %v2531
    %v2534 = vmul.f32 %v2532, 0.5
    %v2535 = vmul.f32 %v2533, 0.5
    %v2536 = vadd.f32 %v2534, 0.5
    %v2537 = vadd.f32 %v2535, 0.5
    %v2538 = vmul.f32 %v2445, 0.5
    %v2539 = vmul.f32 %v2451, 0.5
    %v2540 = vtanh.pop %v2538
    %v2541 = vtanh.pop %v2539
    %v2542 = vmul.f32 %v2540, 0.5
    %v2543 = vmul.f32 %v2541, 0.5
    %v2544 = vadd.f32 %v2542, 0.5
    %v2545 = vadd.f32 %v2543, 0.5
    %v2546 = vtanh.pop %v2520
    %v2547 = vtanh.pop %v2526
    %v2548 = vmul.f32 %v2522, 0.5
    %v2549 = vmul.f32 %v2528, 0.5
    %v2550 = vtanh.pop %v2548
    %v2551 = vtanh.pop %v2549
    %v2552 = vmul.f32 %v2550, 0.5
    %v2553 = vmul.f32 %v2551, 0.5
    %v2554 = vadd.f32 %v2552, 0.5
    %v2555 = vadd.f32 %v2553, 0.5
    %v2556 = vmul.f32 %v2544, %v2009
    %v2557 = vmul.f32 %v2545, %v2010
    %v2558 = vmul.f32 %v2536, %v2546
    %v2559 = vmul.f32 %v2537, %v2547
    %v2560 = vadd.f32 %v2556, %v2558
    %v2561 = vadd.f32 %v2557, %v2559
    %v2562 = vtanh.pop %v2560
    %v2563 = vtanh.pop %v2561
    %v2564 = vmul.f32 %v2554, %v2562
    %v2565 = vmul.f32 %v2555, %v2563
    %s2566 = scalar_lea.vmem [#allocation6], 64
    %v2567 = vld [vmem:[%s2566] sm:$0xff]
    %v2568 = vld [vmem:[%s2566 + $0x8] sm:$0xff]
    %2569 = vmatprep.subr.mxu0 %v179
    %2570 = vmatpush1.msra.mxu0 %v178
    %2571 = vmatprep.subr.mxu0 %v175
    %2572 = vmatpush1.msra.mxu0 %v174
    %2573 = vmatprep.subr.mxu0 %v171
    %2574 = vmatpush1.msra.mxu0 %v170
    %2575 = vmatprep.subr.mxu0 %v167
    %2576 = vmatpush1.msra.mxu0 %v166
    %2577 = vmatprep.subr.mxu0 %v163
    %2578 = vmatpush1.msra.mxu0 %v162
    %2579 = vmatprep.subr.mxu0 %v159
    %2580 = vmatpush1.msra.mxu0 %v158
    %2581 = vmatprep.subr.mxu0 %v155
    %2582 = vmatpush1.msra.mxu0 %v154
    %2583 = vmatprep.subr.mxu0 %v151
    %2584 = vmatpush1.msra.mxu0 %v150
    %2585 = vmatprep.subr.mxu0 %v147
    %2586 = vmatpush1.msra.mxu0 %v146
    %2587 = vmatprep.subr.mxu0 %v143
    %2588 = vmatpush1.msra.mxu0 %v142
    %2589 = vmatprep.subr.mxu0 %v139
    %2590 = vmatpush1.msra.mxu0 %v138
    %2591 = vmatprep.subr.mxu0 %v135
    %2592 = vmatpush1.msra.mxu0 %v134
    %2593 = vmatprep.subr.mxu0 %v131
    %2594 = vmatpush1.msra.mxu0 %v130
    %2595 = vmatprep.subr.mxu0 %v127
    %2596 = vmatpush1.msra.mxu0 %v126
    %2597 = vmatprep.subr.mxu0 %v123
    %2598 = vmatpush1.msra.mxu0 %v122
    %2599 = vmatprep.subr.mxu0 %v119
    %2600 = vmatpush1.msra.mxu0 %v118
    %2601 = vmatprep.subr.mxu0 0.0
    %2602 = vmatpush2.msra.mxu0 0.0
    %2603 = vmatprep.subr.mxu0 0.0
    %2604 = vmatpush2.msra.mxu0 0.0
    %2605 = vmatprep.subr.mxu0 0.0
    %2606 = vmatpush2.msra.mxu0 0.0
    %2607 = vmatprep.subr.mxu0 0.0
    %2608 = vmatpush2.msra.mxu0 0.0
    %2609 = vmatprep.subr.mxu0 0.0
    %2610 = vmatpush2.msra.mxu0 0.0
    %2611 = vmatprep.subr.mxu0 0.0
    %2612 = vmatpush2.msra.mxu0 0.0
    %2613 = vmatprep.subr.mxu0 0.0
    %2614 = vmatpush2.msra.mxu0 0.0
    %2615 = vmatprep.subr.mxu0 0.0
    %2616 = vmatpush2.msra.mxu0 0.0
    %2617 = vmatprep.subr.mxu0 0.0
    %2618 = vmatpush2.msra.mxu0 0.0
    %2619 = vmatprep.subr.mxu0 0.0
    %2620 = vmatpush2.msra.mxu0 0.0
    %2621 = vmatprep.subr.mxu0 0.0
    %2622 = vmatpush2.msra.mxu0 0.0
    %2623 = vmatprep.subr.mxu0 0.0
    %2624 = vmatpush2.msra.mxu0 0.0
    %2625 = vmatprep.subr.mxu0 0.0
    %2626 = vmatpush2.msra.mxu0 0.0
    %2627 = vmatprep.subr.mxu0 0.0
    %2628 = vmatpush2.msra.mxu0 0.0
    %2629 = vmatprep.subr.mxu0 0.0
    %2630 = vmatpush2.msra.mxu0 0.0
    %2631 = vmatprep.subr.mxu0 0.0
    %2632 = vmatpush2.msra.mxu0 0.0
    %2633 = vmatprep.mubr.f32.mxu0 0.0
    %2634 = vmatmul.mubr.f32.gmra.mxu0 %v2374
    %v2635 = vpop.f32.mrf.mxu0
    %v2636 = vadd.f32 0.0, %v2635
    %v2637 = vpop.f32.mrf.mxu0
    %v2638 = vadd.f32 0.0, %v2637
    %2639 = vmatprep.mubr.f32.mxu0 0.0
    %2640 = vmatmul.mubr.f32.gmra.mxu0 %v2375
    %v2641 = vpop.f32.mrf.mxu0
    %v2642 = vadd.f32 0.0, %v2641
    %v2643 = vpop.f32.mrf.mxu0
    %v2644 = vadd.f32 0.0, %v2643
    %2645 = vdwg.mxu0
    %2646 = vmatprep.subr.mxu0 %v181
    %2647 = vmatpush1.msra.mxu0 %v180
    %2648 = vmatprep.subr.mxu0 %v177
    %2649 = vmatpush1.msra.mxu0 %v176
    %2650 = vmatprep.subr.mxu0 %v173
    %2651 = vmatpush1.msra.mxu0 %v172
    %2652 = vmatprep.subr.mxu0 %v169
    %2653 = vmatpush1.msra.mxu0 %v168
    %2654 = vmatprep.subr.mxu0 %v165
    %2655 = vmatpush1.msra.mxu0 %v164
    %2656 = vmatprep.subr.mxu0 %v161
    %2657 = vmatpush1.msra.mxu0 %v160
    %2658 = vmatprep.subr.mxu0 %v157
    %2659 = vmatpush1.msra.mxu0 %v156
    %2660 = vmatprep.subr.mxu0 %v153
    %2661 = vmatpush1.msra.mxu0 %v152
    %2662 = vmatprep.subr.mxu0 %v149
    %2663 = vmatpush1.msra.mxu0 %v148
    %2664 = vmatprep.subr.mxu0 %v145
    %2665 = vmatpush1.msra.mxu0 %v144
    %2666 = vmatprep.subr.mxu0 %v141
    %2667 = vmatpush1.msra.mxu0 %v140
    %2668 = vmatprep.subr.mxu0 %v137
    %2669 = vmatpush1.msra.mxu0 %v136
    %2670 = vmatprep.subr.mxu0 %v133
    %2671 = vmatpush1.msra.mxu0 %v132
    %2672 = vmatprep.subr.mxu0 %v129
    %2673 = vmatpush1.msra.mxu0 %v128
    %2674 = vmatprep.subr.mxu0 %v125
    %2675 = vmatpush1.msra.mxu0 %v124
    %2676 = vmatprep.subr.mxu0 %v121
    %2677 = vmatpush1.msra.mxu0 %v120
    %2678 = vmatprep.subr.mxu0 0.0
    %2679 = vmatpush2.msra.mxu0 0.0
    %2680 = vmatprep.subr.mxu0 0.0
    %2681 = vmatpush2.msra.mxu0 0.0
    %2682 = vmatprep.subr.mxu0 0.0
    %2683 = vmatpush2.msra.mxu0 0.0
    %2684 = vmatprep.subr.mxu0 0.0
    %2685 = vmatpush2.msra.mxu0 0.0
    %2686 = vmatprep.subr.mxu0 0.0
    %2687 = vmatpush2.msra.mxu0 0.0
    %2688 = vmatprep.subr.mxu0 0.0
    %2689 = vmatpush2.msra.mxu0 0.0
    %2690 = vmatprep.subr.mxu0 0.0
    %2691 = vmatpush2.msra.mxu0 0.0
    %2692 = vmatprep.subr.mxu0 0.0
    %2693 = vmatpush2.msra.mxu0 0.0
    %2694 = vmatprep.subr.mxu0 0.0
    %2695 = vmatpush2.msra.mxu0 0.0
    %2696 = vmatprep.subr.mxu0 0.0
    %2697 = vmatpush2.msra.mxu0 0.0
    %2698 = vmatprep.subr.mxu0 0.0
    %2699 = vmatpush2.msra.mxu0 0.0
    %2700 = vmatprep.subr.mxu0 0.0
    %2701 = vmatpush2.msra.mxu0 0.0
    %2702 = vmatprep.subr.mxu0 0.0
    %2703 = vmatpush2.msra.mxu0 0.0
    %2704 = vmatprep.subr.mxu0 0.0
    %2705 = vmatpush2.msra.mxu0 0.0
    %2706 = vmatprep.subr.mxu0 0.0
    %2707 = vmatpush2.msra.mxu0 0.0
    %2708 = vmatprep.subr.mxu0 0.0
    %2709 = vmatpush2.msra.mxu0 0.0
    %2710 = vmatprep.mubr.f32.mxu0 0.0
    %2711 = vmatmul.mubr.f32.gmra.mxu0 %v2374
    %v2712 = vpop.f32.mrf.mxu0
    %v2713 = vadd.f32 0.0, %v2712
    %v2714 = vpop.f32.mrf.mxu0
    %v2715 = vadd.f32 0.0, %v2714
    %2716 = vmatprep.mubr.f32.mxu0 0.0
    %2717 = vmatmul.mubr.f32.gmra.mxu0 %v2375
    %v2718 = vpop.f32.mrf.mxu0
    %v2719 = vadd.f32 0.0, %v2718
    %v2720 = vpop.f32.mrf.mxu0
    %v2721 = vadd.f32 0.0, %v2720
    %2722 = vdwg.mxu0
    %v2724 = vsel %vm476, %v2567, 0
    %v2727 = vsel %vm476, %v2568, 0
    %2729 = vmatprep.subr.mxu0 0.0
    %2730 = vmatpush1.msra.mxu0 0.0
    %2731 = vmatprep.subr.mxu0 0.0
    %2732 = vmatpush1.msra.mxu0 0.0
    %2733 = vmatprep.subr.mxu0 0.0
    %2734 = vmatpush1.msra.mxu0 0.0
    %2735 = vmatprep.subr.mxu0 0.0
    %2736 = vmatpush1.msra.mxu0 0.0
    %2737 = vmatprep.subr.mxu0 0.0
    %2738 = vmatpush1.msra.mxu0 0.0
    %2739 = vmatprep.subr.mxu0 0.0
    %2740 = vmatpush1.msra.mxu0 0.0
    %2741 = vmatprep.subr.mxu0 0.0
    %2742 = vmatpush1.msra.mxu0 0.0
    %2743 = vmatprep.subr.mxu0 0.0
    %2744 = vmatpush1.msra.mxu0 0.0
    %2745 = vmatprep.subr.mxu0 0.0
    %2746 = vmatpush1.msra.mxu0 0.0
    %2747 = vmatprep.subr.mxu0 0.0
    %2748 = vmatpush1.msra.mxu0 0.0
    %2749 = vmatprep.subr.mxu0 0.0
    %2750 = vmatpush1.msra.mxu0 0.0
    %2751 = vmatprep.subr.mxu0 0.0
    %2752 = vmatpush1.msra.mxu0 0.0
    %2753 = vmatprep.subr.mxu0 0.0
    %2754 = vmatpush1.msra.mxu0 0.0
    %2755 = vmatprep.subr.mxu0 0.0
    %2756 = vmatpush1.msra.mxu0 0.0
    %2757 = vmatprep.subr.mxu0 %v115
    %2758 = vmatpush1.msra.mxu0 %v114
    %2759 = vmatprep.subr.mxu0 %v111
    %2760 = vmatpush1.msra.mxu0 %v110
    %2761 = vmatprep.subr.mxu0 0.0
    %2762 = vmatpush2.msra.mxu0 0.0
    %2763 = vmatprep.subr.mxu0 0.0
    %2764 = vmatpush2.msra.mxu0 0.0
    %2765 = vmatprep.subr.mxu0 0.0
    %2766 = vmatpush2.msra.mxu0 0.0
    %2767 = vmatprep.subr.mxu0 0.0
    %2768 = vmatpush2.msra.mxu0 0.0
    %2769 = vmatprep.subr.mxu0 0.0
    %2770 = vmatpush2.msra.mxu0 0.0
    %2771 = vmatprep.subr.mxu0 0.0
    %2772 = vmatpush2.msra.mxu0 0.0
    %2773 = vmatprep.subr.mxu0 0.0
    %2774 = vmatpush2.msra.mxu0 0.0
    %2775 = vmatprep.subr.mxu0 0.0
    %2776 = vmatpush2.msra.mxu0 0.0
    %2777 = vmatprep.subr.mxu0 0.0
    %2778 = vmatpush2.msra.mxu0 0.0
    %2779 = vmatprep.subr.mxu0 0.0
    %2780 = vmatpush2.msra.mxu0 0.0
    %2781 = vmatprep.subr.mxu0 0.0
    %2782 = vmatpush2.msra.mxu0 0.0
    %2783 = vmatprep.subr.mxu0 0.0
    %2784 = vmatpush2.msra.mxu0 0.0
    %2785 = vmatprep.subr.mxu0 0.0
    %2786 = vmatpush2.msra.mxu0 0.0
    %2787 = vmatprep.subr.mxu0 0.0
    %2788 = vmatpush2.msra.mxu0 0.0
    %2789 = vmatprep.subr.mxu0 0.0
    %2790 = vmatpush2.msra.mxu0 0.0
    %2791 = vmatprep.subr.mxu0 0.0
    %2792 = vmatpush2.msra.mxu0 0.0
    %2793 = vmatprep.mubr.f32.mxu0 0.0
    %2794 = vmatmul.mubr.f32.gmra.mxu0 %v2724
    %v2795 = vpop.f32.mrf.mxu0
    %v2796 = vadd.f32 %v2636, %v2795
    %v2797 = vpop.f32.mrf.mxu0
    %v2798 = vadd.f32 %v2638, %v2797
    %2799 = vmatprep.mubr.f32.mxu0 0.0
    %2800 = vmatmul.mubr.f32.gmra.mxu0 %v2727
    %v2801 = vpop.f32.mrf.mxu0
    %v2802 = vadd.f32 %v2642, %v2801
    %v2803 = vpop.f32.mrf.mxu0
    %v2804 = vadd.f32 %v2644, %v2803
    %2805 = vdwg.mxu0
    %2806 = vmatprep.subr.mxu0 0.0
    %2807 = vmatpush1.msra.mxu0 0.0
    %2808 = vmatprep.subr.mxu0 0.0
    %2809 = vmatpush1.msra.mxu0 0.0
    %2810 = vmatprep.subr.mxu0 0.0
    %2811 = vmatpush1.msra.mxu0 0.0
    %2812 = vmatprep.subr.mxu0 0.0
    %2813 = vmatpush1.msra.mxu0 0.0
    %2814 = vmatprep.subr.mxu0 0.0
    %2815 = vmatpush1.msra.mxu0 0.0
    %2816 = vmatprep.subr.mxu0 0.0
    %2817 = vmatpush1.msra.mxu0 0.0
    %2818 = vmatprep.subr.mxu0 0.0
    %2819 = vmatpush1.msra.mxu0 0.0
    %2820 = vmatprep.subr.mxu0 0.0
    %2821 = vmatpush1.msra.mxu0 0.0
    %2822 = vmatprep.subr.mxu0 0.0
    %2823 = vmatpush1.msra.mxu0 0.0
    %2824 = vmatprep.subr.mxu0 0.0
    %2825 = vmatpush1.msra.mxu0 0.0
    %2826 = vmatprep.subr.mxu0 0.0
    %2827 = vmatpush1.msra.mxu0 0.0
    %2828 = vmatprep.subr.mxu0 0.0
    %2829 = vmatpush1.msra.mxu0 0.0
    %2830 = vmatprep.subr.mxu0 0.0
    %2831 = vmatpush1.msra.mxu0 0.0
    %2832 = vmatprep.subr.mxu0 0.0
    %2833 = vmatpush1.msra.mxu0 0.0
    %2834 = vmatprep.subr.mxu0 %v117
    %2835 = vmatpush1.msra.mxu0 %v116
    %2836 = vmatprep.subr.mxu0 %v113
    %2837 = vmatpush1.msra.mxu0 %v112
    %2838 = vmatprep.subr.mxu0 0.0
    %2839 = vmatpush2.msra.mxu0 0.0
    %2840 = vmatprep.subr.mxu0 0.0
    %2841 = vmatpush2.msra.mxu0 0.0
    %2842 = vmatprep.subr.mxu0 0.0
    %2843 = vmatpush2.msra.mxu0 0.0
    %2844 = vmatprep.subr.mxu0 0.0
    %2845 = vmatpush2.msra.mxu0 0.0
    %2846 = vmatprep.subr.mxu0 0.0
    %2847 = vmatpush2.msra.mxu0 0.0
    %2848 = vmatprep.subr.mxu0 0.0
    %2849 = vmatpush2.msra.mxu0 0.0
    %2850 = vmatprep.subr.mxu0 0.0
    %2851 = vmatpush2.msra.mxu0 0.0
    %2852 = vmatprep.subr.mxu0 0.0
    %2853 = vmatpush2.msra.mxu0 0.0
    %2854 = vmatprep.subr.mxu0 0.0
    %2855 = vmatpush2.msra.mxu0 0.0
    %2856 = vmatprep.subr.mxu0 0.0
    %2857 = vmatpush2.msra.mxu0 0.0
    %2858 = vmatprep.subr.mxu0 0.0
    %2859 = vmatpush2.msra.mxu0 0.0
    %2860 = vmatprep.subr.mxu0 0.0
    %2861 = vmatpush2.msra.mxu0 0.0
    %2862 = vmatprep.subr.mxu0 0.0
    %2863 = vmatpush2.msra.mxu0 0.0
    %2864 = vmatprep.subr.mxu0 0.0
    %2865 = vmatpush2.msra.mxu0 0.0
    %2866 = vmatprep.subr.mxu0 0.0
    %2867 = vmatpush2.msra.mxu0 0.0
    %2868 = vmatprep.subr.mxu0 0.0
    %2869 = vmatpush2.msra.mxu0 0.0
    %2870 = vmatprep.mubr.f32.mxu0 0.0
    %2871 = vmatmul.mubr.f32.gmra.mxu0 %v2724
    %v2872 = vpop.f32.mrf.mxu0
    %v2873 = vadd.f32 %v2713, %v2872
    %v2874 = vpop.f32.mrf.mxu0
    %v2875 = vadd.f32 %v2715, %v2874
    %2876 = vmatprep.mubr.f32.mxu0 0.0
    %2877 = vmatmul.mubr.f32.gmra.mxu0 %v2727
    %v2878 = vpop.f32.mrf.mxu0
    %v2879 = vadd.f32 %v2719, %v2878
    %v2880 = vpop.f32.mrf.mxu0
    %v2881 = vadd.f32 %v2721, %v2880
    %2882 = vdwg.mxu0
    %v2883 = vadd.f32 %v2796, %v641
    %v2884 = vadd.f32 %v2798, %v645
    %v2885 = vadd.f32 %v2873, %v649
    %v2886 = vadd.f32 %v2875, %v653
    %v2887 = vadd.f32 %v2802, %v641
    %v2888 = vadd.f32 %v2804, %v645
    %v2889 = vadd.f32 %v2879, %v649
    %v2890 = vadd.f32 %v2881, %v653
    %v2891 = vmul.f32 %v2883, 0.5
    %v2892 = vmul.f32 %v2887, 0.5
    %v2893 = vtanh.pop %v2891
    %v2894 = vtanh.pop %v2892
    %v2895 = vmul.f32 %v2893, 0.5
    %v2896 = vmul.f32 %v2894, 0.5
    %v2897 = vadd.f32 %v2895, 0.5
    %v2898 = vadd.f32 %v2896, 0.5
    %v2899 = vmul.f32 %v2884, 0.5
    %v2900 = vmul.f32 %v2888, 0.5
    %v2901 = vtanh.pop %v2899
    %v2902 = vtanh.pop %v2900
    %v2903 = vmul.f32 %v2901, 0.5
    %v2904 = vmul.f32 %v2902, 0.5
    %v2905 = vadd.f32 %v2903, 0.5
    %v2906 = vadd.f32 %v2904, 0.5
    %v2907 = vtanh.pop %v2885
    %v2908 = vtanh.pop %v2889
    %v2909 = vmul.f32 %v2886, 0.5
    %v2910 = vmul.f32 %v2890, 0.5
    %v2911 = vtanh.pop %v2909
    %v2912 = vtanh.pop %v2910
    %v2913 = vmul.f32 %v2911, 0.5
    %v2914 = vmul.f32 %v2912, 0.5
    %v2915 = vadd.f32 %v2913, 0.5
    %v2916 = vadd.f32 %v2914, 0.5
    %v2917 = vmul.f32 %v2905, %v2370
    %v2918 = vmul.f32 %v2906, %v2371
    %v2919 = vmul.f32 %v2897, %v2907
    %v2920 = vmul.f32 %v2898, %v2908
    %v2921 = vadd.f32 %v2917, %v2919
    %v2922 = vadd.f32 %v2918, %v2920
    %v2923 = vtanh.pop %v2921
    %v2924 = vtanh.pop %v2922
    %v2925 = vmul.f32 %v2915, %v2923
    %v2926 = vmul.f32 %v2916, %v2924
    %2927 = vmatprep.subr.mxu0 %v243
    %2928 = vmatpush1.msra.mxu0 %v242
    %2929 = vmatprep.subr.mxu0 %v239
    %2930 = vmatpush1.msra.mxu0 %v238
    %2931 = vmatprep.subr.mxu0 %v235
    %2932 = vmatpush1.msra.mxu0 %v234
    %2933 = vmatprep.subr.mxu0 %v231
    %2934 = vmatpush1.msra.mxu0 %v230
    %2935 = vmatprep.subr.mxu0 %v227
    %2936 = vmatpush1.msra.mxu0 %v226
    %2937 = vmatprep.subr.mxu0 %v223
    %2938 = vmatpush1.msra.mxu0 %v222
    %2939 = vmatprep.subr.mxu0 %v219
    %2940 = vmatpush1.msra.mxu0 %v218
    %2941 = vmatprep.subr.mxu0 %v215
    %2942 = vmatpush1.msra.mxu0 %v214
    %2943 = vmatprep.subr.mxu0 %v211
    %2944 = vmatpush1.msra.mxu0 %v210
    %2945 = vmatprep.subr.mxu0 %v207
    %2946 = vmatpush1.msra.mxu0 %v206
    %2947 = vmatprep.subr.mxu0 %v203
    %2948 = vmatpush1.msra.mxu0 %v202
    %2949 = vmatprep.subr.mxu0 %v199
    %2950 = vmatpush1.msra.mxu0 %v198
    %2951 = vmatprep.subr.mxu0 %v195
    %2952 = vmatpush1.msra.mxu0 %v194
    %2953 = vmatprep.subr.mxu0 %v191
    %2954 = vmatpush1.msra.mxu0 %v190
    %2955 = vmatprep.subr.mxu0 %v187
    %2956 = vmatpush1.msra.mxu0 %v186
    %2957 = vmatprep.subr.mxu0 %v183
    %2958 = vmatpush1.msra.mxu0 %v182
    %2959 = vmatprep.subr.mxu0 %v307
    %2960 = vmatpush2.msra.mxu0 %v306
    %2961 = vmatprep.subr.mxu0 %v303
    %2962 = vmatpush2.msra.mxu0 %v302
    %2963 = vmatprep.subr.mxu0 %v299
    %2964 = vmatpush2.msra.mxu0 %v298
    %2965 = vmatprep.subr.mxu0 %v295
    %2966 = vmatpush2.msra.mxu0 %v294
    %2967 = vmatprep.subr.mxu0 %v291
    %2968 = vmatpush2.msra.mxu0 %v290
    %2969 = vmatprep.subr.mxu0 %v287
    %2970 = vmatpush2.msra.mxu0 %v286
    %2971 = vmatprep.subr.mxu0 %v283
    %2972 = vmatpush2.msra.mxu0 %v282
    %2973 = vmatprep.subr.mxu0 %v279
    %2974 = vmatpush2.msra.mxu0 %v278
    %2975 = vmatprep.subr.mxu0 %v275
    %2976 = vmatpush2.msra.mxu0 %v274
    %2977 = vmatprep.subr.mxu0 %v271
    %2978 = vmatpush2.msra.mxu0 %v270
    %2979 = vmatprep.subr.mxu0 %v267
    %2980 = vmatpush2.msra.mxu0 %v266
    %2981 = vmatprep.subr.mxu0 %v263
    %2982 = vmatpush2.msra.mxu0 %v262
    %2983 = vmatprep.subr.mxu0 %v259
    %2984 = vmatpush2.msra.mxu0 %v258
    %2985 = vmatprep.subr.mxu0 %v255
    %2986 = vmatpush2.msra.mxu0 %v254
    %2987 = vmatprep.subr.mxu0 %v251
    %2988 = vmatpush2.msra.mxu0 %v250
    %2989 = vmatprep.subr.mxu0 %v247
    %2990 = vmatpush2.msra.mxu0 %v246
    %2991 = vmatprep.mubr.f32.mxu0 %v2564
    %2992 = vmatmul.mubr.f32.gmra.mxu0 %v2925
    %v2993 = vpop.f32.mrf.mxu0
    %v2994 = vadd.f32 %v706, %v2993
    %v2995 = vpop.f32.mrf.mxu0
    %v2996 = vadd.f32 %v710, %v2995
    %2997 = vmatprep.mubr.f32.mxu0 %v2565
    %2998 = vmatmul.mubr.f32.gmra.mxu0 %v2926
    %v2999 = vpop.f32.mrf.mxu0
    %v3000 = vadd.f32 %v706, %v2999
    %v3001 = vpop.f32.mrf.mxu0
    %v3002 = vadd.f32 %v710, %v3001
    %3003 = vdwg.mxu0
    %3004 = vmatprep.subr.mxu0 %v245
    %3005 = vmatpush1.msra.mxu0 %v244
    %3006 = vmatprep.subr.mxu0 %v241
    %3007 = vmatpush1.msra.mxu0 %v240
    %3008 = vmatprep.subr.mxu0 %v237
    %3009 = vmatpush1.msra.mxu0 %v236
    %3010 = vmatprep.subr.mxu0 %v233
    %3011 = vmatpush1.msra.mxu0 %v232
    %3012 = vmatprep.subr.mxu0 %v229
    %3013 = vmatpush1.msra.mxu0 %v228
    %3014 = vmatprep.subr.mxu0 %v225
    %3015 = vmatpush1.msra.mxu0 %v224
    %3016 = vmatprep.subr.mxu0 %v221
    %3017 = vmatpush1.msra.mxu0 %v220
    %3018 = vmatprep.subr.mxu0 %v217
    %3019 = vmatpush1.msra.mxu0 %v216
    %3020 = vmatprep.subr.mxu0 %v213
    %3021 = vmatpush1.msra.mxu0 %v212
    %3022 = vmatprep.subr.mxu0 %v209
    %3023 = vmatpush1.msra.mxu0 %v208
    %3024 = vmatprep.subr.mxu0 %v205
    %3025 = vmatpush1.msra.mxu0 %v204
    %3026 = vmatprep.subr.mxu0 %v201
    %3027 = vmatpush1.msra.mxu0 %v200
    %3028 = vmatprep.subr.mxu0 %v197
    %3029 = vmatpush1.msra.mxu0 %v196
    %3030 = vmatprep.subr.mxu0 %v193
    %3031 = vmatpush1.msra.mxu0 %v192
    %3032 = vmatprep.subr.mxu0 %v189
    %3033 = vmatpush1.msra.mxu0 %v188
    %3034 = vmatprep.subr.mxu0 %v185
    %3035 = vmatpush1.msra.mxu0 %v184
    %3036 = vmatprep.subr.mxu0 %v309
    %3037 = vmatpush2.msra.mxu0 %v308
    %3038 = vmatprep.subr.mxu0 %v305
    %3039 = vmatpush2.msra.mxu0 %v304
    %3040 = vmatprep.subr.mxu0 %v301
    %3041 = vmatpush2.msra.mxu0 %v300
    %3042 = vmatprep.subr.mxu0 %v297
    %3043 = vmatpush2.msra.mxu0 %v296
    %3044 = vmatprep.subr.mxu0 %v293
    %3045 = vmatpush2.msra.mxu0 %v292
    %3046 = vmatprep.subr.mxu0 %v289
    %3047 = vmatpush2.msra.mxu0 %v288
    %3048 = vmatprep.subr.mxu0 %v285
    %3049 = vmatpush2.msra.mxu0 %v284
    %3050 = vmatprep.subr.mxu0 %v281
    %3051 = vmatpush2.msra.mxu0 %v280
    %3052 = vmatprep.subr.mxu0 %v277
    %3053 = vmatpush2.msra.mxu0 %v276
    %3054 = vmatprep.subr.mxu0 %v273
    %3055 = vmatpush2.msra.mxu0 %v272
    %3056 = vmatprep.subr.mxu0 %v269
    %3057 = vmatpush2.msra.mxu0 %v268
    %3058 = vmatprep.subr.mxu0 %v265
    %3059 = vmatpush2.msra.mxu0 %v264
    %3060 = vmatprep.subr.mxu0 %v261
    %3061 = vmatpush2.msra.mxu0 %v260
    %3062 = vmatprep.subr.mxu0 %v257
    %3063 = vmatpush2.msra.mxu0 %v256
    %3064 = vmatprep.subr.mxu0 %v253
    %3065 = vmatpush2.msra.mxu0 %v252
    %3066 = vmatprep.subr.mxu0 %v249
    %3067 = vmatpush2.msra.mxu0 %v248
    %3068 = vmatprep.mubr.f32.mxu0 %v2564
    %3069 = vmatmul.mubr.f32.gmra.mxu0 %v2925
    %v3070 = vpop.f32.mrf.mxu0
    %v3071 = vadd.f32 %v714, %v3070
    %v3072 = vpop.f32.mrf.mxu0
    %v3073 = vadd.f32 %v718, %v3072
    %3074 = vmatprep.mubr.f32.mxu0 %v2565
    %3075 = vmatmul.mubr.f32.gmra.mxu0 %v2926
    %v3076 = vpop.f32.mrf.mxu0
    %v3077 = vadd.f32 %v714, %v3076
    %v3078 = vpop.f32.mrf.mxu0
    %v3079 = vadd.f32 %v718, %v3078
    %3080 = vdwg.mxu0
    %v3081 = vmul.f32 %v2994, 0.5
    %v3082 = vmul.f32 %v3000, 0.5
    %v3083 = vtanh.pop %v3081
    %v3084 = vtanh.pop %v3082
    %v3085 = vmul.f32 %v3083, 0.5
    %v3086 = vmul.f32 %v3084, 0.5
    %v3087 = vadd.f32 %v3085, 0.5
    %v3088 = vadd.f32 %v3086, 0.5
    %v3089 = vmul.f32 %v2996, 0.5
    %v3090 = vmul.f32 %v3002, 0.5
    %v3091 = vtanh.pop %v3089
    %v3092 = vtanh.pop %v3090
    %v3093 = vmul.f32 %v3091, 0.5
    %v3094 = vmul.f32 %v3092, 0.5
    %v3095 = vadd.f32 %v3093, 0.5
    %v3096 = vadd.f32 %v3094, 0.5
    %v3097 = vtanh.pop %v3071
    %v3098 = vtanh.pop %v3077
    %v3099 = vmul.f32 %v3073, 0.5
    %v3100 = vmul.f32 %v3079, 0.5
    %v3101 = vtanh.pop %v3099
    %v3102 = vtanh.pop %v3100
    %v3103 = vmul.f32 %v3101, 0.5
    %v3104 = vmul.f32 %v3102, 0.5
    %v3105 = vadd.f32 %v3103, 0.5
    %v3106 = vadd.f32 %v3104, 0.5
    %v3107 = vmul.f32 %v3095, %v2560
    %v3108 = vmul.f32 %v3096, %v2561
    %v3109 = vmul.f32 %v3087, %v3097
    %v3110 = vmul.f32 %v3088, %v3098
    %v3111 = vadd.f32 %v3107, %v3109
    %v3112 = vadd.f32 %v3108, %v3110
    %v3113 = vtanh.pop %v3111
    %v3114 = vtanh.pop %v3112
    %v3115 = vmul.f32 %v3105, %v3113
    %v3116 = vmul.f32 %v3106, %v3114
    %s3117 = scalar_lea.vmem [#allocation6], 80
    %v3118 = vld [vmem:[%s3117] sm:$0xff]
    %v3119 = vld [vmem:[%s3117 + $0x8] sm:$0xff]
    %3120 = vmatprep.subr.mxu0 %v179
    %3121 = vmatpush1.msra.mxu0 %v178
    %3122 = vmatprep.subr.mxu0 %v175
    %3123 = vmatpush1.msra.mxu0 %v174
    %3124 = vmatprep.subr.mxu0 %v171
    %3125 = vmatpush1.msra.mxu0 %v170
    %3126 = vmatprep.subr.mxu0 %v167
    %3127 = vmatpush1.msra.mxu0 %v166
    %3128 = vmatprep.subr.mxu0 %v163
    %3129 = vmatpush1.msra.mxu0 %v162
    %3130 = vmatprep.subr.mxu0 %v159
    %3131 = vmatpush1.msra.mxu0 %v158
    %3132 = vmatprep.subr.mxu0 %v155
    %3133 = vmatpush1.msra.mxu0 %v154
    %3134 = vmatprep.subr.mxu0 %v151
    %3135 = vmatpush1.msra.mxu0 %v150
    %3136 = vmatprep.subr.mxu0 %v147
    %3137 = vmatpush1.msra.mxu0 %v146
    %3138 = vmatprep.subr.mxu0 %v143
    %3139 = vmatpush1.msra.mxu0 %v142
    %3140 = vmatprep.subr.mxu0 %v139
    %3141 = vmatpush1.msra.mxu0 %v138
    %3142 = vmatprep.subr.mxu0 %v135
    %3143 = vmatpush1.msra.mxu0 %v134
    %3144 = vmatprep.subr.mxu0 %v131
    %3145 = vmatpush1.msra.mxu0 %v130
    %3146 = vmatprep.subr.mxu0 %v127
    %3147 = vmatpush1.msra.mxu0 %v126
    %3148 = vmatprep.subr.mxu0 %v123
    %3149 = vmatpush1.msra.mxu0 %v122
    %3150 = vmatprep.subr.mxu0 %v119
    %3151 = vmatpush1.msra.mxu0 %v118
    %3152 = vmatprep.subr.mxu0 0.0
    %3153 = vmatpush2.msra.mxu0 0.0
    %3154 = vmatprep.subr.mxu0 0.0
    %3155 = vmatpush2.msra.mxu0 0.0
    %3156 = vmatprep.subr.mxu0 0.0
    %3157 = vmatpush2.msra.mxu0 0.0
    %3158 = vmatprep.subr.mxu0 0.0
    %3159 = vmatpush2.msra.mxu0 0.0
    %3160 = vmatprep.subr.mxu0 0.0
    %3161 = vmatpush2.msra.mxu0 0.0
    %3162 = vmatprep.subr.mxu0 0.0
    %3163 = vmatpush2.msra.mxu0 0.0
    %3164 = vmatprep.subr.mxu0 0.0
    %3165 = vmatpush2.msra.mxu0 0.0
    %3166 = vmatprep.subr.mxu0 0.0
    %3167 = vmatpush2.msra.mxu0 0.0
    %3168 = vmatprep.subr.mxu0 0.0
    %3169 = vmatpush2.msra.mxu0 0.0
    %3170 = vmatprep.subr.mxu0 0.0
    %3171 = vmatpush2.msra.mxu0 0.0
    %3172 = vmatprep.subr.mxu0 0.0
    %3173 = vmatpush2.msra.mxu0 0.0
    %3174 = vmatprep.subr.mxu0 0.0
    %3175 = vmatpush2.msra.mxu0 0.0
    %3176 = vmatprep.subr.mxu0 0.0
    %3177 = vmatpush2.msra.mxu0 0.0
    %3178 = vmatprep.subr.mxu0 0.0
    %3179 = vmatpush2.msra.mxu0 0.0
    %3180 = vmatprep.subr.mxu0 0.0
    %3181 = vmatpush2.msra.mxu0 0.0
    %3182 = vmatprep.subr.mxu0 0.0
    %3183 = vmatpush2.msra.mxu0 0.0
    %3184 = vmatprep.mubr.f32.mxu0 0.0
    %3185 = vmatmul.mubr.f32.gmra.mxu0 %v2925
    %v3186 = vpop.f32.mrf.mxu0
    %v3187 = vadd.f32 0.0, %v3186
    %v3188 = vpop.f32.mrf.mxu0
    %v3189 = vadd.f32 0.0, %v3188
    %3190 = vmatprep.mubr.f32.mxu0 0.0
    %3191 = vmatmul.mubr.f32.gmra.mxu0 %v2926
    %v3192 = vpop.f32.mrf.mxu0
    %v3193 = vadd.f32 0.0, %v3192
    %v3194 = vpop.f32.mrf.mxu0
    %v3195 = vadd.f32 0.0, %v3194
    %3196 = vdwg.mxu0
    %3197 = vmatprep.subr.mxu0 %v181
    %3198 = vmatpush1.msra.mxu0 %v180
    %3199 = vmatprep.subr.mxu0 %v177
    %3200 = vmatpush1.msra.mxu0 %v176
    %3201 = vmatprep.subr.mxu0 %v173
    %3202 = vmatpush1.msra.mxu0 %v172
    %3203 = vmatprep.subr.mxu0 %v169
    %3204 = vmatpush1.msra.mxu0 %v168
    %3205 = vmatprep.subr.mxu0 %v165
    %3206 = vmatpush1.msra.mxu0 %v164
    %3207 = vmatprep.subr.mxu0 %v161
    %3208 = vmatpush1.msra.mxu0 %v160
    %3209 = vmatprep.subr.mxu0 %v157
    %3210 = vmatpush1.msra.mxu0 %v156
    %3211 = vmatprep.subr.mxu0 %v153
    %3212 = vmatpush1.msra.mxu0 %v152
    %3213 = vmatprep.subr.mxu0 %v149
    %3214 = vmatpush1.msra.mxu0 %v148
    %3215 = vmatprep.subr.mxu0 %v145
    %3216 = vmatpush1.msra.mxu0 %v144
    %3217 = vmatprep.subr.mxu0 %v141
    %3218 = vmatpush1.msra.mxu0 %v140
    %3219 = vmatprep.subr.mxu0 %v137
    %3220 = vmatpush1.msra.mxu0 %v136
    %3221 = vmatprep.subr.mxu0 %v133
    %3222 = vmatpush1.msra.mxu0 %v132
    %3223 = vmatprep.subr.mxu0 %v129
    %3224 = vmatpush1.msra.mxu0 %v128
    %3225 = vmatprep.subr.mxu0 %v125
    %3226 = vmatpush1.msra.mxu0 %v124
    %3227 = vmatprep.subr.mxu0 %v121
    %3228 = vmatpush1.msra.mxu0 %v120
    %3229 = vmatprep.subr.mxu0 0.0
    %3230 = vmatpush2.msra.mxu0 0.0
    %3231 = vmatprep.subr.mxu0 0.0
    %3232 = vmatpush2.msra.mxu0 0.0
    %3233 = vmatprep.subr.mxu0 0.0
    %3234 = vmatpush2.msra.mxu0 0.0
    %3235 = vmatprep.subr.mxu0 0.0
    %3236 = vmatpush2.msra.mxu0 0.0
    %3237 = vmatprep.subr.mxu0 0.0
    %3238 = vmatpush2.msra.mxu0 0.0
    %3239 = vmatprep.subr.mxu0 0.0
    %3240 = vmatpush2.msra.mxu0 0.0
    %3241 = vmatprep.subr.mxu0 0.0
    %3242 = vmatpush2.msra.mxu0 0.0
    %3243 = vmatprep.subr.mxu0 0.0
    %3244 = vmatpush2.msra.mxu0 0.0
    %3245 = vmatprep.subr.mxu0 0.0
    %3246 = vmatpush2.msra.mxu0 0.0
    %3247 = vmatprep.subr.mxu0 0.0
    %3248 = vmatpush2.msra.mxu0 0.0
    %3249 = vmatprep.subr.mxu0 0.0
    %3250 = vmatpush2.msra.mxu0 0.0
    %3251 = vmatprep.subr.mxu0 0.0
    %3252 = vmatpush2.msra.mxu0 0.0
    %3253 = vmatprep.subr.mxu0 0.0
    %3254 = vmatpush2.msra.mxu0 0.0
    %3255 = vmatprep.subr.mxu0 0.0
    %3256 = vmatpush2.msra.mxu0 0.0
    %3257 = vmatprep.subr.mxu0 0.0
    %3258 = vmatpush2.msra.mxu0 0.0
    %3259 = vmatprep.subr.mxu0 0.0
    %3260 = vmatpush2.msra.mxu0 0.0
    %3261 = vmatprep.mubr.f32.mxu0 0.0
    %3262 = vmatmul.mubr.f32.gmra.mxu0 %v2925
    %v3263 = vpop.f32.mrf.mxu0
    %v3264 = vadd.f32 0.0, %v3263
    %v3265 = vpop.f32.mrf.mxu0
    %v3266 = vadd.f32 0.0, %v3265
    %3267 = vmatprep.mubr.f32.mxu0 0.0
    %3268 = vmatmul.mubr.f32.gmra.mxu0 %v2926
    %v3269 = vpop.f32.mrf.mxu0
    %v3270 = vadd.f32 0.0, %v3269
    %v3271 = vpop.f32.mrf.mxu0
    %v3272 = vadd.f32 0.0, %v3271
    %3273 = vdwg.mxu0
    %v3275 = vsel %vm476, %v3118, 0
    %v3278 = vsel %vm476, %v3119, 0
    %3280 = vmatprep.subr.mxu0 0.0
    %3281 = vmatpush1.msra.mxu0 0.0
    %3282 = vmatprep.subr.mxu0 0.0
    %3283 = vmatpush1.msra.mxu0 0.0
    %3284 = vmatprep.subr.mxu0 0.0
    %3285 = vmatpush1.msra.mxu0 0.0
    %3286 = vmatprep.subr.mxu0 0.0
    %3287 = vmatpush1.msra.mxu0 0.0
    %3288 = vmatprep.subr.mxu0 0.0
    %3289 = vmatpush1.msra.mxu0 0.0
    %3290 = vmatprep.subr.mxu0 0.0
    %3291 = vmatpush1.msra.mxu0 0.0
    %3292 = vmatprep.subr.mxu0 0.0
    %3293 = vmatpush1.msra.mxu0 0.0
    %3294 = vmatprep.subr.mxu0 0.0
    %3295 = vmatpush1.msra.mxu0 0.0
    %3296 = vmatprep.subr.mxu0 0.0
    %3297 = vmatpush1.msra.mxu0 0.0
    %3298 = vmatprep.subr.mxu0 0.0
    %3299 = vmatpush1.msra.mxu0 0.0
    %3300 = vmatprep.subr.mxu0 0.0
    %3301 = vmatpush1.msra.mxu0 0.0
    %3302 = vmatprep.subr.mxu0 0.0
    %3303 = vmatpush1.msra.mxu0 0.0
    %3304 = vmatprep.subr.mxu0 0.0
    %3305 = vmatpush1.msra.mxu0 0.0
    %3306 = vmatprep.subr.mxu0 0.0
    %3307 = vmatpush1.msra.mxu0 0.0
    %3308 = vmatprep.subr.mxu0 %v115
    %3309 = vmatpush1.msra.mxu0 %v114
    %3310 = vmatprep.subr.mxu0 %v111
    %3311 = vmatpush1.msra.mxu0 %v110
    %3312 = vmatprep.subr.mxu0 0.0
    %3313 = vmatpush2.msra.mxu0 0.0
    %3314 = vmatprep.subr.mxu0 0.0
    %3315 = vmatpush2.msra.mxu0 0.0
    %3316 = vmatprep.subr.mxu0 0.0
    %3317 = vmatpush2.msra.mxu0 0.0
    %3318 = vmatprep.subr.mxu0 0.0
    %3319 = vmatpush2.msra.mxu0 0.0
    %3320 = vmatprep.subr.mxu0 0.0
    %3321 = vmatpush2.msra.mxu0 0.0
    %3322 = vmatprep.subr.mxu0 0.0
    %3323 = vmatpush2.msra.mxu0 0.0
    %3324 = vmatprep.subr.mxu0 0.0
    %3325 = vmatpush2.msra.mxu0 0.0
    %3326 = vmatprep.subr.mxu0 0.0
    %3327 = vmatpush2.msra.mxu0 0.0
    %3328 = vmatprep.subr.mxu0 0.0
    %3329 = vmatpush2.msra.mxu0 0.0
    %3330 = vmatprep.subr.mxu0 0.0
    %3331 = vmatpush2.msra.mxu0 0.0
    %3332 = vmatprep.subr.mxu0 0.0
    %3333 = vmatpush2.msra.mxu0 0.0
    %3334 = vmatprep.subr.mxu0 0.0
    %3335 = vmatpush2.msra.mxu0 0.0
    %3336 = vmatprep.subr.mxu0 0.0
    %3337 = vmatpush2.msra.mxu0 0.0
    %3338 = vmatprep.subr.mxu0 0.0
    %3339 = vmatpush2.msra.mxu0 0.0
    %3340 = vmatprep.subr.mxu0 0.0
    %3341 = vmatpush2.msra.mxu0 0.0
    %3342 = vmatprep.subr.mxu0 0.0
    %3343 = vmatpush2.msra.mxu0 0.0
    %3344 = vmatprep.mubr.f32.mxu0 0.0
    %3345 = vmatmul.mubr.f32.gmra.mxu0 %v3275
    %v3346 = vpop.f32.mrf.mxu0
    %v3347 = vadd.f32 %v3187, %v3346
    %v3348 = vpop.f32.mrf.mxu0
    %v3349 = vadd.f32 %v3189, %v3348
    %3350 = vmatprep.mubr.f32.mxu0 0.0
    %3351 = vmatmul.mubr.f32.gmra.mxu0 %v3278
    %v3352 = vpop.f32.mrf.mxu0
    %v3353 = vadd.f32 %v3193, %v3352
    %v3354 = vpop.f32.mrf.mxu0
    %v3355 = vadd.f32 %v3195, %v3354
    %3356 = vdwg.mxu0
    %3357 = vmatprep.subr.mxu0 0.0
    %3358 = vmatpush1.msra.mxu0 0.0
    %3359 = vmatprep.subr.mxu0 0.0
    %3360 = vmatpush1.msra.mxu0 0.0
    %3361 = vmatprep.subr.mxu0 0.0
    %3362 = vmatpush1.msra.mxu0 0.0
    %3363 = vmatprep.subr.mxu0 0.0
    %3364 = vmatpush1.msra.mxu0 0.0
    %3365 = vmatprep.subr.mxu0 0.0
    %3366 = vmatpush1.msra.mxu0 0.0
    %3367 = vmatprep.subr.mxu0 0.0
    %3368 = vmatpush1.msra.mxu0 0.0
    %3369 = vmatprep.subr.mxu0 0.0
    %3370 = vmatpush1.msra.mxu0 0.0
    %3371 = vmatprep.subr.mxu0 0.0
    %3372 = vmatpush1.msra.mxu0 0.0
    %3373 = vmatprep.subr.mxu0 0.0
    %3374 = vmatpush1.msra.mxu0 0.0
    %3375 = vmatprep.subr.mxu0 0.0
    %3376 = vmatpush1.msra.mxu0 0.0
    %3377 = vmatprep.subr.mxu0 0.0
    %3378 = vmatpush1.msra.mxu0 0.0
    %3379 = vmatprep.subr.mxu0 0.0
    %3380 = vmatpush1.msra.mxu0 0.0
    %3381 = vmatprep.subr.mxu0 0.0
    %3382 = vmatpush1.msra.mxu0 0.0
    %3383 = vmatprep.subr.mxu0 0.0
    %3384 = vmatpush1.msra.mxu0 0.0
    %3385 = vmatprep.subr.mxu0 %v117
    %3386 = vmatpush1.msra.mxu0 %v116
    %3387 = vmatprep.subr.mxu0 %v113
    %3388 = vmatpush1.msra.mxu0 %v112
    %3389 = vmatprep.subr.mxu0 0.0
    %3390 = vmatpush2.msra.mxu0 0.0
    %3391 = vmatprep.subr.mxu0 0.0
    %3392 = vmatpush2.msra.mxu0 0.0
    %3393 = vmatprep.subr.mxu0 0.0
    %3394 = vmatpush2.msra.mxu0 0.0
    %3395 = vmatprep.subr.mxu0 0.0
    %3396 = vmatpush2.msra.mxu0 0.0
    %3397 = vmatprep.subr.mxu0 0.0
    %3398 = vmatpush2.msra.mxu0 0.0
    %3399 = vmatprep.subr.mxu0 0.0
    %3400 = vmatpush2.msra.mxu0 0.0
    %3401 = vmatprep.subr.mxu0 0.0
    %3402 = vmatpush2.msra.mxu0 0.0
    %3403 = vmatprep.subr.mxu0 0.0
    %3404 = vmatpush2.msra.mxu0 0.0
    %3405 = vmatprep.subr.mxu0 0.0
    %3406 = vmatpush2.msra.mxu0 0.0
    %3407 = vmatprep.subr.mxu0 0.0
    %3408 = vmatpush2.msra.mxu0 0.0
    %3409 = vmatprep.subr.mxu0 0.0
    %3410 = vmatpush2.msra.mxu0 0.0
    %3411 = vmatprep.subr.mxu0 0.0
    %3412 = vmatpush2.msra.mxu0 0.0
    %3413 = vmatprep.subr.mxu0 0.0
    %3414 = vmatpush2.msra.mxu0 0.0
    %3415 = vmatprep.subr.mxu0 0.0
    %3416 = vmatpush2.msra.mxu0 0.0
    %3417 = vmatprep.subr.mxu0 0.0
    %3418 = vmatpush2.msra.mxu0 0.0
    %3419 = vmatprep.subr.mxu0 0.0
    %3420 = vmatpush2.msra.mxu0 0.0
    %3421 = vmatprep.mubr.f32.mxu0 0.0
    %3422 = vmatmul.mubr.f32.gmra.mxu0 %v3275
    %v3423 = vpop.f32.mrf.mxu0
    %v3424 = vadd.f32 %v3264, %v3423
    %v3425 = vpop.f32.mrf.mxu0
    %v3426 = vadd.f32 %v3266, %v3425
    %3427 = vmatprep.mubr.f32.mxu0 0.0
    %3428 = vmatmul.mubr.f32.gmra.mxu0 %v3278
    %v3429 = vpop.f32.mrf.mxu0
    %v3430 = vadd.f32 %v3270, %v3429
    %v3431 = vpop.f32.mrf.mxu0
    %v3432 = vadd.f32 %v3272, %v3431
    %3433 = vdwg.mxu0
    %v3434 = vadd.f32 %v3347, %v641
    %v3435 = vadd.f32 %v3349, %v645
    %v3436 = vadd.f32 %v3424, %v649
    %v3437 = vadd.f32 %v3426, %v653
    %v3438 = vadd.f32 %v3353, %v641
    %v3439 = vadd.f32 %v3355, %v645
    %v3440 = vadd.f32 %v3430, %v649
    %v3441 = vadd.f32 %v3432, %v653
    %v3442 = vmul.f32 %v3434, 0.5
    %v3443 = vmul.f32 %v3438, 0.5
    %v3444 = vtanh.pop %v3442
    %v3445 = vtanh.pop %v3443
    %v3446 = vmul.f32 %v3444, 0.5
    %v3447 = vmul.f32 %v3445, 0.5
    %v3448 = vadd.f32 %v3446, 0.5
    %v3449 = vadd.f32 %v3447, 0.5
    %v3450 = vmul.f32 %v3435, 0.5
    %v3451 = vmul.f32 %v3439, 0.5
    %v3452 = vtanh.pop %v3450
    %v3453 = vtanh.pop %v3451
    %v3454 = vmul.f32 %v3452, 0.5
    %v3455 = vmul.f32 %v3453, 0.5
    %v3456 = vadd.f32 %v3454, 0.5
    %v3457 = vadd.f32 %v3455, 0.5
    %v3458 = vtanh.pop %v3436
    %v3459 = vtanh.pop %v3440
    %v3460 = vmul.f32 %v3437, 0.5
    %v3461 = vmul.f32 %v3441, 0.5
    %v3462 = vtanh.pop %v3460
    %v3463 = vtanh.pop %v3461
    %v3464 = vmul.f32 %v3462, 0.5
    %v3465 = vmul.f32 %v3463, 0.5
    %v3466 = vadd.f32 %v3464, 0.5
    %v3467 = vadd.f32 %v3465, 0.5
    %v3468 = vmul.f32 %v3456, %v2921
    %v3469 = vmul.f32 %v3457, %v2922
    %v3470 = vmul.f32 %v3448, %v3458
    %v3471 = vmul.f32 %v3449, %v3459
    %v3472 = vadd.f32 %v3468, %v3470
    %v3473 = vadd.f32 %v3469, %v3471
    %v3474 = vtanh.pop %v3472
    %v3475 = vtanh.pop %v3473
    %v3476 = vmul.f32 %v3466, %v3474
    %v3477 = vmul.f32 %v3467, %v3475
    %3478 = vmatprep.subr.mxu0 %v243
    %3479 = vmatpush1.msra.mxu0 %v242
    %3480 = vmatprep.subr.mxu0 %v239
    %3481 = vmatpush1.msra.mxu0 %v238
    %3482 = vmatprep.subr.mxu0 %v235
    %3483 = vmatpush1.msra.mxu0 %v234
    %3484 = vmatprep.subr.mxu0 %v231
    %3485 = vmatpush1.msra.mxu0 %v230
    %3486 = vmatprep.subr.mxu0 %v227
    %3487 = vmatpush1.msra.mxu0 %v226
    %3488 = vmatprep.subr.mxu0 %v223
    %3489 = vmatpush1.msra.mxu0 %v222
    %3490 = vmatprep.subr.mxu0 %v219
    %3491 = vmatpush1.msra.mxu0 %v218
    %3492 = vmatprep.subr.mxu0 %v215
    %3493 = vmatpush1.msra.mxu0 %v214
    %3494 = vmatprep.subr.mxu0 %v211
    %3495 = vmatpush1.msra.mxu0 %v210
    %3496 = vmatprep.subr.mxu0 %v207
    %3497 = vmatpush1.msra.mxu0 %v206
    %3498 = vmatprep.subr.mxu0 %v203
    %3499 = vmatpush1.msra.mxu0 %v202
    %3500 = vmatprep.subr.mxu0 %v199
    %3501 = vmatpush1.msra.mxu0 %v198
    %3502 = vmatprep.subr.mxu0 %v195
    %3503 = vmatpush1.msra.mxu0 %v194
    %3504 = vmatprep.subr.mxu0 %v191
    %3505 = vmatpush1.msra.mxu0 %v190
    %3506 = vmatprep.subr.mxu0 %v187
    %3507 = vmatpush1.msra.mxu0 %v186
    %3508 = vmatprep.subr.mxu0 %v183
    %3509 = vmatpush1.msra.mxu0 %v182
    %3510 = vmatprep.subr.mxu0 %v307
    %3511 = vmatpush2.msra.mxu0 %v306
    %3512 = vmatprep.subr.mxu0 %v303
    %3513 = vmatpush2.msra.mxu0 %v302
    %3514 = vmatprep.subr.mxu0 %v299
    %3515 = vmatpush2.msra.mxu0 %v298
    %3516 = vmatprep.subr.mxu0 %v295
    %3517 = vmatpush2.msra.mxu0 %v294
    %3518 = vmatprep.subr.mxu0 %v291
    %3519 = vmatpush2.msra.mxu0 %v290
    %3520 = vmatprep.subr.mxu0 %v287
    %3521 = vmatpush2.msra.mxu0 %v286
    %3522 = vmatprep.subr.mxu0 %v283
    %3523 = vmatpush2.msra.mxu0 %v282
    %3524 = vmatprep.subr.mxu0 %v279
    %3525 = vmatpush2.msra.mxu0 %v278
    %3526 = vmatprep.subr.mxu0 %v275
    %3527 = vmatpush2.msra.mxu0 %v274
    %3528 = vmatprep.subr.mxu0 %v271
    %3529 = vmatpush2.msra.mxu0 %v270
    %3530 = vmatprep.subr.mxu0 %v267
    %3531 = vmatpush2.msra.mxu0 %v266
    %3532 = vmatprep.subr.mxu0 %v263
    %3533 = vmatpush2.msra.mxu0 %v262
    %3534 = vmatprep.subr.mxu0 %v259
    %3535 = vmatpush2.msra.mxu0 %v258
    %3536 = vmatprep.subr.mxu0 %v255
    %3537 = vmatpush2.msra.mxu0 %v254
    %3538 = vmatprep.subr.mxu0 %v251
    %3539 = vmatpush2.msra.mxu0 %v250
    %3540 = vmatprep.subr.mxu0 %v247
    %3541 = vmatpush2.msra.mxu0 %v246
    %3542 = vmatprep.mubr.f32.mxu0 %v3115
    %3543 = vmatmul.mubr.f32.gmra.mxu0 %v3476
    %v3544 = vpop.f32.mrf.mxu0
    %v3545 = vadd.f32 %v706, %v3544
    %v3546 = vpop.f32.mrf.mxu0
    %v3547 = vadd.f32 %v710, %v3546
    %3548 = vmatprep.mubr.f32.mxu0 %v3116
    %3549 = vmatmul.mubr.f32.gmra.mxu0 %v3477
    %v3550 = vpop.f32.mrf.mxu0
    %v3551 = vadd.f32 %v706, %v3550
    %v3552 = vpop.f32.mrf.mxu0
    %v3553 = vadd.f32 %v710, %v3552
    %3554 = vdwg.mxu0
    %3555 = vmatprep.subr.mxu0 %v245
    %3556 = vmatpush1.msra.mxu0 %v244
    %3557 = vmatprep.subr.mxu0 %v241
    %3558 = vmatpush1.msra.mxu0 %v240
    %3559 = vmatprep.subr.mxu0 %v237
    %3560 = vmatpush1.msra.mxu0 %v236
    %3561 = vmatprep.subr.mxu0 %v233
    %3562 = vmatpush1.msra.mxu0 %v232
    %3563 = vmatprep.subr.mxu0 %v229
    %3564 = vmatpush1.msra.mxu0 %v228
    %3565 = vmatprep.subr.mxu0 %v225
    %3566 = vmatpush1.msra.mxu0 %v224
    %3567 = vmatprep.subr.mxu0 %v221
    %3568 = vmatpush1.msra.mxu0 %v220
    %3569 = vmatprep.subr.mxu0 %v217
    %3570 = vmatpush1.msra.mxu0 %v216
    %3571 = vmatprep.subr.mxu0 %v213
    %3572 = vmatpush1.msra.mxu0 %v212
    %3573 = vmatprep.subr.mxu0 %v209
    %3574 = vmatpush1.msra.mxu0 %v208
    %3575 = vmatprep.subr.mxu0 %v205
    %3576 = vmatpush1.msra.mxu0 %v204
    %3577 = vmatprep.subr.mxu0 %v201
    %3578 = vmatpush1.msra.mxu0 %v200
    %3579 = vmatprep.subr.mxu0 %v197
    %3580 = vmatpush1.msra.mxu0 %v196
    %3581 = vmatprep.subr.mxu0 %v193
    %3582 = vmatpush1.msra.mxu0 %v192
    %3583 = vmatprep.subr.mxu0 %v189
    %3584 = vmatpush1.msra.mxu0 %v188
    %3585 = vmatprep.subr.mxu0 %v185
    %3586 = vmatpush1.msra.mxu0 %v184
    %3587 = vmatprep.subr.mxu0 %v309
    %3588 = vmatpush2.msra.mxu0 %v308
    %3589 = vmatprep.subr.mxu0 %v305
    %3590 = vmatpush2.msra.mxu0 %v304
    %3591 = vmatprep.subr.mxu0 %v301
    %3592 = vmatpush2.msra.mxu0 %v300
    %3593 = vmatprep.subr.mxu0 %v297
    %3594 = vmatpush2.msra.mxu0 %v296
    %3595 = vmatprep.subr.mxu0 %v293
    %3596 = vmatpush2.msra.mxu0 %v292
    %3597 = vmatprep.subr.mxu0 %v289
    %3598 = vmatpush2.msra.mxu0 %v288
    %3599 = vmatprep.subr.mxu0 %v285
    %3600 = vmatpush2.msra.mxu0 %v284
    %3601 = vmatprep.subr.mxu0 %v281
    %3602 = vmatpush2.msra.mxu0 %v280
    %3603 = vmatprep.subr.mxu0 %v277
    %3604 = vmatpush2.msra.mxu0 %v276
    %3605 = vmatprep.subr.mxu0 %v273
    %3606 = vmatpush2.msra.mxu0 %v272
    %3607 = vmatprep.subr.mxu0 %v269
    %3608 = vmatpush2.msra.mxu0 %v268
    %3609 = vmatprep.subr.mxu0 %v265
    %3610 = vmatpush2.msra.mxu0 %v264
    %3611 = vmatprep.subr.mxu0 %v261
    %3612 = vmatpush2.msra.mxu0 %v260
    %3613 = vmatprep.subr.mxu0 %v257
    %3614 = vmatpush2.msra.mxu0 %v256
    %3615 = vmatprep.subr.mxu0 %v253
    %3616 = vmatpush2.msra.mxu0 %v252
    %3617 = vmatprep.subr.mxu0 %v249
    %3618 = vmatpush2.msra.mxu0 %v248
    %3619 = vmatprep.mubr.f32.mxu0 %v3115
    %3620 = vmatmul.mubr.f32.gmra.mxu0 %v3476
    %v3621 = vpop.f32.mrf.mxu0
    %v3622 = vadd.f32 %v714, %v3621
    %v3623 = vpop.f32.mrf.mxu0
    %v3624 = vadd.f32 %v718, %v3623
    %3625 = vmatprep.mubr.f32.mxu0 %v3116
    %3626 = vmatmul.mubr.f32.gmra.mxu0 %v3477
    %v3627 = vpop.f32.mrf.mxu0
    %v3628 = vadd.f32 %v714, %v3627
    %v3629 = vpop.f32.mrf.mxu0
    %v3630 = vadd.f32 %v718, %v3629
    %3631 = vdwg.mxu0
    %v3632 = vmul.f32 %v3545, 0.5
    %v3633 = vmul.f32 %v3551, 0.5
    %v3634 = vtanh.pop %v3632
    %v3635 = vtanh.pop %v3633
    %v3636 = vmul.f32 %v3634, 0.5
    %v3637 = vmul.f32 %v3635, 0.5
    %v3638 = vadd.f32 %v3636, 0.5
    %v3639 = vadd.f32 %v3637, 0.5
    %v3640 = vmul.f32 %v3547, 0.5
    %v3641 = vmul.f32 %v3553, 0.5
    %v3642 = vtanh.pop %v3640
    %v3643 = vtanh.pop %v3641
    %v3644 = vmul.f32 %v3642, 0.5
    %v3645 = vmul.f32 %v3643, 0.5
    %v3646 = vadd.f32 %v3644, 0.5
    %v3647 = vadd.f32 %v3645, 0.5
    %v3648 = vtanh.pop %v3622
    %v3649 = vtanh.pop %v3628
    %v3650 = vmul.f32 %v3624, 0.5
    %v3651 = vmul.f32 %v3630, 0.5
    %v3652 = vtanh.pop %v3650
    %v3653 = vtanh.pop %v3651
    %v3654 = vmul.f32 %v3652, 0.5
    %v3655 = vmul.f32 %v3653, 0.5
    %v3656 = vadd.f32 %v3654, 0.5
    %v3657 = vadd.f32 %v3655, 0.5
    %v3658 = vmul.f32 %v3646, %v3111
    %v3659 = vmul.f32 %v3647, %v3112
    %v3660 = vmul.f32 %v3638, %v3648
    %v3661 = vmul.f32 %v3639, %v3649
    %v3662 = vadd.f32 %v3658, %v3660
    %v3663 = vadd.f32 %v3659, %v3661
    %v3664 = vtanh.pop %v3662
    %v3665 = vtanh.pop %v3663
    %v3666 = vmul.f32 %v3656, %v3664
    %v3667 = vmul.f32 %v3657, %v3665
    %s3668 = scalar_lea.vmem [#allocation6], 96
    %v3669 = vld [vmem:[%s3668] sm:$0xff]
    %v3670 = vld [vmem:[%s3668 + $0x8] sm:$0xff]
    %3671 = vmatprep.subr.mxu0 %v179
    %3672 = vmatpush1.msra.mxu0 %v178
    %3673 = vmatprep.subr.mxu0 %v175
    %3674 = vmatpush1.msra.mxu0 %v174
    %3675 = vmatprep.subr.mxu0 %v171
    %3676 = vmatpush1.msra.mxu0 %v170
    %3677 = vmatprep.subr.mxu0 %v167
    %3678 = vmatpush1.msra.mxu0 %v166
    %3679 = vmatprep.subr.mxu0 %v163
    %3680 = vmatpush1.msra.mxu0 %v162
    %3681 = vmatprep.subr.mxu0 %v159
    %3682 = vmatpush1.msra.mxu0 %v158
    %3683 = vmatprep.subr.mxu0 %v155
    %3684 = vmatpush1.msra.mxu0 %v154
    %3685 = vmatprep.subr.mxu0 %v151
    %3686 = vmatpush1.msra.mxu0 %v150
    %3687 = vmatprep.subr.mxu0 %v147
    %3688 = vmatpush1.msra.mxu0 %v146
    %3689 = vmatprep.subr.mxu0 %v143
    %3690 = vmatpush1.msra.mxu0 %v142
    %3691 = vmatprep.subr.mxu0 %v139
    %3692 = vmatpush1.msra.mxu0 %v138
    %3693 = vmatprep.subr.mxu0 %v135
    %3694 = vmatpush1.msra.mxu0 %v134
    %3695 = vmatprep.subr.mxu0 %v131
    %3696 = vmatpush1.msra.mxu0 %v130
    %3697 = vmatprep.subr.mxu0 %v127
    %3698 = vmatpush1.msra.mxu0 %v126
    %3699 = vmatprep.subr.mxu0 %v123
    %3700 = vmatpush1.msra.mxu0 %v122
    %3701 = vmatprep.subr.mxu0 %v119
    %3702 = vmatpush1.msra.mxu0 %v118
    %3703 = vmatprep.subr.mxu0 0.0
    %3704 = vmatpush2.msra.mxu0 0.0
    %3705 = vmatprep.subr.mxu0 0.0
    %3706 = vmatpush2.msra.mxu0 0.0
    %3707 = vmatprep.subr.mxu0 0.0
    %3708 = vmatpush2.msra.mxu0 0.0
    %3709 = vmatprep.subr.mxu0 0.0
    %3710 = vmatpush2.msra.mxu0 0.0
    %3711 = vmatprep.subr.mxu0 0.0
    %3712 = vmatpush2.msra.mxu0 0.0
    %3713 = vmatprep.subr.mxu0 0.0
    %3714 = vmatpush2.msra.mxu0 0.0
    %3715 = vmatprep.subr.mxu0 0.0
    %3716 = vmatpush2.msra.mxu0 0.0
    %3717 = vmatprep.subr.mxu0 0.0
    %3718 = vmatpush2.msra.mxu0 0.0
    %3719 = vmatprep.subr.mxu0 0.0
    %3720 = vmatpush2.msra.mxu0 0.0
    %3721 = vmatprep.subr.mxu0 0.0
    %3722 = vmatpush2.msra.mxu0 0.0
    %3723 = vmatprep.subr.mxu0 0.0
    %3724 = vmatpush2.msra.mxu0 0.0
    %3725 = vmatprep.subr.mxu0 0.0
    %3726 = vmatpush2.msra.mxu0 0.0
    %3727 = vmatprep.subr.mxu0 0.0
    %3728 = vmatpush2.msra.mxu0 0.0
    %3729 = vmatprep.subr.mxu0 0.0
    %3730 = vmatpush2.msra.mxu0 0.0
    %3731 = vmatprep.subr.mxu0 0.0
    %3732 = vmatpush2.msra.mxu0 0.0
    %3733 = vmatprep.subr.mxu0 0.0
    %3734 = vmatpush2.msra.mxu0 0.0
    %3735 = vmatprep.mubr.f32.mxu0 0.0
    %3736 = vmatmul.mubr.f32.gmra.mxu0 %v3476
    %v3737 = vpop.f32.mrf.mxu0
    %v3738 = vadd.f32 0.0, %v3737
    %v3739 = vpop.f32.mrf.mxu0
    %v3740 = vadd.f32 0.0, %v3739
    %3741 = vmatprep.mubr.f32.mxu0 0.0
    %3742 = vmatmul.mubr.f32.gmra.mxu0 %v3477
    %v3743 = vpop.f32.mrf.mxu0
    %v3744 = vadd.f32 0.0, %v3743
    %v3745 = vpop.f32.mrf.mxu0
    %v3746 = vadd.f32 0.0, %v3745
    %3747 = vdwg.mxu0
    %3748 = vmatprep.subr.mxu0 %v181
    %3749 = vmatpush1.msra.mxu0 %v180
    %3750 = vmatprep.subr.mxu0 %v177
    %3751 = vmatpush1.msra.mxu0 %v176
    %3752 = vmatprep.subr.mxu0 %v173
    %3753 = vmatpush1.msra.mxu0 %v172
    %3754 = vmatprep.subr.mxu0 %v169
    %3755 = vmatpush1.msra.mxu0 %v168
    %3756 = vmatprep.subr.mxu0 %v165
    %3757 = vmatpush1.msra.mxu0 %v164
    %3758 = vmatprep.subr.mxu0 %v161
    %3759 = vmatpush1.msra.mxu0 %v160
    %3760 = vmatprep.subr.mxu0 %v157
    %3761 = vmatpush1.msra.mxu0 %v156
    %3762 = vmatprep.subr.mxu0 %v153
    %3763 = vmatpush1.msra.mxu0 %v152
    %3764 = vmatprep.subr.mxu0 %v149
    %3765 = vmatpush1.msra.mxu0 %v148
    %3766 = vmatprep.subr.mxu0 %v145
    %3767 = vmatpush1.msra.mxu0 %v144
    %3768 = vmatprep.subr.mxu0 %v141
    %3769 = vmatpush1.msra.mxu0 %v140
    %3770 = vmatprep.subr.mxu0 %v137
    %3771 = vmatpush1.msra.mxu0 %v136
    %3772 = vmatprep.subr.mxu0 %v133
    %3773 = vmatpush1.msra.mxu0 %v132
    %3774 = vmatprep.subr.mxu0 %v129
    %3775 = vmatpush1.msra.mxu0 %v128
    %3776 = vmatprep.subr.mxu0 %v125
    %3777 = vmatpush1.msra.mxu0 %v124
    %3778 = vmatprep.subr.mxu0 %v121
    %3779 = vmatpush1.msra.mxu0 %v120
    %3780 = vmatprep.subr.mxu0 0.0
    %3781 = vmatpush2.msra.mxu0 0.0
    %3782 = vmatprep.subr.mxu0 0.0
    %3783 = vmatpush2.msra.mxu0 0.0
    %3784 = vmatprep.subr.mxu0 0.0
    %3785 = vmatpush2.msra.mxu0 0.0
    %3786 = vmatprep.subr.mxu0 0.0
    %3787 = vmatpush2.msra.mxu0 0.0
    %3788 = vmatprep.subr.mxu0 0.0
    %3789 = vmatpush2.msra.mxu0 0.0
    %3790 = vmatprep.subr.mxu0 0.0
    %3791 = vmatpush2.msra.mxu0 0.0
    %3792 = vmatprep.subr.mxu0 0.0
    %3793 = vmatpush2.msra.mxu0 0.0
    %3794 = vmatprep.subr.mxu0 0.0
    %3795 = vmatpush2.msra.mxu0 0.0
    %3796 = vmatprep.subr.mxu0 0.0
    %3797 = vmatpush2.msra.mxu0 0.0
    %3798 = vmatprep.subr.mxu0 0.0
    %3799 = vmatpush2.msra.mxu0 0.0
    %3800 = vmatprep.subr.mxu0 0.0
    %3801 = vmatpush2.msra.mxu0 0.0
    %3802 = vmatprep.subr.mxu0 0.0
    %3803 = vmatpush2.msra.mxu0 0.0
    %3804 = vmatprep.subr.mxu0 0.0
    %3805 = vmatpush2.msra.mxu0 0.0
    %3806 = vmatprep.subr.mxu0 0.0
    %3807 = vmatpush2.msra.mxu0 0.0
    %3808 = vmatprep.subr.mxu0 0.0
    %3809 = vmatpush2.msra.mxu0 0.0
    %3810 = vmatprep.subr.mxu0 0.0
    %3811 = vmatpush2.msra.mxu0 0.0
    %3812 = vmatprep.mubr.f32.mxu0 0.0
    %3813 = vmatmul.mubr.f32.gmra.mxu0 %v3476
    %v3814 = vpop.f32.mrf.mxu0
    %v3815 = vadd.f32 0.0, %v3814
    %v3816 = vpop.f32.mrf.mxu0
    %v3817 = vadd.f32 0.0, %v3816
    %3818 = vmatprep.mubr.f32.mxu0 0.0
    %3819 = vmatmul.mubr.f32.gmra.mxu0 %v3477
    %v3820 = vpop.f32.mrf.mxu0
    %v3821 = vadd.f32 0.0, %v3820
    %v3822 = vpop.f32.mrf.mxu0
    %v3823 = vadd.f32 0.0, %v3822
    %3824 = vdwg.mxu0
    %v3826 = vsel %vm476, %v3669, 0
    %v3829 = vsel %vm476, %v3670, 0
    %3831 = vmatprep.subr.mxu0 0.0
    %3832 = vmatpush1.msra.mxu0 0.0
    %3833 = vmatprep.subr.mxu0 0.0
    %3834 = vmatpush1.msra.mxu0 0.0
    %3835 = vmatprep.subr.mxu0 0.0
    %3836 = vmatpush1.msra.mxu0 0.0
    %3837 = vmatprep.subr.mxu0 0.0
    %3838 = vmatpush1.msra.mxu0 0.0
    %3839 = vmatprep.subr.mxu0 0.0
    %3840 = vmatpush1.msra.mxu0 0.0
    %3841 = vmatprep.subr.mxu0 0.0
    %3842 = vmatpush1.msra.mxu0 0.0
    %3843 = vmatprep.subr.mxu0 0.0
    %3844 = vmatpush1.msra.mxu0 0.0
    %3845 = vmatprep.subr.mxu0 0.0
    %3846 = vmatpush1.msra.mxu0 0.0
    %3847 = vmatprep.subr.mxu0 0.0
    %3848 = vmatpush1.msra.mxu0 0.0
    %3849 = vmatprep.subr.mxu0 0.0
    %3850 = vmatpush1.msra.mxu0 0.0
    %3851 = vmatprep.subr.mxu0 0.0
    %3852 = vmatpush1.msra.mxu0 0.0
    %3853 = vmatprep.subr.mxu0 0.0
    %3854 = vmatpush1.msra.mxu0 0.0
    %3855 = vmatprep.subr.mxu0 0.0
    %3856 = vmatpush1.msra.mxu0 0.0
    %3857 = vmatprep.subr.mxu0 0.0
    %3858 = vmatpush1.msra.mxu0 0.0
    %3859 = vmatprep.subr.mxu0 %v115
    %3860 = vmatpush1.msra.mxu0 %v114
    %3861 = vmatprep.subr.mxu0 %v111
    %3862 = vmatpush1.msra.mxu0 %v110
    %3863 = vmatprep.subr.mxu0 0.0
    %3864 = vmatpush2.msra.mxu0 0.0
    %3865 = vmatprep.subr.mxu0 0.0
    %3866 = vmatpush2.msra.mxu0 0.0
    %3867 = vmatprep.subr.mxu0 0.0
    %3868 = vmatpush2.msra.mxu0 0.0
    %3869 = vmatprep.subr.mxu0 0.0
    %3870 = vmatpush2.msra.mxu0 0.0
    %3871 = vmatprep.subr.mxu0 0.0
    %3872 = vmatpush2.msra.mxu0 0.0
    %3873 = vmatprep.subr.mxu0 0.0
    %3874 = vmatpush2.msra.mxu0 0.0
    %3875 = vmatprep.subr.mxu0 0.0
    %3876 = vmatpush2.msra.mxu0 0.0
    %3877 = vmatprep.subr.mxu0 0.0
    %3878 = vmatpush2.msra.mxu0 0.0
    %3879 = vmatprep.subr.mxu0 0.0
    %3880 = vmatpush2.msra.mxu0 0.0
    %3881 = vmatprep.subr.mxu0 0.0
    %3882 = vmatpush2.msra.mxu0 0.0
    %3883 = vmatprep.subr.mxu0 0.0
    %3884 = vmatpush2.msra.mxu0 0.0
    %3885 = vmatprep.subr.mxu0 0.0
    %3886 = vmatpush2.msra.mxu0 0.0
    %3887 = vmatprep.subr.mxu0 0.0
    %3888 = vmatpush2.msra.mxu0 0.0
    %3889 = vmatprep.subr.mxu0 0.0
    %3890 = vmatpush2.msra.mxu0 0.0
    %3891 = vmatprep.subr.mxu0 0.0
    %3892 = vmatpush2.msra.mxu0 0.0
    %3893 = vmatprep.subr.mxu0 0.0
    %3894 = vmatpush2.msra.mxu0 0.0
    %3895 = vmatprep.mubr.f32.mxu0 0.0
    %3896 = vmatmul.mubr.f32.gmra.mxu0 %v3826
    %v3897 = vpop.f32.mrf.mxu0
    %v3898 = vadd.f32 %v3738, %v3897
    %v3899 = vpop.f32.mrf.mxu0
    %v3900 = vadd.f32 %v3740, %v3899
    %3901 = vmatprep.mubr.f32.mxu0 0.0
    %3902 = vmatmul.mubr.f32.gmra.mxu0 %v3829
    %v3903 = vpop.f32.mrf.mxu0
    %v3904 = vadd.f32 %v3744, %v3903
    %v3905 = vpop.f32.mrf.mxu0
    %v3906 = vadd.f32 %v3746, %v3905
    %3907 = vdwg.mxu0
    %3908 = vmatprep.subr.mxu0 0.0
    %3909 = vmatpush1.msra.mxu0 0.0
    %3910 = vmatprep.subr.mxu0 0.0
    %3911 = vmatpush1.msra.mxu0 0.0
    %3912 = vmatprep.subr.mxu0 0.0
    %3913 = vmatpush1.msra.mxu0 0.0
    %3914 = vmatprep.subr.mxu0 0.0
    %3915 = vmatpush1.msra.mxu0 0.0
    %3916 = vmatprep.subr.mxu0 0.0
    %3917 = vmatpush1.msra.mxu0 0.0
    %3918 = vmatprep.subr.mxu0 0.0
    %3919 = vmatpush1.msra.mxu0 0.0
    %3920 = vmatprep.subr.mxu0 0.0
    %3921 = vmatpush1.msra.mxu0 0.0
    %3922 = vmatprep.subr.mxu0 0.0
    %3923 = vmatpush1.msra.mxu0 0.0
    %3924 = vmatprep.subr.mxu0 0.0
    %3925 = vmatpush1.msra.mxu0 0.0
    %3926 = vmatprep.subr.mxu0 0.0
    %3927 = vmatpush1.msra.mxu0 0.0
    %3928 = vmatprep.subr.mxu0 0.0
    %3929 = vmatpush1.msra.mxu0 0.0
    %3930 = vmatprep.subr.mxu0 0.0
    %3931 = vmatpush1.msra.mxu0 0.0
    %3932 = vmatprep.subr.mxu0 0.0
    %3933 = vmatpush1.msra.mxu0 0.0
    %3934 = vmatprep.subr.mxu0 0.0
    %3935 = vmatpush1.msra.mxu0 0.0
    %3936 = vmatprep.subr.mxu0 %v117
    %3937 = vmatpush1.msra.mxu0 %v116
    %3938 = vmatprep.subr.mxu0 %v113
    %3939 = vmatpush1.msra.mxu0 %v112
    %3940 = vmatprep.subr.mxu0 0.0
    %3941 = vmatpush2.msra.mxu0 0.0
    %3942 = vmatprep.subr.mxu0 0.0
    %3943 = vmatpush2.msra.mxu0 0.0
    %3944 = vmatprep.subr.mxu0 0.0
    %3945 = vmatpush2.msra.mxu0 0.0
    %3946 = vmatprep.subr.mxu0 0.0
    %3947 = vmatpush2.msra.mxu0 0.0
    %3948 = vmatprep.subr.mxu0 0.0
    %3949 = vmatpush2.msra.mxu0 0.0
    %3950 = vmatprep.subr.mxu0 0.0
    %3951 = vmatpush2.msra.mxu0 0.0
    %3952 = vmatprep.subr.mxu0 0.0
    %3953 = vmatpush2.msra.mxu0 0.0
    %3954 = vmatprep.subr.mxu0 0.0
    %3955 = vmatpush2.msra.mxu0 0.0
    %3956 = vmatprep.subr.mxu0 0.0
    %3957 = vmatpush2.msra.mxu0 0.0
    %3958 = vmatprep.subr.mxu0 0.0
    %3959 = vmatpush2.msra.mxu0 0.0
    %3960 = vmatprep.subr.mxu0 0.0
    %3961 = vmatpush2.msra.mxu0 0.0
    %3962 = vmatprep.subr.mxu0 0.0
    %3963 = vmatpush2.msra.mxu0 0.0
    %3964 = vmatprep.subr.mxu0 0.0
    %3965 = vmatpush2.msra.mxu0 0.0
    %3966 = vmatprep.subr.mxu0 0.0
    %3967 = vmatpush2.msra.mxu0 0.0
    %3968 = vmatprep.subr.mxu0 0.0
    %3969 = vmatpush2.msra.mxu0 0.0
    %3970 = vmatprep.subr.mxu0 0.0
    %3971 = vmatpush2.msra.mxu0 0.0
    %3972 = vmatprep.mubr.f32.mxu0 0.0
    %3973 = vmatmul.mubr.f32.gmra.mxu0 %v3826
    %v3974 = vpop.f32.mrf.mxu0
    %v3975 = vadd.f32 %v3815, %v3974
    %v3976 = vpop.f32.mrf.mxu0
    %v3977 = vadd.f32 %v3817, %v3976
    %3978 = vmatprep.mubr.f32.mxu0 0.0
    %3979 = vmatmul.mubr.f32.gmra.mxu0 %v3829
    %v3980 = vpop.f32.mrf.mxu0
    %v3981 = vadd.f32 %v3821, %v3980
    %v3982 = vpop.f32.mrf.mxu0
    %v3983 = vadd.f32 %v3823, %v3982
    %3984 = vdwg.mxu0
    %v3985 = vadd.f32 %v3898, %v641
    %v3986 = vadd.f32 %v3900, %v645
    %v3987 = vadd.f32 %v3975, %v649
    %v3988 = vadd.f32 %v3977, %v653
    %v3989 = vadd.f32 %v3904, %v641
    %v3990 = vadd.f32 %v3906, %v645
    %v3991 = vadd.f32 %v3981, %v649
    %v3992 = vadd.f32 %v3983, %v653
    %v3993 = vmul.f32 %v3985, 0.5
    %v3994 = vmul.f32 %v3989, 0.5
    %v3995 = vtanh.pop %v3993
    %v3996 = vtanh.pop %v3994
    %v3997 = vmul.f32 %v3995, 0.5
    %v3998 = vmul.f32 %v3996, 0.5
    %v3999 = vadd.f32 %v3997, 0.5
    %v4000 = vadd.f32 %v3998, 0.5
    %v4001 = vmul.f32 %v3986, 0.5
    %v4002 = vmul.f32 %v3990, 0.5
    %v4003 = vtanh.pop %v4001
    %v4004 = vtanh.pop %v4002
    %v4005 = vmul.f32 %v4003, 0.5
    %v4006 = vmul.f32 %v4004, 0.5
    %v4007 = vadd.f32 %v4005, 0.5
    %v4008 = vadd.f32 %v4006, 0.5
    %v4009 = vtanh.pop %v3987
    %v4010 = vtanh.pop %v3991
    %v4011 = vmul.f32 %v3988, 0.5
    %v4012 = vmul.f32 %v3992, 0.5
    %v4013 = vtanh.pop %v4011
    %v4014 = vtanh.pop %v4012
    %v4015 = vmul.f32 %v4013, 0.5
    %v4016 = vmul.f32 %v4014, 0.5
    %v4017 = vadd.f32 %v4015, 0.5
    %v4018 = vadd.f32 %v4016, 0.5
    %v4019 = vmul.f32 %v4007, %v3472
    %v4020 = vmul.f32 %v4008, %v3473
    %v4021 = vmul.f32 %v3999, %v4009
    %v4022 = vmul.f32 %v4000, %v4010
    %v4023 = vadd.f32 %v4019, %v4021
    %v4024 = vadd.f32 %v4020, %v4022
    %v4025 = vtanh.pop %v4023
    %v4026 = vtanh.pop %v4024
    %v4027 = vmul.f32 %v4017, %v4025
    %v4028 = vmul.f32 %v4018, %v4026
    %4029 = vmatprep.subr.mxu0 %v243
    %4030 = vmatpush1.msra.mxu0 %v242
    %4031 = vmatprep.subr.mxu0 %v239
    %4032 = vmatpush1.msra.mxu0 %v238
    %4033 = vmatprep.subr.mxu0 %v235
    %4034 = vmatpush1.msra.mxu0 %v234
    %4035 = vmatprep.subr.mxu0 %v231
    %4036 = vmatpush1.msra.mxu0 %v230
    %4037 = vmatprep.subr.mxu0 %v227
    %4038 = vmatpush1.msra.mxu0 %v226
    %4039 = vmatprep.subr.mxu0 %v223
    %4040 = vmatpush1.msra.mxu0 %v222
    %4041 = vmatprep.subr.mxu0 %v219
    %4042 = vmatpush1.msra.mxu0 %v218
    %4043 = vmatprep.subr.mxu0 %v215
    %4044 = vmatpush1.msra.mxu0 %v214
    %4045 = vmatprep.subr.mxu0 %v211
    %4046 = vmatpush1.msra.mxu0 %v210
    %4047 = vmatprep.subr.mxu0 %v207
    %4048 = vmatpush1.msra.mxu0 %v206
    %4049 = vmatprep.subr.mxu0 %v203
    %4050 = vmatpush1.msra.mxu0 %v202
    %4051 = vmatprep.subr.mxu0 %v199
    %4052 = vmatpush1.msra.mxu0 %v198
    %4053 = vmatprep.subr.mxu0 %v195
    %4054 = vmatpush1.msra.mxu0 %v194
    %4055 = vmatprep.subr.mxu0 %v191
    %4056 = vmatpush1.msra.mxu0 %v190
    %4057 = vmatprep.subr.mxu0 %v187
    %4058 = vmatpush1.msra.mxu0 %v186
    %4059 = vmatprep.subr.mxu0 %v183
    %4060 = vmatpush1.msra.mxu0 %v182
    %4061 = vmatprep.subr.mxu0 %v307
    %4062 = vmatpush2.msra.mxu0 %v306
    %4063 = vmatprep.subr.mxu0 %v303
    %4064 = vmatpush2.msra.mxu0 %v302
    %4065 = vmatprep.subr.mxu0 %v299
    %4066 = vmatpush2.msra.mxu0 %v298
    %4067 = vmatprep.subr.mxu0 %v295
    %4068 = vmatpush2.msra.mxu0 %v294
    %4069 = vmatprep.subr.mxu0 %v291
    %4070 = vmatpush2.msra.mxu0 %v290
    %4071 = vmatprep.subr.mxu0 %v287
    %4072 = vmatpush2.msra.mxu0 %v286
    %4073 = vmatprep.subr.mxu0 %v283
    %4074 = vmatpush2.msra.mxu0 %v282
    %4075 = vmatprep.subr.mxu0 %v279
    %4076 = vmatpush2.msra.mxu0 %v278
    %4077 = vmatprep.subr.mxu0 %v275
    %4078 = vmatpush2.msra.mxu0 %v274
    %4079 = vmatprep.subr.mxu0 %v271
    %4080 = vmatpush2.msra.mxu0 %v270
    %4081 = vmatprep.subr.mxu0 %v267
    %4082 = vmatpush2.msra.mxu0 %v266
    %4083 = vmatprep.subr.mxu0 %v263
    %4084 = vmatpush2.msra.mxu0 %v262
    %4085 = vmatprep.subr.mxu0 %v259
    %4086 = vmatpush2.msra.mxu0 %v258
    %4087 = vmatprep.subr.mxu0 %v255
    %4088 = vmatpush2.msra.mxu0 %v254
    %4089 = vmatprep.subr.mxu0 %v251
    %4090 = vmatpush2.msra.mxu0 %v250
    %4091 = vmatprep.subr.mxu0 %v247
    %4092 = vmatpush2.msra.mxu0 %v246
    %4093 = vmatprep.mubr.f32.mxu0 %v3666
    %4094 = vmatmul.mubr.f32.gmra.mxu0 %v4027
    %v4095 = vpop.f32.mrf.mxu0
    %v4096 = vadd.f32 %v706, %v4095
    %v4097 = vpop.f32.mrf.mxu0
    %v4098 = vadd.f32 %v710, %v4097
    %4099 = vmatprep.mubr.f32.mxu0 %v3667
    %4100 = vmatmul.mubr.f32.gmra.mxu0 %v4028
    %v4101 = vpop.f32.mrf.mxu0
    %v4102 = vadd.f32 %v706, %v4101
    %v4103 = vpop.f32.mrf.mxu0
    %v4104 = vadd.f32 %v710, %v4103
    %4105 = vdwg.mxu0
    %4106 = vmatprep.subr.mxu0 %v245
    %4107 = vmatpush1.msra.mxu0 %v244
    %4108 = vmatprep.subr.mxu0 %v241
    %4109 = vmatpush1.msra.mxu0 %v240
    %4110 = vmatprep.subr.mxu0 %v237
    %4111 = vmatpush1.msra.mxu0 %v236
    %4112 = vmatprep.subr.mxu0 %v233
    %4113 = vmatpush1.msra.mxu0 %v232
    %4114 = vmatprep.subr.mxu0 %v229
    %4115 = vmatpush1.msra.mxu0 %v228
    %4116 = vmatprep.subr.mxu0 %v225
    %4117 = vmatpush1.msra.mxu0 %v224
    %4118 = vmatprep.subr.mxu0 %v221
    %4119 = vmatpush1.msra.mxu0 %v220
    %4120 = vmatprep.subr.mxu0 %v217
    %4121 = vmatpush1.msra.mxu0 %v216
    %4122 = vmatprep.subr.mxu0 %v213
    %4123 = vmatpush1.msra.mxu0 %v212
    %4124 = vmatprep.subr.mxu0 %v209
    %4125 = vmatpush1.msra.mxu0 %v208
    %4126 = vmatprep.subr.mxu0 %v205
    %4127 = vmatpush1.msra.mxu0 %v204
    %4128 = vmatprep.subr.mxu0 %v201
    %4129 = vmatpush1.msra.mxu0 %v200
    %4130 = vmatprep.subr.mxu0 %v197
    %4131 = vmatpush1.msra.mxu0 %v196
    %4132 = vmatprep.subr.mxu0 %v193
    %4133 = vmatpush1.msra.mxu0 %v192
    %4134 = vmatprep.subr.mxu0 %v189
    %4135 = vmatpush1.msra.mxu0 %v188
    %4136 = vmatprep.subr.mxu0 %v185
    %4137 = vmatpush1.msra.mxu0 %v184
    %4138 = vmatprep.subr.mxu0 %v309
    %4139 = vmatpush2.msra.mxu0 %v308
    %4140 = vmatprep.subr.mxu0 %v305
    %4141 = vmatpush2.msra.mxu0 %v304
    %4142 = vmatprep.subr.mxu0 %v301
    %4143 = vmatpush2.msra.mxu0 %v300
    %4144 = vmatprep.subr.mxu0 %v297
    %4145 = vmatpush2.msra.mxu0 %v296
    %4146 = vmatprep.subr.mxu0 %v293
    %4147 = vmatpush2.msra.mxu0 %v292
    %4148 = vmatprep.subr.mxu0 %v289
    %4149 = vmatpush2.msra.mxu0 %v288
    %4150 = vmatprep.subr.mxu0 %v285
    %4151 = vmatpush2.msra.mxu0 %v284
    %4152 = vmatprep.subr.mxu0 %v281
    %4153 = vmatpush2.msra.mxu0 %v280
    %4154 = vmatprep.subr.mxu0 %v277
    %4155 = vmatpush2.msra.mxu0 %v276
    %4156 = vmatprep.subr.mxu0 %v273
    %4157 = vmatpush2.msra.mxu0 %v272
    %4158 = vmatprep.subr.mxu0 %v269
    %4159 = vmatpush2.msra.mxu0 %v268
    %4160 = vmatprep.subr.mxu0 %v265
    %4161 = vmatpush2.msra.mxu0 %v264
    %4162 = vmatprep.subr.mxu0 %v261
    %4163 = vmatpush2.msra.mxu0 %v260
    %4164 = vmatprep.subr.mxu0 %v257
    %4165 = vmatpush2.msra.mxu0 %v256
    %4166 = vmatprep.subr.mxu0 %v253
    %4167 = vmatpush2.msra.mxu0 %v252
    %4168 = vmatprep.subr.mxu0 %v249
    %4169 = vmatpush2.msra.mxu0 %v248
    %4170 = vmatprep.mubr.f32.mxu0 %v3666
    %4171 = vmatmul.mubr.f32.gmra.mxu0 %v4027
    %v4172 = vpop.f32.mrf.mxu0
    %v4173 = vadd.f32 %v714, %v4172
    %v4174 = vpop.f32.mrf.mxu0
    %v4175 = vadd.f32 %v718, %v4174
    %4176 = vmatprep.mubr.f32.mxu0 %v3667
    %4177 = vmatmul.mubr.f32.gmra.mxu0 %v4028
    %v4178 = vpop.f32.mrf.mxu0
    %v4179 = vadd.f32 %v714, %v4178
    %v4180 = vpop.f32.mrf.mxu0
    %v4181 = vadd.f32 %v718, %v4180
    %4182 = vdwg.mxu0
    %v4183 = vmul.f32 %v4096, 0.5
    %v4184 = vmul.f32 %v4102, 0.5
    %v4185 = vtanh.pop %v4183
    %v4186 = vtanh.pop %v4184
    %v4187 = vmul.f32 %v4185, 0.5
    %v4188 = vmul.f32 %v4186, 0.5
    %v4189 = vadd.f32 %v4187, 0.5
    %v4190 = vadd.f32 %v4188, 0.5
    %v4191 = vmul.f32 %v4098, 0.5
    %v4192 = vmul.f32 %v4104, 0.5
    %v4193 = vtanh.pop %v4191
    %v4194 = vtanh.pop %v4192
    %v4195 = vmul.f32 %v4193, 0.5
    %v4196 = vmul.f32 %v4194, 0.5
    %v4197 = vadd.f32 %v4195, 0.5
    %v4198 = vadd.f32 %v4196, 0.5
    %v4199 = vtanh.pop %v4173
    %v4200 = vtanh.pop %v4179
    %v4201 = vmul.f32 %v4175, 0.5
    %v4202 = vmul.f32 %v4181, 0.5
    %v4203 = vtanh.pop %v4201
    %v4204 = vtanh.pop %v4202
    %v4205 = vmul.f32 %v4203, 0.5
    %v4206 = vmul.f32 %v4204, 0.5
    %v4207 = vadd.f32 %v4205, 0.5
    %v4208 = vadd.f32 %v4206, 0.5
    %v4209 = vmul.f32 %v4197, %v3662
    %v4210 = vmul.f32 %v4198, %v3663
    %v4211 = vmul.f32 %v4189, %v4199
    %v4212 = vmul.f32 %v4190, %v4200
    %v4213 = vadd.f32 %v4209, %v4211
    %v4214 = vadd.f32 %v4210, %v4212
    %v4215 = vtanh.pop %v4213
    %v4216 = vtanh.pop %v4214
    %v4217 = vmul.f32 %v4207, %v4215
    %v4218 = vmul.f32 %v4208, %v4216
    %s4219 = scalar_lea.vmem [#allocation6], 112
    %v4220 = vld [vmem:[%s4219] sm:$0xff]
    %v4221 = vld [vmem:[%s4219 + $0x8] sm:$0xff]
    %4222 = vmatprep.subr.mxu0 %v179
    %4223 = vmatpush1.msra.mxu0 %v178
    %4224 = vmatprep.subr.mxu0 %v175
    %4225 = vmatpush1.msra.mxu0 %v174
    %4226 = vmatprep.subr.mxu0 %v171
    %4227 = vmatpush1.msra.mxu0 %v170
    %4228 = vmatprep.subr.mxu0 %v167
    %4229 = vmatpush1.msra.mxu0 %v166
    %4230 = vmatprep.subr.mxu0 %v163
    %4231 = vmatpush1.msra.mxu0 %v162
    %4232 = vmatprep.subr.mxu0 %v159
    %4233 = vmatpush1.msra.mxu0 %v158
    %4234 = vmatprep.subr.mxu0 %v155
    %4235 = vmatpush1.msra.mxu0 %v154
    %4236 = vmatprep.subr.mxu0 %v151
    %4237 = vmatpush1.msra.mxu0 %v150
    %4238 = vmatprep.subr.mxu0 %v147
    %4239 = vmatpush1.msra.mxu0 %v146
    %4240 = vmatprep.subr.mxu0 %v143
    %4241 = vmatpush1.msra.mxu0 %v142
    %4242 = vmatprep.subr.mxu0 %v139
    %4243 = vmatpush1.msra.mxu0 %v138
    %4244 = vmatprep.subr.mxu0 %v135
    %4245 = vmatpush1.msra.mxu0 %v134
    %4246 = vmatprep.subr.mxu0 %v131
    %4247 = vmatpush1.msra.mxu0 %v130
    %4248 = vmatprep.subr.mxu0 %v127
    %4249 = vmatpush1.msra.mxu0 %v126
    %4250 = vmatprep.subr.mxu0 %v123
    %4251 = vmatpush1.msra.mxu0 %v122
    %4252 = vmatprep.subr.mxu0 %v119
    %4253 = vmatpush1.msra.mxu0 %v118
    %4254 = vmatprep.subr.mxu0 0.0
    %4255 = vmatpush2.msra.mxu0 0.0
    %4256 = vmatprep.subr.mxu0 0.0
    %4257 = vmatpush2.msra.mxu0 0.0
    %4258 = vmatprep.subr.mxu0 0.0
    %4259 = vmatpush2.msra.mxu0 0.0
    %4260 = vmatprep.subr.mxu0 0.0
    %4261 = vmatpush2.msra.mxu0 0.0
    %4262 = vmatprep.subr.mxu0 0.0
    %4263 = vmatpush2.msra.mxu0 0.0
    %4264 = vmatprep.subr.mxu0 0.0
    %4265 = vmatpush2.msra.mxu0 0.0
    %4266 = vmatprep.subr.mxu0 0.0
    %4267 = vmatpush2.msra.mxu0 0.0
    %4268 = vmatprep.subr.mxu0 0.0
    %4269 = vmatpush2.msra.mxu0 0.0
    %4270 = vmatprep.subr.mxu0 0.0
    %4271 = vmatpush2.msra.mxu0 0.0
    %4272 = vmatprep.subr.mxu0 0.0
    %4273 = vmatpush2.msra.mxu0 0.0
    %4274 = vmatprep.subr.mxu0 0.0
    %4275 = vmatpush2.msra.mxu0 0.0
    %4276 = vmatprep.subr.mxu0 0.0
    %4277 = vmatpush2.msra.mxu0 0.0
    %4278 = vmatprep.subr.mxu0 0.0
    %4279 = vmatpush2.msra.mxu0 0.0
    %4280 = vmatprep.subr.mxu0 0.0
    %4281 = vmatpush2.msra.mxu0 0.0
    %4282 = vmatprep.subr.mxu0 0.0
    %4283 = vmatpush2.msra.mxu0 0.0
    %4284 = vmatprep.subr.mxu0 0.0
    %4285 = vmatpush2.msra.mxu0 0.0
    %4286 = vmatprep.mubr.f32.mxu0 0.0
    %4287 = vmatmul.mubr.f32.gmra.mxu0 %v4027
    %v4288 = vpop.f32.mrf.mxu0
    %v4289 = vadd.f32 0.0, %v4288
    %v4290 = vpop.f32.mrf.mxu0
    %v4291 = vadd.f32 0.0, %v4290
    %4292 = vmatprep.mubr.f32.mxu0 0.0
    %4293 = vmatmul.mubr.f32.gmra.mxu0 %v4028
    %v4294 = vpop.f32.mrf.mxu0
    %v4295 = vadd.f32 0.0, %v4294
    %v4296 = vpop.f32.mrf.mxu0
    %v4297 = vadd.f32 0.0, %v4296
    %4298 = vdwg.mxu0
    %4299 = vmatprep.subr.mxu0 %v181
    %4300 = vmatpush1.msra.mxu0 %v180
    %4301 = vmatprep.subr.mxu0 %v177
    %4302 = vmatpush1.msra.mxu0 %v176
    %4303 = vmatprep.subr.mxu0 %v173
    %4304 = vmatpush1.msra.mxu0 %v172
    %4305 = vmatprep.subr.mxu0 %v169
    %4306 = vmatpush1.msra.mxu0 %v168
    %4307 = vmatprep.subr.mxu0 %v165
    %4308 = vmatpush1.msra.mxu0 %v164
    %4309 = vmatprep.subr.mxu0 %v161
    %4310 = vmatpush1.msra.mxu0 %v160
    %4311 = vmatprep.subr.mxu0 %v157
    %4312 = vmatpush1.msra.mxu0 %v156
    %4313 = vmatprep.subr.mxu0 %v153
    %4314 = vmatpush1.msra.mxu0 %v152
    %4315 = vmatprep.subr.mxu0 %v149
    %4316 = vmatpush1.msra.mxu0 %v148
    %4317 = vmatprep.subr.mxu0 %v145
    %4318 = vmatpush1.msra.mxu0 %v144
    %4319 = vmatprep.subr.mxu0 %v141
    %4320 = vmatpush1.msra.mxu0 %v140
    %4321 = vmatprep.subr.mxu0 %v137
    %4322 = vmatpush1.msra.mxu0 %v136
    %4323 = vmatprep.subr.mxu0 %v133
    %4324 = vmatpush1.msra.mxu0 %v132
    %4325 = vmatprep.subr.mxu0 %v129
    %4326 = vmatpush1.msra.mxu0 %v128
    %4327 = vmatprep.subr.mxu0 %v125
    %4328 = vmatpush1.msra.mxu0 %v124
    %4329 = vmatprep.subr.mxu0 %v121
    %4330 = vmatpush1.msra.mxu0 %v120
    %4331 = vmatprep.subr.mxu0 0.0
    %4332 = vmatpush2.msra.mxu0 0.0
    %4333 = vmatprep.subr.mxu0 0.0
    %4334 = vmatpush2.msra.mxu0 0.0
    %4335 = vmatprep.subr.mxu0 0.0
    %4336 = vmatpush2.msra.mxu0 0.0
    %4337 = vmatprep.subr.mxu0 0.0
    %4338 = vmatpush2.msra.mxu0 0.0
    %4339 = vmatprep.subr.mxu0 0.0
    %4340 = vmatpush2.msra.mxu0 0.0
    %4341 = vmatprep.subr.mxu0 0.0
    %4342 = vmatpush2.msra.mxu0 0.0
    %4343 = vmatprep.subr.mxu0 0.0
    %4344 = vmatpush2.msra.mxu0 0.0
    %4345 = vmatprep.subr.mxu0 0.0
    %4346 = vmatpush2.msra.mxu0 0.0
    %4347 = vmatprep.subr.mxu0 0.0
    %4348 = vmatpush2.msra.mxu0 0.0
    %4349 = vmatprep.subr.mxu0 0.0
    %4350 = vmatpush2.msra.mxu0 0.0
    %4351 = vmatprep.subr.mxu0 0.0
    %4352 = vmatpush2.msra.mxu0 0.0
    %4353 = vmatprep.subr.mxu0 0.0
    %4354 = vmatpush2.msra.mxu0 0.0
    %4355 = vmatprep.subr.mxu0 0.0
    %4356 = vmatpush2.msra.mxu0 0.0
    %4357 = vmatprep.subr.mxu0 0.0
    %4358 = vmatpush2.msra.mxu0 0.0
    %4359 = vmatprep.subr.mxu0 0.0
    %4360 = vmatpush2.msra.mxu0 0.0
    %4361 = vmatprep.subr.mxu0 0.0
    %4362 = vmatpush2.msra.mxu0 0.0
    %4363 = vmatprep.mubr.f32.mxu0 0.0
    %4364 = vmatmul.mubr.f32.gmra.mxu0 %v4027
    %v4365 = vpop.f32.mrf.mxu0
    %v4366 = vadd.f32 0.0, %v4365
    %v4367 = vpop.f32.mrf.mxu0
    %v4368 = vadd.f32 0.0, %v4367
    %4369 = vmatprep.mubr.f32.mxu0 0.0
    %4370 = vmatmul.mubr.f32.gmra.mxu0 %v4028
    %v4371 = vpop.f32.mrf.mxu0
    %v4372 = vadd.f32 0.0, %v4371
    %v4373 = vpop.f32.mrf.mxu0
    %v4374 = vadd.f32 0.0, %v4373
    %4375 = vdwg.mxu0
    %v4377 = vsel %vm476, %v4220, 0
    %v4380 = vsel %vm476, %v4221, 0
    %4382 = vmatprep.subr.mxu0 0.0
    %4383 = vmatpush1.msra.mxu0 0.0
    %4384 = vmatprep.subr.mxu0 0.0
    %4385 = vmatpush1.msra.mxu0 0.0
    %4386 = vmatprep.subr.mxu0 0.0
    %4387 = vmatpush1.msra.mxu0 0.0
    %4388 = vmatprep.subr.mxu0 0.0
    %4389 = vmatpush1.msra.mxu0 0.0
    %4390 = vmatprep.subr.mxu0 0.0
    %4391 = vmatpush1.msra.mxu0 0.0
    %4392 = vmatprep.subr.mxu0 0.0
    %4393 = vmatpush1.msra.mxu0 0.0
    %4394 = vmatprep.subr.mxu0 0.0
    %4395 = vmatpush1.msra.mxu0 0.0
    %4396 = vmatprep.subr.mxu0 0.0
    %4397 = vmatpush1.msra.mxu0 0.0
    %4398 = vmatprep.subr.mxu0 0.0
    %4399 = vmatpush1.msra.mxu0 0.0
    %4400 = vmatprep.subr.mxu0 0.0
    %4401 = vmatpush1.msra.mxu0 0.0
    %4402 = vmatprep.subr.mxu0 0.0
    %4403 = vmatpush1.msra.mxu0 0.0
    %4404 = vmatprep.subr.mxu0 0.0
    %4405 = vmatpush1.msra.mxu0 0.0
    %4406 = vmatprep.subr.mxu0 0.0
    %4407 = vmatpush1.msra.mxu0 0.0
    %4408 = vmatprep.subr.mxu0 0.0
    %4409 = vmatpush1.msra.mxu0 0.0
    %4410 = vmatprep.subr.mxu0 %v115
    %4411 = vmatpush1.msra.mxu0 %v114
    %4412 = vmatprep.subr.mxu0 %v111
    %4413 = vmatpush1.msra.mxu0 %v110
    %4414 = vmatprep.subr.mxu0 0.0
    %4415 = vmatpush2.msra.mxu0 0.0
    %4416 = vmatprep.subr.mxu0 0.0
    %4417 = vmatpush2.msra.mxu0 0.0
    %4418 = vmatprep.subr.mxu0 0.0
    %4419 = vmatpush2.msra.mxu0 0.0
    %4420 = vmatprep.subr.mxu0 0.0
    %4421 = vmatpush2.msra.mxu0 0.0
    %4422 = vmatprep.subr.mxu0 0.0
    %4423 = vmatpush2.msra.mxu0 0.0
    %4424 = vmatprep.subr.mxu0 0.0
    %4425 = vmatpush2.msra.mxu0 0.0
    %4426 = vmatprep.subr.mxu0 0.0
    %4427 = vmatpush2.msra.mxu0 0.0
    %4428 = vmatprep.subr.mxu0 0.0
    %4429 = vmatpush2.msra.mxu0 0.0
    %4430 = vmatprep.subr.mxu0 0.0
    %4431 = vmatpush2.msra.mxu0 0.0
    %4432 = vmatprep.subr.mxu0 0.0
    %4433 = vmatpush2.msra.mxu0 0.0
    %4434 = vmatprep.subr.mxu0 0.0
    %4435 = vmatpush2.msra.mxu0 0.0
    %4436 = vmatprep.subr.mxu0 0.0
    %4437 = vmatpush2.msra.mxu0 0.0
    %4438 = vmatprep.subr.mxu0 0.0
    %4439 = vmatpush2.msra.mxu0 0.0
    %4440 = vmatprep.subr.mxu0 0.0
    %4441 = vmatpush2.msra.mxu0 0.0
    %4442 = vmatprep.subr.mxu0 0.0
    %4443 = vmatpush2.msra.mxu0 0.0
    %4444 = vmatprep.subr.mxu0 0.0
    %4445 = vmatpush2.msra.mxu0 0.0
    %4446 = vmatprep.mubr.f32.mxu0 0.0
    %4447 = vmatmul.mubr.f32.gmra.mxu0 %v4377
    %v4448 = vpop.f32.mrf.mxu0
    %v4449 = vadd.f32 %v4289, %v4448
    %v4450 = vpop.f32.mrf.mxu0
    %v4451 = vadd.f32 %v4291, %v4450
    %4452 = vmatprep.mubr.f32.mxu0 0.0
    %4453 = vmatmul.mubr.f32.gmra.mxu0 %v4380
    %v4454 = vpop.f32.mrf.mxu0
    %v4455 = vadd.f32 %v4295, %v4454
    %v4456 = vpop.f32.mrf.mxu0
    %v4457 = vadd.f32 %v4297, %v4456
    %4458 = vdwg.mxu0
    %4459 = vmatprep.subr.mxu0 0.0
    %4460 = vmatpush1.msra.mxu0 0.0
    %4461 = vmatprep.subr.mxu0 0.0
    %4462 = vmatpush1.msra.mxu0 0.0
    %4463 = vmatprep.subr.mxu0 0.0
    %4464 = vmatpush1.msra.mxu0 0.0
    %4465 = vmatprep.subr.mxu0 0.0
    %4466 = vmatpush1.msra.mxu0 0.0
    %4467 = vmatprep.subr.mxu0 0.0
    %4468 = vmatpush1.msra.mxu0 0.0
    %4469 = vmatprep.subr.mxu0 0.0
    %4470 = vmatpush1.msra.mxu0 0.0
    %4471 = vmatprep.subr.mxu0 0.0
    %4472 = vmatpush1.msra.mxu0 0.0
    %4473 = vmatprep.subr.mxu0 0.0
    %4474 = vmatpush1.msra.mxu0 0.0
    %4475 = vmatprep.subr.mxu0 0.0
    %4476 = vmatpush1.msra.mxu0 0.0
    %4477 = vmatprep.subr.mxu0 0.0
    %4478 = vmatpush1.msra.mxu0 0.0
    %4479 = vmatprep.subr.mxu0 0.0
    %4480 = vmatpush1.msra.mxu0 0.0
    %4481 = vmatprep.subr.mxu0 0.0
    %4482 = vmatpush1.msra.mxu0 0.0
    %4483 = vmatprep.subr.mxu0 0.0
    %4484 = vmatpush1.msra.mxu0 0.0
    %4485 = vmatprep.subr.mxu0 0.0
    %4486 = vmatpush1.msra.mxu0 0.0
    %4487 = vmatprep.subr.mxu0 %v117
    %4488 = vmatpush1.msra.mxu0 %v116
    %4489 = vmatprep.subr.mxu0 %v113
    %4490 = vmatpush1.msra.mxu0 %v112
    %4491 = vmatprep.subr.mxu0 0.0
    %4492 = vmatpush2.msra.mxu0 0.0
    %4493 = vmatprep.subr.mxu0 0.0
    %4494 = vmatpush2.msra.mxu0 0.0
    %4495 = vmatprep.subr.mxu0 0.0
    %4496 = vmatpush2.msra.mxu0 0.0
    %4497 = vmatprep.subr.mxu0 0.0
    %4498 = vmatpush2.msra.mxu0 0.0
    %4499 = vmatprep.subr.mxu0 0.0
    %4500 = vmatpush2.msra.mxu0 0.0
    %4501 = vmatprep.subr.mxu0 0.0
    %4502 = vmatpush2.msra.mxu0 0.0
    %4503 = vmatprep.subr.mxu0 0.0
    %4504 = vmatpush2.msra.mxu0 0.0
    %4505 = vmatprep.subr.mxu0 0.0
    %4506 = vmatpush2.msra.mxu0 0.0
    %4507 = vmatprep.subr.mxu0 0.0
    %4508 = vmatpush2.msra.mxu0 0.0
    %4509 = vmatprep.subr.mxu0 0.0
    %4510 = vmatpush2.msra.mxu0 0.0
    %4511 = vmatprep.subr.mxu0 0.0
    %4512 = vmatpush2.msra.mxu0 0.0
    %4513 = vmatprep.subr.mxu0 0.0
    %4514 = vmatpush2.msra.mxu0 0.0
    %4515 = vmatprep.subr.mxu0 0.0
    %4516 = vmatpush2.msra.mxu0 0.0
    %4517 = vmatprep.subr.mxu0 0.0
    %4518 = vmatpush2.msra.mxu0 0.0
    %4519 = vmatprep.subr.mxu0 0.0
    %4520 = vmatpush2.msra.mxu0 0.0
    %4521 = vmatprep.subr.mxu0 0.0
    %4522 = vmatpush2.msra.mxu0 0.0
    %4523 = vmatprep.mubr.f32.mxu0 0.0
    %4524 = vmatmul.mubr.f32.gmra.mxu0 %v4377
    %v4525 = vpop.f32.mrf.mxu0
    %v4526 = vadd.f32 %v4366, %v4525
    %v4527 = vpop.f32.mrf.mxu0
    %v4528 = vadd.f32 %v4368, %v4527
    %4529 = vmatprep.mubr.f32.mxu0 0.0
    %4530 = vmatmul.mubr.f32.gmra.mxu0 %v4380
    %v4531 = vpop.f32.mrf.mxu0
    %v4532 = vadd.f32 %v4372, %v4531
    %v4533 = vpop.f32.mrf.mxu0
    %v4534 = vadd.f32 %v4374, %v4533
    %4535 = vdwg.mxu0
    %v4536 = vadd.f32 %v4449, %v641
    %v4537 = vadd.f32 %v4451, %v645
    %v4538 = vadd.f32 %v4526, %v649
    %v4539 = vadd.f32 %v4528, %v653
    %v4540 = vadd.f32 %v4455, %v641
    %v4541 = vadd.f32 %v4457, %v645
    %v4542 = vadd.f32 %v4532, %v649
    %v4543 = vadd.f32 %v4534, %v653
    %v4544 = vmul.f32 %v4536, 0.5
    %v4545 = vmul.f32 %v4540, 0.5
    %v4546 = vtanh.pop %v4544
    %v4547 = vtanh.pop %v4545
    %v4548 = vmul.f32 %v4546, 0.5
    %v4549 = vmul.f32 %v4547, 0.5
    %v4550 = vadd.f32 %v4548, 0.5
    %v4551 = vadd.f32 %v4549, 0.5
    %v4552 = vmul.f32 %v4537, 0.5
    %v4553 = vmul.f32 %v4541, 0.5
    %v4554 = vtanh.pop %v4552
    %v4555 = vtanh.pop %v4553
    %v4556 = vmul.f32 %v4554, 0.5
    %v4557 = vmul.f32 %v4555, 0.5
    %v4558 = vadd.f32 %v4556, 0.5
    %v4559 = vadd.f32 %v4557, 0.5
    %v4560 = vtanh.pop %v4538
    %v4561 = vtanh.pop %v4542
    %v4562 = vmul.f32 %v4539, 0.5
    %v4563 = vmul.f32 %v4543, 0.5
    %v4564 = vtanh.pop %v4562
    %v4565 = vtanh.pop %v4563
    %v4566 = vmul.f32 %v4564, 0.5
    %v4567 = vmul.f32 %v4565, 0.5
    %v4568 = vadd.f32 %v4566, 0.5
    %v4569 = vadd.f32 %v4567, 0.5
    %v4570 = vmul.f32 %v4558, %v4023
    %v4571 = vmul.f32 %v4559, %v4024
    %v4572 = vmul.f32 %v4550, %v4560
    %v4573 = vmul.f32 %v4551, %v4561
    %v4574 = vadd.f32 %v4570, %v4572
    %v4575 = vadd.f32 %v4571, %v4573
    %v4576 = vtanh.pop %v4574
    %v4577 = vtanh.pop %v4575
    %v4578 = vmul.f32 %v4568, %v4576
    %v4579 = vmul.f32 %v4569, %v4577
    %4580 = vmatprep.subr.mxu0 %v243
    %4581 = vmatpush1.msra.mxu0 %v242
    %4582 = vmatprep.subr.mxu0 %v239
    %4583 = vmatpush1.msra.mxu0 %v238
    %4584 = vmatprep.subr.mxu0 %v235
    %4585 = vmatpush1.msra.mxu0 %v234
    %4586 = vmatprep.subr.mxu0 %v231
    %4587 = vmatpush1.msra.mxu0 %v230
    %4588 = vmatprep.subr.mxu0 %v227
    %4589 = vmatpush1.msra.mxu0 %v226
    %4590 = vmatprep.subr.mxu0 %v223
    %4591 = vmatpush1.msra.mxu0 %v222
    %4592 = vmatprep.subr.mxu0 %v219
    %4593 = vmatpush1.msra.mxu0 %v218
    %4594 = vmatprep.subr.mxu0 %v215
    %4595 = vmatpush1.msra.mxu0 %v214
    %4596 = vmatprep.subr.mxu0 %v211
    %4597 = vmatpush1.msra.mxu0 %v210
    %4598 = vmatprep.subr.mxu0 %v207
    %4599 = vmatpush1.msra.mxu0 %v206
    %4600 = vmatprep.subr.mxu0 %v203
    %4601 = vmatpush1.msra.mxu0 %v202
    %4602 = vmatprep.subr.mxu0 %v199
    %4603 = vmatpush1.msra.mxu0 %v198
    %4604 = vmatprep.subr.mxu0 %v195
    %4605 = vmatpush1.msra.mxu0 %v194
    %4606 = vmatprep.subr.mxu0 %v191
    %4607 = vmatpush1.msra.mxu0 %v190
    %4608 = vmatprep.subr.mxu0 %v187
    %4609 = vmatpush1.msra.mxu0 %v186
    %4610 = vmatprep.subr.mxu0 %v183
    %4611 = vmatpush1.msra.mxu0 %v182
    %4612 = vmatprep.subr.mxu0 %v307
    %4613 = vmatpush2.msra.mxu0 %v306
    %4614 = vmatprep.subr.mxu0 %v303
    %4615 = vmatpush2.msra.mxu0 %v302
    %4616 = vmatprep.subr.mxu0 %v299
    %4617 = vmatpush2.msra.mxu0 %v298
    %4618 = vmatprep.subr.mxu0 %v295
    %4619 = vmatpush2.msra.mxu0 %v294
    %4620 = vmatprep.subr.mxu0 %v291
    %4621 = vmatpush2.msra.mxu0 %v290
    %4622 = vmatprep.subr.mxu0 %v287
    %4623 = vmatpush2.msra.mxu0 %v286
    %4624 = vmatprep.subr.mxu0 %v283
    %4625 = vmatpush2.msra.mxu0 %v282
    %4626 = vmatprep.subr.mxu0 %v279
    %4627 = vmatpush2.msra.mxu0 %v278
    %4628 = vmatprep.subr.mxu0 %v275
    %4629 = vmatpush2.msra.mxu0 %v274
    %4630 = vmatprep.subr.mxu0 %v271
    %4631 = vmatpush2.msra.mxu0 %v270
    %4632 = vmatprep.subr.mxu0 %v267
    %4633 = vmatpush2.msra.mxu0 %v266
    %4634 = vmatprep.subr.mxu0 %v263
    %4635 = vmatpush2.msra.mxu0 %v262
    %4636 = vmatprep.subr.mxu0 %v259
    %4637 = vmatpush2.msra.mxu0 %v258
    %4638 = vmatprep.subr.mxu0 %v255
    %4639 = vmatpush2.msra.mxu0 %v254
    %4640 = vmatprep.subr.mxu0 %v251
    %4641 = vmatpush2.msra.mxu0 %v250
    %4642 = vmatprep.subr.mxu0 %v247
    %4643 = vmatpush2.msra.mxu0 %v246
    %4644 = vmatprep.mubr.f32.mxu0 %v4217
    %4645 = vmatmul.mubr.f32.gmra.mxu0 %v4578
    %v4646 = vpop.f32.mrf.mxu0
    %v4647 = vadd.f32 %v706, %v4646
    %v4648 = vpop.f32.mrf.mxu0
    %v4649 = vadd.f32 %v710, %v4648
    %4650 = vmatprep.mubr.f32.mxu0 %v4218
    %4651 = vmatmul.mubr.f32.gmra.mxu0 %v4579
    %v4652 = vpop.f32.mrf.mxu0
    %v4653 = vadd.f32 %v706, %v4652
    %v4654 = vpop.f32.mrf.mxu0
    %v4655 = vadd.f32 %v710, %v4654
    %4656 = vdwg.mxu0
    %4657 = vmatprep.subr.mxu0 %v245
    %4658 = vmatpush1.msra.mxu0 %v244
    %4659 = vmatprep.subr.mxu0 %v241
    %4660 = vmatpush1.msra.mxu0 %v240
    %4661 = vmatprep.subr.mxu0 %v237
    %4662 = vmatpush1.msra.mxu0 %v236
    %4663 = vmatprep.subr.mxu0 %v233
    %4664 = vmatpush1.msra.mxu0 %v232
    %4665 = vmatprep.subr.mxu0 %v229
    %4666 = vmatpush1.msra.mxu0 %v228
    %4667 = vmatprep.subr.mxu0 %v225
    %4668 = vmatpush1.msra.mxu0 %v224
    %4669 = vmatprep.subr.mxu0 %v221
    %4670 = vmatpush1.msra.mxu0 %v220
    %4671 = vmatprep.subr.mxu0 %v217
    %4672 = vmatpush1.msra.mxu0 %v216
    %4673 = vmatprep.subr.mxu0 %v213
    %4674 = vmatpush1.msra.mxu0 %v212
    %4675 = vmatprep.subr.mxu0 %v209
    %4676 = vmatpush1.msra.mxu0 %v208
    %4677 = vmatprep.subr.mxu0 %v205
    %4678 = vmatpush1.msra.mxu0 %v204
    %4679 = vmatprep.subr.mxu0 %v201
    %4680 = vmatpush1.msra.mxu0 %v200
    %4681 = vmatprep.subr.mxu0 %v197
    %4682 = vmatpush1.msra.mxu0 %v196
    %4683 = vmatprep.subr.mxu0 %v193
    %4684 = vmatpush1.msra.mxu0 %v192
    %4685 = vmatprep.subr.mxu0 %v189
    %4686 = vmatpush1.msra.mxu0 %v188
    %4687 = vmatprep.subr.mxu0 %v185
    %4688 = vmatpush1.msra.mxu0 %v184
    %4689 = vmatprep.subr.mxu0 %v309
    %4690 = vmatpush2.msra.mxu0 %v308
    %4691 = vmatprep.subr.mxu0 %v305
    %4692 = vmatpush2.msra.mxu0 %v304
    %4693 = vmatprep.subr.mxu0 %v301
    %4694 = vmatpush2.msra.mxu0 %v300
    %4695 = vmatprep.subr.mxu0 %v297
    %4696 = vmatpush2.msra.mxu0 %v296
    %4697 = vmatprep.subr.mxu0 %v293
    %4698 = vmatpush2.msra.mxu0 %v292
    %4699 = vmatprep.subr.mxu0 %v289
    %4700 = vmatpush2.msra.mxu0 %v288
    %4701 = vmatprep.subr.mxu0 %v285
    %4702 = vmatpush2.msra.mxu0 %v284
    %4703 = vmatprep.subr.mxu0 %v281
    %4704 = vmatpush2.msra.mxu0 %v280
    %4705 = vmatprep.subr.mxu0 %v277
    %4706 = vmatpush2.msra.mxu0 %v276
    %4707 = vmatprep.subr.mxu0 %v273
    %4708 = vmatpush2.msra.mxu0 %v272
    %4709 = vmatprep.subr.mxu0 %v269
    %4710 = vmatpush2.msra.mxu0 %v268
    %4711 = vmatprep.subr.mxu0 %v265
    %4712 = vmatpush2.msra.mxu0 %v264
    %4713 = vmatprep.subr.mxu0 %v261
    %4714 = vmatpush2.msra.mxu0 %v260
    %4715 = vmatprep.subr.mxu0 %v257
    %4716 = vmatpush2.msra.mxu0 %v256
    %4717 = vmatprep.subr.mxu0 %v253
    %4718 = vmatpush2.msra.mxu0 %v252
    %4719 = vmatprep.subr.mxu0 %v249
    %4720 = vmatpush2.msra.mxu0 %v248
    %4721 = vmatprep.mubr.f32.mxu0 %v4217
    %4722 = vmatmul.mubr.f32.gmra.mxu0 %v4578
    %v4723 = vpop.f32.mrf.mxu0
    %v4724 = vadd.f32 %v714, %v4723
    %v4725 = vpop.f32.mrf.mxu0
    %v4726 = vadd.f32 %v718, %v4725
    %4727 = vmatprep.mubr.f32.mxu0 %v4218
    %4728 = vmatmul.mubr.f32.gmra.mxu0 %v4579
    %v4729 = vpop.f32.mrf.mxu0
    %v4730 = vadd.f32 %v714, %v4729
    %v4731 = vpop.f32.mrf.mxu0
    %v4732 = vadd.f32 %v718, %v4731
    %4733 = vdwg.mxu0
    %v4734 = vmul.f32 %v4647, 0.5
    %v4735 = vmul.f32 %v4653, 0.5
    %v4736 = vtanh.pop %v4734
    %v4737 = vtanh.pop %v4735
    %v4738 = vmul.f32 %v4736, 0.5
    %v4739 = vmul.f32 %v4737, 0.5
    %v4740 = vadd.f32 %v4738, 0.5
    %v4741 = vadd.f32 %v4739, 0.5
    %v4742 = vmul.f32 %v4649, 0.5
    %v4743 = vmul.f32 %v4655, 0.5
    %v4744 = vtanh.pop %v4742
    %v4745 = vtanh.pop %v4743
    %v4746 = vmul.f32 %v4744, 0.5
    %v4747 = vmul.f32 %v4745, 0.5
    %v4748 = vadd.f32 %v4746, 0.5
    %v4749 = vadd.f32 %v4747, 0.5
    %v4750 = vtanh.pop %v4724
    %v4751 = vtanh.pop %v4730
    %v4752 = vmul.f32 %v4726, 0.5
    %v4753 = vmul.f32 %v4732, 0.5
    %v4754 = vtanh.pop %v4752
    %v4755 = vtanh.pop %v4753
    %v4756 = vmul.f32 %v4754, 0.5
    %v4757 = vmul.f32 %v4755, 0.5
    %v4758 = vadd.f32 %v4756, 0.5
    %v4759 = vadd.f32 %v4757, 0.5
    %v4760 = vmul.f32 %v4748, %v4213
    %v4761 = vmul.f32 %v4749, %v4214
    %v4762 = vmul.f32 %v4740, %v4750
    %v4763 = vmul.f32 %v4741, %v4751
    %v4764 = vadd.f32 %v4760, %v4762
    %v4765 = vadd.f32 %v4761, %v4763
    %v4766 = vtanh.pop %v4764
    %v4767 = vtanh.pop %v4765
    %v4768 = vmul.f32 %v4758, %v4766
    %v4769 = vmul.f32 %v4759, %v4767
    // Predicated region
    $region58: #{tpu_custom_call.1} parent=1 // pred_check
      %p4770 = pneg %p98
    $region59: #{tpu_custom_call.1} parent=1 // pred_check_branch
      %4772 = sbr.rel (%p4770) target = $region61
    $region60: #{tpu_custom_call.1} parent=1 // pred_region
      %v4773 = vld [vmem:[#allocation14] sm:$0xff]
      %v4774 = vld [vmem:[#allocation14 + $0x8] sm:$0xff]
      %v4775 = vld [vmem:[#allocation14 + $0x10] sm:$0xff]
      %v4776 = vld [vmem:[#allocation14 + $0x18] sm:$0xff]
      %v4777 = vld [vmem:[#allocation14 + $0x20] sm:$0xff]
      %v4778 = vld [vmem:[#allocation14 + $0x28] sm:$0xff]
      %v4779 = vld [vmem:[#allocation14 + $0x30] sm:$0xff]
      %v4780 = vld [vmem:[#allocation14 + $0x38] sm:$0xff]
      %v4781 = vld [vmem:[#allocation14 + $0x40] sm:$0xff]
      %v4782 = vld [vmem:[#allocation14 + $0x48] sm:$0xff]
      %v4783 = vld [vmem:[#allocation14 + $0x50] sm:$0xff]
      %v4784 = vld [vmem:[#allocation14 + $0x58] sm:$0xff]
      %v4785 = vld [vmem:[#allocation14 + $0x60] sm:$0xff]
      %v4786 = vld [vmem:[#allocation14 + $0x68] sm:$0xff]
      %v4787 = vld [vmem:[#allocation14 + $0x70] sm:$0xff]
      %v4788 = vld [vmem:[#allocation14 + $0x78] sm:$0xff]
      %v4789 = vld [vmem:[%s7] sm:$0x1]
      %v4791 = vlaneseq
      %v4792 = vshrl.u32 %v4791, 7
      %v4793 = vsub.s32 0, %v4792
      %v4794 = vrot.slane %v4789, %v4793
      %4796 = vmatprep.subr.mxu0 0.0
      %4797 = vmatpush1.msra.mxu0 %v4788
      %4798 = vmatprep.subr.mxu0 0.0
      %4799 = vmatpush1.msra.mxu0 %v4787
      %4800 = vmatprep.subr.mxu0 0.0
      %4801 = vmatpush1.msra.mxu0 %v4786
      %4802 = vmatprep.subr.mxu0 0.0
      %4803 = vmatpush1.msra.mxu0 %v4785
      %4804 = vmatprep.subr.mxu0 0.0
      %4805 = vmatpush1.msra.mxu0 %v4784
      %4806 = vmatprep.subr.mxu0 0.0
      %4807 = vmatpush1.msra.mxu0 %v4783
      %4808 = vmatprep.subr.mxu0 0.0
      %4809 = vmatpush1.msra.mxu0 %v4782
      %4810 = vmatprep.subr.mxu0 0.0
      %4811 = vmatpush1.msra.mxu0 %v4781
      %4812 = vmatprep.subr.mxu0 0.0
      %4813 = vmatpush1.msra.mxu0 %v4780
      %4814 = vmatprep.subr.mxu0 0.0
      %4815 = vmatpush1.msra.mxu0 %v4779
      %4816 = vmatprep.subr.mxu0 0.0
      %4817 = vmatpush1.msra.mxu0 %v4778
      %4818 = vmatprep.subr.mxu0 0.0
      %4819 = vmatpush1.msra.mxu0 %v4777
      %4820 = vmatprep.subr.mxu0 0.0
      %4821 = vmatpush1.msra.mxu0 %v4776
      %4822 = vmatprep.subr.mxu0 0.0
      %4823 = vmatpush1.msra.mxu0 %v4775
      %4824 = vmatprep.subr.mxu0 0.0
      %4825 = vmatpush1.msra.mxu0 %v4774
      %4826 = vmatprep.subr.mxu0 0.0
      %4827 = vmatpush1.msra.mxu0 %v4773
      %4828 = vmatprep.subr.mxu0 0.0
      %4829 = vmatpush2.msra.mxu0 0.0
      %4830 = vmatprep.subr.mxu0 0.0
      %4831 = vmatpush2.msra.mxu0 0.0
      %4832 = vmatprep.subr.mxu0 0.0
      %4833 = vmatpush2.msra.mxu0 0.0
      %4834 = vmatprep.subr.mxu0 0.0
      %4835 = vmatpush2.msra.mxu0 0.0
      %4836 = vmatprep.subr.mxu0 0.0
      %4837 = vmatpush2.msra.mxu0 0.0
      %4838 = vmatprep.subr.mxu0 0.0
      %4839 = vmatpush2.msra.mxu0 0.0
      %4840 = vmatprep.subr.mxu0 0.0
      %4841 = vmatpush2.msra.mxu0 0.0
      %4842 = vmatprep.subr.mxu0 0.0
      %4843 = vmatpush2.msra.mxu0 0.0
      %4844 = vmatprep.subr.mxu0 0.0
      %4845 = vmatpush2.msra.mxu0 0.0
      %4846 = vmatprep.subr.mxu0 0.0
      %4847 = vmatpush2.msra.mxu0 0.0
      %4848 = vmatprep.subr.mxu0 0.0
      %4849 = vmatpush2.msra.mxu0 0.0
      %4850 = vmatprep.subr.mxu0 0.0
      %4851 = vmatpush2.msra.mxu0 0.0
      %4852 = vmatprep.subr.mxu0 0.0
      %4853 = vmatpush2.msra.mxu0 0.0
      %4854 = vmatprep.subr.mxu0 0.0
      %4855 = vmatpush2.msra.mxu0 0.0
      %4856 = vmatprep.subr.mxu0 0.0
      %4857 = vmatpush2.msra.mxu0 0.0
      %4858 = vmatprep.subr.mxu0 0.0
      %4859 = vmatpush2.msra.mxu0 0.0
      %4860 = vmatprep.mubr.f32.mxu0 0.0
      %4861 = vmatmul.mubr.f32.gmra.mxu0 %v4768
      %v4862 = vpop.f32.mrf.mxu0
      %v4863 = vadd.f32 %v4794, %v4862
      %v4864 = vpop.f32.mrf.mxu0
      %4865 = vmatprep.mubr.f32.mxu0 0.0
      %4866 = vmatmul.mubr.f32.gmra.mxu0 %v4769
      %v4867 = vpop.f32.mrf.mxu0
      %v4868 = vadd.f32 %v4794, %v4867
      %v4869 = vpop.f32.mrf.mxu0
      %4870 = vdwg.mxu0
      %4871 = vst [vmem:[#allocation15] sm:$0xff] %v4863
      %4872 = vst [vmem:[#allocation15 + $0x8] sm:$0xff] %v4868
    $region61: #{tpu_custom_call.1} parent=1 // pred_fallthru
      _
    %4873 = vst [vmem:[#allocation2] sm:$0xff] %v4578
    %4874 = vst [vmem:[#allocation2 + $0x8] sm:$0xff] %v4579
    %4875 = vst [vmem:[#allocation3] sm:$0xff] %v4574
    %4876 = vst [vmem:[#allocation3 + $0x8] sm:$0xff] %v4575
    %4877 = vst [vmem:[#allocation4] sm:$0xff] %v4768
    %4878 = vst [vmem:[#allocation4 + $0x8] sm:$0xff] %v4769
    %4879 = vst [vmem:[#allocation5] sm:$0xff] %v4764
    %4880 = vst [vmem:[#allocation5 + $0x8] sm:$0xff] %v4765
    // Predicated region
    $region62: #{tpu_custom_call.1} parent=1 // pred_check
      _
    $region63: #{tpu_custom_call.1} parent=1 // pred_check_branch
      %4882 = sbr.rel (0) target = $region65
    $region64: #{tpu_custom_call.1} parent=1 // pred_region
      %s4884 = ssub.s32 256, 256
      %4885 = vsyncadd [#allocation8], %s4884
      %s4886 = sshll.u32 [#allocation15], 4
      %s4887 = int_to_ptr.vmem [resolvable:$true] %s4886
      %4892 = dma.vmem_to_hbm [thread:$0]  %s4887, 256, %s8, [#allocation8], 128, 128, 8
    $region65: #{tpu_custom_call.1} parent=1 // pred_fallthru
      _
    // Predicated region
    $region66: #{tpu_custom_call.1} parent=1 // pred_check
      _
    $region67: #{tpu_custom_call.1} parent=1 // pred_check_branch
      %4894 = sbr.rel (0) target = $region69
    $region68: #{tpu_custom_call.1} parent=1 // pred_region
      %4895 = dma.done [#allocation8], 256
    $region69: #{tpu_custom_call.1} parent=1 // pred_fallthru
      _
    %4896 = vsyncpa [#allocation7], 1
    %4897 = vsyncpa [#allocation10], 1
    %4898 = vsyncpa [#allocation13], 1
    %4899 = vsyncpa [#allocation8], 1

</llo_original>
